<compile_context>
chip_gen: v7x
topology: tpu7x:2x2x1
jax: 0.10.0
libtpu: 0.0.40
codegen_flags: <defaults>
</compile_context>

<pallas_src>
import functools

import jax
import jax.numpy as jnp
from jax.experimental import pallas as pl
from jax.experimental.pallas import tpu as pltpu

NEG_INF = float("-inf")


def _round_up(x, m):
    return ((x + m - 1) // m) * m


def _pick_row_tile(m, tmax):
    """Largest multiple-of-8 row tile that divides m and is <= tmax (else None).

    Choosing a divisor avoids jnp.pad of the activation (a full extra HBM copy)
    in the wrappers.  On v6e (128 MiB VMEM) tmax can be raised to 1024; on v7x
    (64 MiB VMEM) keep it <= 512 with these K widths.
    """
    if m % 8:
        return None
    if m <= tmax:
        return m
    for t in range(tmax - tmax % 8, 0, -8):
        if m % t == 0:
            return t
    return None


def _pick_window_tile(nw, cap=16):
    """Largest divisor of the per-image window count <= cap."""
    t = min(nw, cap)
    while nw % t:
        t -= 1
    return t


# --------------------------- plain linear (+bias) ----------------------------
# Used only for PatchMerging's projection.


def _linear_kernel(x_ref, w_ref, b_ref, o_ref):
    acc = jnp.dot(x_ref[...].astype(jnp.bfloat16), w_ref[...],
                  preferred_element_type=jnp.float32) + b_ref[...]
    o_ref[...] = acc.astype(o_ref.dtype)


def linear(x, w, b, *, tm_max=512, out_dtype=jnp.float32):
    """y = x @ w + b.  x: (..., K) f32/bf16; w: (K, N) bf16; b: (1, N) f32."""
    K = x.shape[-1]
    N = w.shape[1]
    x2 = x.reshape(-1, K)
    M = x2.shape[0]
    tm = _pick_row_tile(M, tm_max)
    Mp = M
    if tm is None:                                  # rare fallback (M % 8 != 0)
        tm = min(tm_max, _round_up(M, 8))
        Mp = _round_up(M, tm)
        x2 = jnp.pad(x2, ((0, Mp - M), (0, 0)))
    out = pl.pallas_call(
        _linear_kernel,
        out_shape=jax.ShapeDtypeStruct((Mp, N), out_dtype),
        grid=(Mp // tm,),
        in_specs=[pl.BlockSpec((tm, K), lambda i: (i, 0)),
                  pl.BlockSpec((K, N), lambda i: (0, 0)),
                  pl.BlockSpec((1, N), lambda i: (0, 0))],
        out_specs=pl.BlockSpec((tm, N), lambda i: (i, 0)),
        compiler_params=pltpu.CompilerParams(dimension_semantics=("parallel",)),
    )(x2, w, b)
    if Mp != M:
        out = out[:M]
    return out.reshape(x.shape[:-1] + (N,))


# --------------------- fused W-MSA (LN+QKV+attn+proj+res) --------------------


def _wmsa_kernel(x_ref, g_ref, b_ref, qkvw_ref, bias_ref, wo_ref, bo_ref,
                 o_ref, *, heads):
    nwt, ws2, dim = x_ref.shape
    hd = qkvw_ref.shape[-1]
    m = nwt * ws2

    x = x_ref[...].astype(jnp.float32)                       # (nwt, ws2, dim)
    xf = x.reshape(m, dim)                                   # residual source
    mu = jnp.mean(xf, axis=-1, keepdims=True)
    var = jnp.mean(jnp.square(xf - mu), axis=-1, keepdims=True)
    xn = ((xf - mu) * jax.lax.rsqrt(var + 1e-5) * g_ref[...] + b_ref[...]
          ).astype(jnp.bfloat16)                             # (m, dim)

    # Per-(q/k/v, head) projections: weight chunk j = chunk*heads + h.  The
    # attention scale is folded into the q chunks at init, so no extra multiply
    # is needed on the scores.  Head never lives on a sub-128 lane offset.
    def proj(j0):
        cols = [jnp.dot(xn, qkvw_ref[j0 + h],
                        preferred_element_type=jnp.float32).astype(jnp.bfloat16)
                for h in range(heads)]
        y = jnp.stack(cols, axis=0)                          # (heads, m, hd)
        return y.reshape(heads * nwt, ws2, hd)

    q = proj(0)
    k = proj(heads)
    v = proj(2 * heads)

    # One (head, window)-batched dot for QK^T and one for PV.
    s = jax.lax.dot_general(q, k, (((2,), (2,)), ((0,), (0,))),
                            preferred_element_type=jnp.float32)  # (h*nwt, ws2, ws2)
    s = s.reshape(heads, nwt, ws2, ws2) + bias_ref[...][None]
    s = s - jnp.max(s, axis=-1, keepdims=True)
    p = jnp.exp(s)
    denom = jnp.sum(p, axis=-1, keepdims=True)               # (heads, nwt, ws2, 1)
    p = p.reshape(heads * nwt, ws2, ws2).astype(jnp.bfloat16)
    o = jax.lax.dot_general(p, v, (((2,), (1,)), ((0,), (0,))),
                            preferred_element_type=jnp.float32)  # (h*nwt, ws2, hd)
    # Deferred softmax normalisation on the EUP reciprocal path.
    o = o * pl.reciprocal(denom.reshape(heads * nwt, ws2, 1), approx=True)
    o = o.reshape(heads, m, hd).astype(jnp.bfloat16)

    # Output projection as a sum of per-head matmuls (head-split weight).
    acc = jnp.dot(o[0], wo_ref[0], preferred_element_type=jnp.float32)
    for h in range(1, heads):
        acc += jnp.dot(o[h], wo_ref[h], preferred_element_type=jnp.float32)
    acc = acc + bo_ref[...] + xf                             # bias + residual
    o_ref[...] = acc.reshape(nwt, ws2, dim).astype(o_ref.dtype)


def window_msa(x, gamma, beta, qkv_w, bias, w_out, b_out, *, nw, nw_tile,
               out_dtype=jnp.float32):
    """Fused W-MSA block (LN -> attention -> out-proj -> +residual).

    x      : (B*NW, WS2, dim) f32, window layout.
    qkv_w  : (3*heads, dim, head_dim) bf16 (scale folded into the q chunks).
    bias   : (1 | NW, WS2, WS2) f32 relative-position bias (+ shift masks).
    w_out  : (heads, head_dim, dim) bf16;  b_out: (1, dim) f32.
    """
    BNW, WS2, dim = x.shape
    three_h, _, hd = qkv_w.shape
    heads = three_h // 3
    NB = bias.shape[0]
    ntiles_img = nw // nw_tile
    grid = (BNW // nw_tile,)
    if NB == 1:
        bias_block, bias_idx = (1, WS2, WS2), (lambda wi: (0, 0, 0))
    else:
        bias_block = (nw_tile, WS2, WS2)
        bias_idx = lambda wi: (wi % ntiles_img, 0, 0)
    return pl.pallas_call(
        functools.partial(_wmsa_kernel, heads=heads),
        out_shape=jax.ShapeDtypeStruct((BNW, WS2, dim), out_dtype),
        grid=grid,
        in_specs=[
            pl.BlockSpec((nw_tile, WS2, dim), lambda wi: (wi, 0, 0)),
            pl.BlockSpec((1, dim), lambda wi: (0, 0)),
            pl.BlockSpec((1, dim), lambda wi: (0, 0)),
            pl.BlockSpec((three_h, dim, hd), lambda wi: (0, 0, 0)),
            pl.BlockSpec(bias_block, bias_idx),
            pl.BlockSpec((heads, hd, dim), lambda wi: (0, 0, 0)),
            pl.BlockSpec((1, dim), lambda wi: (0, 0)),
        ],
        out_specs=pl.BlockSpec((nw_tile, WS2, dim), lambda wi: (wi, 0, 0)),
        compiler_params=pltpu.CompilerParams(dimension_semantics=("parallel",)),
    )(x, gamma, beta, qkv_w, bias, w_out, b_out)


# ---------------------- fused MLP (LN+fc1+GELU+fc2+res) ----------------------


def _mlp_kernel(x_ref, g_ref, b_ref, w1_ref, b1_ref, w2_ref, b2_ref, o_ref):
    x = x_ref[...].astype(jnp.float32)                       # (tm, dim)
    mu = jnp.mean(x, axis=-1, keepdims=True)
    var = jnp.mean(jnp.square(x - mu), axis=-1, keepdims=True)
    xn = ((x - mu) * jax.lax.rsqrt(var + 1e-5) * g_ref[...] + b_ref[...]
          ).astype(jnp.bfloat16)
    h = jnp.dot(xn, w1_ref[...], preferred_element_type=jnp.float32) + b1_ref[...]
    # TODO(synk): PyTorch nn.GELU default is erf-exact; tanh approximation is
    # used here (erf lowering in Mosaic is not guaranteed), diff ~1e-3.
    h = jax.nn.gelu(h, approximate=True).astype(jnp.bfloat16)  # VMEM-only, bf16
    y = jnp.dot(h, w2_ref[...], preferred_element_type=jnp.float32) + b2_ref[...]
    o_ref[...] = (y + x).astype(o_ref.dtype)


def mlp_block(x, gamma, beta, w1, b1, w2, b2, *, tm_max=512,
              out_dtype=jnp.float32):
    """y = x + fc2(gelu(fc1(LN(x)))).  Weights bf16, biases (1, N) f32."""
    dim = x.shape[-1]
    mlp_dim = w1.shape[1]
    x2 = x.reshape(-1, dim)
    M = x2.shape[0]
    tm = _pick_row_tile(M, tm_max)
    Mp = M
    if tm is None:
        tm = min(tm_max, _round_up(M, 8))
        Mp = _round_up(M, tm)
        x2 = jnp.pad(x2, ((0, Mp - M), (0, 0)))
    out = pl.pallas_call(
        _mlp_kernel,
        out_shape=jax.ShapeDtypeStruct((Mp, dim), out_dtype),
        grid=(Mp // tm,),
        in_specs=[pl.BlockSpec((tm, dim), lambda i: (i, 0)),
                  pl.BlockSpec((1, dim), lambda i: (0, 0)),
                  pl.BlockSpec((1, dim), lambda i: (0, 0)),
                  pl.BlockSpec((dim, mlp_dim), lambda i: (0, 0)),
                  pl.BlockSpec((1, mlp_dim), lambda i: (0, 0)),
                  pl.BlockSpec((mlp_dim, dim), lambda i: (0, 0)),
                  pl.BlockSpec((1, dim), lambda i: (0, 0))],
        out_specs=pl.BlockSpec((tm, dim), lambda i: (i, 0)),
        compiler_params=pltpu.CompilerParams(dimension_semantics=("parallel",)),
    )(x2, gamma, beta, w1, b1, w2, b2)
    if Mp != M:
        out = out[:M]
    return out.reshape(x.shape)


# ------------------------------ Swin pieces ----------------------------------


def create_mask(window_size, displacement, upper_lower, left_right):
    ws2 = window_size * window_size
    mask = jnp.zeros((ws2, ws2), jnp.float32)
    if upper_lower:
        d = displacement * window_size
        mask = mask.at[-d:, :-d].set(NEG_INF)
        mask = mask.at[:-d, -d:].set(NEG_INF)
    if left_right:
        mask = mask.reshape(window_size, window_size, window_size, window_size)
        mask = mask.at[:, -displacement:, :, :-displacement].set(NEG_INF)
        mask = mask.at[:, :-displacement, :, -displacement:].set(NEG_INF)
        mask = mask.reshape(ws2, ws2)
    return mask


def relative_position_bias(pos_embedding, window_size):
    coords = jnp.stack(
        jnp.meshgrid(jnp.arange(window_size), jnp.arange(window_size),
                     indexing="ij"), axis=-1).reshape(-1, 2)          # (WS2, 2)
    rel = coords[None, :, :] - coords[:, None, :] + window_size - 1   # (WS2, WS2, 2)
    return pos_embedding[rel[..., 0], rel[..., 1]]                    # (WS2, WS2)


def build_bias(pos_embedding, cfg, shifted, nw_h, nw_w):
    """Relative-position bias (+ shift masks): (1 | NW, WS2, WS2), no scatters."""
    ws = cfg["window_size"]
    pos_bias = relative_position_bias(pos_embedding, ws)              # (WS2, WS2)
    if not shifted:
        return pos_bias[None]                                         # (1, WS2, WS2)
    nw = nw_h * nw_w
    win_row = jnp.arange(nw) // nw_w
    win_col = jnp.arange(nw) % nw_w
    bias = (pos_bias[None]
            + jnp.where((win_row == nw_h - 1)[:, None, None],
                        cfg["upper_lower_mask"][None], 0.0)
            + jnp.where((win_col == nw_w - 1)[:, None, None],
                        cfg["left_right_mask"][None], 0.0))
    return bias                                                       # (NW, WS2, WS2)


def window_partition(x, ws):
    """(B, H, W, C) -> (B, NW, WS2, C); windows ordered (nw_h, nw_w)."""
    B, H, W, C = x.shape
    nh, nw = H // ws, W // ws
    x = x.reshape(B, nh, ws, nw, ws, C).transpose(0, 1, 3, 2, 4, 5)
    return x.reshape(B, nh * nw, ws * ws, C)


def window_reverse(x, ws, H, W):
    """(B, NW, WS2, C) -> (B, H, W, C)."""
    B, _, _, C = x.shape
    nh, nw = H // ws, W // ws
    x = x.reshape(B, nh, nw, ws, ws, C).transpose(0, 1, 3, 2, 4, 5)
    return x.reshape(B, H, W, C)


def swin_block(x, p, cfg, shifted):
    ws = cfg["window_size"]
    disp = ws // 2
    B, H, W, dim = x.shape
    nwh, nww = H // ws, W // ws
    NW = nwh * nww
    WS2 = ws * ws

    # LN / linears / residual adds are per-position, so rolling + window
    # partitioning the *input* once and undoing it once at block exit is
    # mathematically identical to the PyTorch ordering.
    xw = jnp.roll(x, shift=(-disp, -disp), axis=(1, 2)) if shifted else x
    xw = window_partition(xw, ws).reshape(B * NW, WS2, dim)
    # TODO(synk): fold the window partition/reverse (and the cyclic roll) into
    # the BlockSpec index maps of the W-MSA / MLP kernels to remove these
    # full-activation XLA relayouts between kernels.

    bias = build_bias(p["pos_embedding"], cfg, shifted, nwh, nww)
    nwt = _pick_window_tile(NW)

    xr = window_msa(xw, p["ln_g"], p["ln_b"], p["qkv_w"], bias,
                    p["out_w"], p["out_b"], nw=NW, nw_tile=nwt)  # (B*NW, WS2, dim)
    # NOTE: the PyTorch block reuses the SAME LayerNorm instance for both norms.
    out = mlp_block(xr, p["ln_g"], p["ln_b"], p["mlp_w1"], p["mlp_b1"],
                    p["mlp_w2"], p["mlp_b2"])                    # (B*NW, WS2, dim)

    out = window_reverse(out.reshape(B, NW, WS2, dim), ws, H, W)
    if shifted:
        out = jnp.roll(out, shift=(disp, disp), axis=(1, 2))
    return out


def stage_forward(x, params, cfg):
    """x: (B, C, H, W) NCHW -> (B, hidden_dim, H//df, W//df) NCHW."""
    df = cfg["downscaling_factor"]
    b, c, H, W = x.shape
    oh, ow = H // df, W // df
    # PatchMerging == nn.Unfold(k=df, s=df) + Linear, patch flattened (c, kh, kw)
    xp = x.reshape(b, c, oh, df, ow, df).transpose(0, 2, 4, 1, 3, 5)
    xp = xp.reshape(b, oh, ow, c * df * df)
    xp = linear(xp, params["pm_w"], params["pm_b"])          # (b, oh, ow, hidden)

    for reg_p, shf_p in params["blocks"]:
        xp = swin_block(xp, reg_p, cfg, shifted=False)
        xp = swin_block(xp, shf_p, cfg, shifted=True)

    return xp.transpose(0, 3, 1, 2)                          # NCHW out


# --------------------------- parameter construction --------------------------
# Weights are stored pre-cast (bf16) and pre-reshaped so no per-forward
# astype/reshape HBM copies are generated under jit.


def init_block_params(key, dim, heads, head_dim, mlp_dim, window_size):
    inner = heads * head_dim
    ks = jax.random.split(key, 5)
    s = 0.02
    scale = head_dim ** (-0.5)
    # to_qkv: (dim, 3*inner) with column order (chunk, head, d) ->
    # head-split (3*heads, dim, head_dim); attention scale folded into q chunks.
    qkv_w = jax.random.normal(ks[0], (dim, inner * 3), jnp.float32) * s
    qkv_w = qkv_w.reshape(dim, 3, heads, head_dim).transpose(1, 2, 0, 3)
    qkv_w = qkv_w.reshape(3 * heads, dim, head_dim)
    qkv_w = qkv_w.at[:heads].multiply(scale)
    # to_out: (inner, dim) -> head-split (heads, head_dim, dim).
    out_w = (jax.random.normal(ks[1], (inner, dim), jnp.float32) * s
             ).reshape(heads, head_dim, dim)
    return {
        "ln_g": jnp.ones((1, dim), jnp.float32),
        "ln_b": jnp.zeros((1, dim), jnp.float32),
        "qkv_w": qkv_w.astype(jnp.bfloat16),
        "out_w": out_w.astype(jnp.bfloat16),
        "out_b": jnp.zeros((1, dim), jnp.float32),
        "pos_embedding": jax.random.normal(
            ks[2], (2 * window_size - 1, 2 * window_size - 1), jnp.float32),
        "mlp_w1": (jax.random.normal(ks[3], (dim, mlp_dim), jnp.float32) * s
                   ).astype(jnp.bfloat16),
        "mlp_b1": jnp.zeros((1, mlp_dim), jnp.float32),
        "mlp_w2": (jax.random.normal(ks[4], (mlp_dim, dim), jnp.float32) * s
                   ).astype(jnp.bfloat16),
        "mlp_b2": jnp.zeros((1, dim), jnp.float32),
    }


def init_stage_params(key, in_channels, hidden_dim, layers, df, heads,
                      head_dim, window_size):
    assert layers % 2 == 0
    keys = jax.random.split(key, layers + 1)
    s = 0.02
    params = {
        "pm_w": (jax.random.normal(keys[0], (in_channels * df * df, hidden_dim),
                                   jnp.float32) * s).astype(jnp.bfloat16),
        "pm_b": jnp.zeros((1, hidden_dim), jnp.float32),
        "blocks": [],
    }
    mlp_dim = hidden_dim * 4
    for i in range(layers // 2):
        reg = init_block_params(keys[1 + 2 * i], hidden_dim, heads, head_dim,
                                mlp_dim, window_size)
        shf = init_block_params(keys[2 + 2 * i], hidden_dim, heads, head_dim,
                                mlp_dim, window_size)
        params["blocks"].append((reg, shf))
    return params


# ---------------------------------- main --------------------------------------


if __name__ == "__main__":
    # Small config consistent with StageModule's constructor.
    in_channels = 4
    hidden_dimension = 16
    layers = 2
    downscaling_factor = 2
    num_heads = 2
    head_dim = 16
    window_size = 4
    displacement = window_size // 2

    cfg = {
        "window_size": window_size,
        "heads": num_heads,
        "head_dim": head_dim,
        "downscaling_factor": downscaling_factor,
        "upper_lower_mask": create_mask(window_size, displacement,
                                        upper_lower=True, left_right=False),
        "left_right_mask": create_mask(window_size, displacement,
                                       upper_lower=False, left_right=True),
    }

    key = jax.random.PRNGKey(0)
    pkey, xkey = jax.random.split(key)
    params = init_stage_params(pkey, in_channels, hidden_dimension, layers,
                               downscaling_factor, num_heads, head_dim,
                               window_size)

    x = jax.random.normal(xkey, (2, in_channels, 16, 16), jnp.float32)

    forward = jax.jit(lambda xx, pp: stage_forward(xx, pp, cfg))
    out = forward(x, params)
    out = jax.block_until_ready(out)
    assert out.shape == (2, hidden_dimension, 16 // downscaling_factor,
                         16 // downscaling_factor), out.shape
    print("KERNEL_OK")
</pallas_src>

<mosaic_0001>
module attributes {stable_mosaic.version = 11 : i64} {
  func.func @_linear_kernel(%arg0: i32, %arg1: memref<128x16xf32, #tpu.memory_space<vmem>>, %arg2: memref<16x16xbf16, #tpu.memory_space<vmem>>, %arg3: memref<1x16xf32, #tpu.memory_space<vmem>>, %arg4: memref<128x16xf32, #tpu.memory_space<vmem>>) attributes {dimension_semantics = [#tpu.dimension_semantics<parallel>], iteration_bounds = array<i64: 1>, scalar_prefetch = 0 : i64, scratch_operands = 0 : i64, tpu.core_type = #tpu.core_type<tc>, window_params = [{transform_indices = @transform_0, window_bounds = array<i64: 128, 16>}, {pipeline_mode = #tpu.pipeline_mode<synchronous>, transform_indices = @transform_1, window_bounds = array<i64: 16, 16>}, {pipeline_mode = #tpu.pipeline_mode<synchronous>, transform_indices = @transform_2, window_bounds = array<i64: 1, 16>}, {transform_indices = @transform_3, window_bounds = array<i64: 128, 16>}]} {
    %c0 = arith.constant 0 : index
    %c0_0 = arith.constant 0 : index
    %0 = vector.load %arg1[%c0, %c0_0] : memref<128x16xf32, #tpu.memory_space<vmem>>, vector<128x16xf32>
    %1 = arith.truncf %0 : vector<128x16xf32> to vector<128x16xbf16>
    %c0_1 = arith.constant 0 : index
    %c0_2 = arith.constant 0 : index
    %2 = vector.load %arg2[%c0_1, %c0_2] : memref<16x16xbf16, #tpu.memory_space<vmem>>, vector<16x16xbf16>
    %cst = arith.constant dense<0.000000e+00> : vector<128x16xf32>
    %3 = tpu.matmul %1, %2, %cst {dimension_numbers = #tpu.dot_dimension_numbers<[1], [0], [0], [1], [0, 0, 1, 1], [], []>} : vector<128x16xbf16>, vector<16x16xbf16>, vector<128x16xf32> -> vector<128x16xf32>
    %c0_3 = arith.constant 0 : index
    %c0_4 = arith.constant 0 : index
    %4 = vector.load %arg3[%c0_3, %c0_4] : memref<1x16xf32, #tpu.memory_space<vmem>>, vector<1x16xf32>
    %5 = vector.broadcast %4 : vector<1x16xf32> to vector<128x16xf32>
    %6 = arith.addf %3, %5 : vector<128x16xf32>
    %c0_5 = arith.constant 0 : index
    %c0_6 = arith.constant 0 : index
    %7 = vector.load %arg4[%c0_5, %c0_6] : memref<128x16xf32, #tpu.memory_space<vmem>>, vector<128x16xf32>
    tpu.vector_store %arg4[%c0_5, %c0_6], %6 {strides = array<i32>} : memref<128x16xf32, #tpu.memory_space<vmem>>, vector<128x16xf32>,
    return
  }
  func.func @transform_0(%arg0: i32) -> (i32, i32) {
    %c0_i32 = arith.constant 0 : i32
    %c0_i32_0 = arith.constant 0 : i32
    return %arg0, %c0_i32 : i32, i32
  }
  func.func @transform_1(%arg0: i32) -> (i32, i32) {
    %c0_i32 = arith.constant 0 : i32
    %c0_i32_0 = arith.constant 0 : i32
    %c0_i32_1 = arith.constant 0 : i32
    return %c0_i32, %c0_i32_0 : i32, i32
  }
  func.func @transform_2(%arg0: i32) -> (i32, i32) {
    %c0_i32 = arith.constant 0 : i32
    %c0_i32_0 = arith.constant 0 : i32
    %c0_i32_1 = arith.constant 0 : i32
    return %c0_i32, %c0_i32_0 : i32, i32
  }
  func.func @transform_3(%arg0: i32) -> (i32, i32) {
    %c0_i32 = arith.constant 0 : i32
    %c0_i32_0 = arith.constant 0 : i32
    return %arg0, %c0_i32 : i32, i32
  }
}

module attributes {stable_mosaic.version = 11 : i64} {
  func.func @_wmsa_kernel(%arg0: i32, %arg1: memref<4x16x16xf32, #tpu.memory_space<vmem>>, %arg2: memref<1x16xf32, #tpu.memory_space<vmem>>, %arg3: memref<1x16xf32, #tpu.memory_space<vmem>>, %arg4: memref<6x16x16xbf16, #tpu.memory_space<vmem>>, %arg5: memref<1x16x16xf32, #tpu.memory_space<vmem>>, %arg6: memref<2x16x16xbf16, #tpu.memory_space<vmem>>, %arg7: memref<1x16xf32, #tpu.memory_space<vmem>>, %arg8: memref<4x16x16xf32, #tpu.memory_space<vmem>>) attributes {dimension_semantics = [#tpu.dimension_semantics<parallel>], iteration_bounds = array<i64: 2>, scalar_prefetch = 0 : i64, scratch_operands = 0 : i64, tpu.core_type = #tpu.core_type<tc>, window_params = [{transform_indices = @transform_0, window_bounds = array<i64: 4, 16, 16>}, {pipeline_mode = #tpu.pipeline_mode<synchronous>, transform_indices = @transform_1, window_bounds = array<i64: 1, 16>}, {pipeline_mode = #tpu.pipeline_mode<synchronous>, transform_indices = @transform_2, window_bounds = array<i64: 1, 16>}, {pipeline_mode = #tpu.pipeline_mode<synchronous>, transform_indices = @transform_3, window_bounds = array<i64: 6, 16, 16>}, {pipeline_mode = #tpu.pipeline_mode<synchronous>, transform_indices = @transform_4, window_bounds = array<i64: 1, 16, 16>}, {pipeline_mode = #tpu.pipeline_mode<synchronous>, transform_indices = @transform_5, window_bounds = array<i64: 2, 16, 16>}, {pipeline_mode = #tpu.pipeline_mode<synchronous>, transform_indices = @transform_6, window_bounds = array<i64: 1, 16>}, {transform_indices = @transform_7, window_bounds = array<i64: 4, 16, 16>}]} {
    %c0 = arith.constant 0 : index
    %c0_0 = arith.constant 0 : index
    %c0_1 = arith.constant 0 : index
    %0 = vector.load %arg1[%c0, %c0_0, %c0_1] : memref<4x16x16xf32, #tpu.memory_space<vmem>>, vector<4x16x16xf32>
    %1 = vector.shape_cast %0 : vector<4x16x16xf32> to vector<64x16xf32>
    %cst = arith.constant dense<0.000000e+00> : vector<64xf32>
    %2 = vector.multi_reduction <add>, %1, %cst [1] : vector<64x16xf32> to vector<64xf32>
    %3 = vector.shape_cast %2 : vector<64xf32> to vector<64x1xf32>
    %cst_2 = arith.constant 1.600000e+01 : f32
    %4 = vector.broadcast %cst_2 : f32 to vector<64x1xf32>
    %5 = arith.divf %3, %4 : vector<64x1xf32>
    %6 = vector.broadcast %5 : vector<64x1xf32> to vector<64x16xf32>
    %7 = arith.subf %1, %6 : vector<64x16xf32>
    %8 = arith.mulf %7, %7 : vector<64x16xf32>
    %cst_3 = arith.constant dense<0.000000e+00> : vector<64xf32>
    %9 = vector.multi_reduction <add>, %8, %cst_3 [1] : vector<64x16xf32> to vector<64xf32>
    %10 = vector.shape_cast %9 : vector<64xf32> to vector<64x1xf32>
    %cst_4 = arith.constant 1.600000e+01 : f32
    %11 = vector.broadcast %cst_4 : f32 to vector<64x1xf32>
    %12 = arith.divf %10, %11 : vector<64x1xf32>
    %13 = vector.broadcast %5 : vector<64x1xf32> to vector<64x16xf32>
    %14 = arith.subf %1, %13 : vector<64x16xf32>
    %cst_5 = arith.constant 9.99999974E-6 : f32
    %15 = vector.broadcast %cst_5 : f32 to vector<64x1xf32>
    %16 = arith.addf %12, %15 : vector<64x1xf32>
    %17 = math.rsqrt %16 : vector<64x1xf32>
    %18 = vector.broadcast %17 : vector<64x1xf32> to vector<64x16xf32>
    %19 = arith.mulf %14, %18 : vector<64x16xf32>
    %c0_6 = arith.constant 0 : index
    %c0_7 = arith.constant 0 : index
    %20 = vector.load %arg2[%c0_6, %c0_7] : memref<1x16xf32, #tpu.memory_space<vmem>>, vector<1x16xf32>
    %21 = vector.broadcast %20 : vector<1x16xf32> to vector<64x16xf32>
    %22 = arith.mulf %19, %21 : vector<64x16xf32>
    %c0_8 = arith.constant 0 : index
    %c0_9 = arith.constant 0 : index
    %23 = vector.load %arg3[%c0_8, %c0_9] : memref<1x16xf32, #tpu.memory_space<vmem>>, vector<1x16xf32>
    %24 = vector.broadcast %23 : vector<1x16xf32> to vector<64x16xf32>
    %25 = arith.addf %22, %24 : vector<64x16xf32>
    %26 = arith.truncf %25 : vector<64x16xf32> to vector<64x16xbf16>
    %c0_10 = arith.constant 0 : index
    %c0_11 = arith.constant 0 : index
    %c0_12 = arith.constant 0 : index
    %27 = vector.load %arg4[%c0_10, %c0_11, %c0_12] : memref<6x16x16xbf16, #tpu.memory_space<vmem>>, vector<1x16x16xbf16>
    %28 = vector.shape_cast %27 : vector<1x16x16xbf16> to vector<16x16xbf16>
    %cst_13 = arith.constant dense<0.000000e+00> : vector<64x16xf32>
    %29 = tpu.matmul %26, %28, %cst_13 {dimension_numbers = #tpu.dot_dimension_numbers<[1], [0], [0], [1], [0, 0, 1, 1], [], []>} : vector<64x16xbf16>, vector<16x16xbf16>, vector<64x16xf32> -> vector<64x16xf32>
    %30 = arith.truncf %29 : vector<64x16xf32> to vector<64x16xbf16>
    %c1 = arith.constant 1 : index
    %c0_14 = arith.constant 0 : index
    %c0_15 = arith.constant 0 : index
    %31 = vector.load %arg4[%c1, %c0_14, %c0_15] : memref<6x16x16xbf16, #tpu.memory_space<vmem>>, vector<1x16x16xbf16>
    %32 = vector.shape_cast %31 : vector<1x16x16xbf16> to vector<16x16xbf16>
    %cst_16 = arith.constant dense<0.000000e+00> : vector<64x16xf32>
    %33 = tpu.matmul %26, %32, %cst_16 {dimension_numbers = #tpu.dot_dimension_numbers<[1], [0], [0], [1], [0, 0, 1, 1], [], []>} : vector<64x16xbf16>, vector<16x16xbf16>, vector<64x16xf32> -> vector<64x16xf32>
    %34 = arith.truncf %33 : vector<64x16xf32> to vector<64x16xbf16>
    %35 = vector.shape_cast %30 : vector<64x16xbf16> to vector<1x64x16xbf16>
    %36 = vector.shape_cast %34 : vector<64x16xbf16> to vector<1x64x16xbf16>
    %37 = tpu.concatenate %35, %36 in 0 : vector<1x64x16xbf16>, vector<1x64x16xbf16> -> vector<2x64x16xbf16>
    %38 = vector.shape_cast %37 : vector<2x64x16xbf16> to vector<8x16x16xbf16>
    %c2 = arith.constant 2 : index
    %c0_17 = arith.constant 0 : index
    %c0_18 = arith.constant 0 : index
    %39 = vector.load %arg4[%c2, %c0_17, %c0_18] : memref<6x16x16xbf16, #tpu.memory_space<vmem>>, vector<1x16x16xbf16>
    %40 = vector.shape_cast %39 : vector<1x16x16xbf16> to vector<16x16xbf16>
    %cst_19 = arith.constant dense<0.000000e+00> : vector<64x16xf32>
    %41 = tpu.matmul %26, %40, %cst_19 {dimension_numbers = #tpu.dot_dimension_numbers<[1], [0], [0], [1], [0, 0, 1, 1], [], []>} : vector<64x16xbf16>, vector<16x16xbf16>, vector<64x16xf32> -> vector<64x16xf32>
    %42 = arith.truncf %41 : vector<64x16xf32> to vector<64x16xbf16>
    %c3 = arith.constant 3 : index
    %c0_20 = arith.constant 0 : index
    %c0_21 = arith.constant 0 : index
    %43 = vector.load %arg4[%c3, %c0_20, %c0_21] : memref<6x16x16xbf16, #tpu.memory_space<vmem>>, vector<1x16x16xbf16>
    %44 = vector.shape_cast %43 : vector<1x16x16xbf16> to vector<16x16xbf16>
    %cst_22 = arith.constant dense<0.000000e+00> : vector<64x16xf32>
    %45 = tpu.matmul %26, %44, %cst_22 {dimension_numbers = #tpu.dot_dimension_numbers<[1], [0], [0], [1], [0, 0, 1, 1], [], []>} : vector<64x16xbf16>, vector<16x16xbf16>, vector<64x16xf32> -> vector<64x16xf32>
    %46 = arith.truncf %45 : vector<64x16xf32> to vector<64x16xbf16>
    %47 = vector.shape_cast %42 : vector<64x16xbf16> to vector<1x64x16xbf16>
    %48 = vector.shape_cast %46 : vector<64x16xbf16> to vector<1x64x16xbf16>
    %49 = tpu.concatenate %47, %48 in 0 : vector<1x64x16xbf16>, vector<1x64x16xbf16> -> vector<2x64x16xbf16>
    %50 = vector.shape_cast %49 : vector<2x64x16xbf16> to vector<8x16x16xbf16>
    %c4 = arith.constant 4 : index
    %c0_23 = arith.constant 0 : index
    %c0_24 = arith.constant 0 : index
    %51 = vector.load %arg4[%c4, %c0_23, %c0_24] : memref<6x16x16xbf16, #tpu.memory_space<vmem>>, vector<1x16x16xbf16>
    %52 = vector.shape_cast %51 : vector<1x16x16xbf16> to vector<16x16xbf16>
    %cst_25 = arith.constant dense<0.000000e+00> : vector<64x16xf32>
    %53 = tpu.matmul %26, %52, %cst_25 {dimension_numbers = #tpu.dot_dimension_numbers<[1], [0], [0], [1], [0, 0, 1, 1], [], []>} : vector<64x16xbf16>, vector<16x16xbf16>, vector<64x16xf32> -> vector<64x16xf32>
    %54 = arith.truncf %53 : vector<64x16xf32> to vector<64x16xbf16>
    %c5 = arith.constant 5 : index
    %c0_26 = arith.constant 0 : index
    %c0_27 = arith.constant 0 : index
    %55 = vector.load %arg4[%c5, %c0_26, %c0_27] : memref<6x16x16xbf16, #tpu.memory_space<vmem>>, vector<1x16x16xbf16>
    %56 = vector.shape_cast %55 : vector<1x16x16xbf16> to vector<16x16xbf16>
    %cst_28 = arith.constant dense<0.000000e+00> : vector<64x16xf32>
    %57 = tpu.matmul %26, %56, %cst_28 {dimension_numbers = #tpu.dot_dimension_numbers<[1], [0], [0], [1], [0, 0, 1, 1], [], []>} : vector<64x16xbf16>, vector<16x16xbf16>, vector<64x16xf32> -> vector<64x16xf32>
    %58 = arith.truncf %57 : vector<64x16xf32> to vector<64x16xbf16>
    %59 = vector.shape_cast %54 : vector<64x16xbf16> to vector<1x64x16xbf16>
    %60 = vector.shape_cast %58 : vector<64x16xbf16> to vector<1x64x16xbf16>
    %61 = tpu.concatenate %59, %60 in 0 : vector<1x64x16xbf16>, vector<1x64x16xbf16> -> vector<2x64x16xbf16>
    %62 = vector.shape_cast %61 : vector<2x64x16xbf16> to vector<8x16x16xbf16>
    %cst_29 = arith.constant dense<0.000000e+00> : vector<8x16x16xf32>
    %63 = tpu.matmul %38, %50, %cst_29 {dimension_numbers = #tpu.dot_dimension_numbers<[2], [2], [1], [1], [0, 0, 0, 1, 1, 1], [0], [0]>} : vector<8x16x16xbf16>, vector<8x16x16xbf16>, vector<8x16x16xf32> -> vector<8x16x16xf32>
    %64 = vector.shape_cast %63 : vector<8x16x16xf32> to vector<2x4x16x16xf32>
    %c0_30 = arith.constant 0 : index
    %c0_31 = arith.constant 0 : index
    %c0_32 = arith.constant 0 : index
    %65 = vector.load %arg5[%c0_30, %c0_31, %c0_32] : memref<1x16x16xf32, #tpu.memory_space<vmem>>, vector<1x16x16xf32>
    %66 = vector.shape_cast %65 : vector<1x16x16xf32> to vector<1x1x16x16xf32>
    %67 = vector.broadcast %66 : vector<1x1x16x16xf32> to vector<2x4x16x16xf32>
    %68 = arith.addf %64, %67 : vector<2x4x16x16xf32>
    %cst_33 = arith.constant dense<0xFF800000> : vector<2x4x16xf32>
    %69 = vector.multi_reduction <maximumf>, %68, %cst_33 [3] : vector<2x4x16x16xf32> to vector<2x4x16xf32>
    %70 = vector.shape_cast %69 : vector<2x4x16xf32> to vector<2x4x16x1xf32>
    %71 = vector.broadcast %70 : vector<2x4x16x1xf32> to vector<2x4x16x16xf32>
    %72 = arith.subf %68, %71 : vector<2x4x16x16xf32>
    %73 = math.exp %72 : vector<2x4x16x16xf32>
    %cst_34 = arith.constant dense<0.000000e+00> : vector<2x4x16xf32>
    %74 = vector.multi_reduction <add>, %73, %cst_34 [3] : vector<2x4x16x16xf32> to vector<2x4x16xf32>
    %75 = vector.shape_cast %74 : vector<2x4x16xf32> to vector<2x4x16x1xf32>
    %76 = vector.shape_cast %73 : vector<2x4x16x16xf32> to vector<8x16x16xf32>
    %77 = arith.truncf %76 : vector<8x16x16xf32> to vector<8x16x16xbf16>
    %cst_35 = arith.constant dense<0.000000e+00> : vector<8x16x16xf32>
    %78 = tpu.matmul %77, %62, %cst_35 {dimension_numbers = #tpu.dot_dimension_numbers<[2], [1], [1], [2], [0, 0, 0, 1, 1, 2], [0], [0]>} : vector<8x16x16xbf16>, vector<8x16x16xbf16>, vector<8x16x16xf32> -> vector<8x16x16xf32>
    %79 = vector.shape_cast %75 : vector<2x4x16x1xf32> to vector<8x16x1xf32>
    %80 = tpu.reciprocal %79 {approx = true} : vector<8x16x1xf32> -> vector<8x16x1xf32>
    %81 = vector.broadcast %80 : vector<8x16x1xf32> to vector<8x16x16xf32>
    %82 = arith.mulf %78, %81 : vector<8x16x16xf32>
    %83 = vector.shape_cast %82 : vector<8x16x16xf32> to vector<2x64x16xf32>
    %84 = arith.truncf %83 : vector<2x64x16xf32> to vector<2x64x16xbf16>
    %85 = vector.extract_strided_slice %84 {offsets = [0, 0, 0], sizes = [1, 64, 16], strides = [1, 1, 1]} : vector<2x64x16xbf16> to vector<1x64x16xbf16>
    %86 = vector.shape_cast %85 : vector<1x64x16xbf16> to vector<64x16xbf16>
    %c0_36 = arith.constant 0 : index
    %c0_37 = arith.constant 0 : index
    %c0_38 = arith.constant 0 : index
    %87 = vector.load %arg6[%c0_36, %c0_37, %c0_38] : memref<2x16x16xbf16, #tpu.memory_space<vmem>>, vector<1x16x16xbf16>
    %88 = vector.shape_cast %87 : vector<1x16x16xbf16> to vector<16x16xbf16>
    %cst_39 = arith.constant dense<0.000000e+00> : vector<64x16xf32>
    %89 = tpu.matmul %86, %88, %cst_39 {dimension_numbers = #tpu.dot_dimension_numbers<[1], [0], [0], [1], [0, 0, 1, 1], [], []>} : vector<64x16xbf16>, vector<16x16xbf16>, vector<64x16xf32> -> vector<64x16xf32>
    %90 = vector.extract_strided_slice %84 {offsets = [1, 0, 0], sizes = [1, 64, 16], strides = [1, 1, 1]} : vector<2x64x16xbf16> to vector<1x64x16xbf16>
    %91 = vector.shape_cast %90 : vector<1x64x16xbf16> to vector<64x16xbf16>
    %c1_40 = arith.constant 1 : index
    %c0_41 = arith.constant 0 : index
    %c0_42 = arith.constant 0 : index
    %92 = vector.load %arg6[%c1_40, %c0_41, %c0_42] : memref<2x16x16xbf16, #tpu.memory_space<vmem>>, vector<1x16x16xbf16>
    %93 = vector.shape_cast %92 : vector<1x16x16xbf16> to vector<16x16xbf16>
    %cst_43 = arith.constant dense<0.000000e+00> : vector<64x16xf32>
    %94 = tpu.matmul %91, %93, %cst_43 {dimension_numbers = #tpu.dot_dimension_numbers<[1], [0], [0], [1], [0, 0, 1, 1], [], []>} : vector<64x16xbf16>, vector<16x16xbf16>, vector<64x16xf32> -> vector<64x16xf32>
    %95 = arith.addf %89, %94 : vector<64x16xf32>
    %c0_44 = arith.constant 0 : index
    %c0_45 = arith.constant 0 : index
    %96 = vector.load %arg7[%c0_44, %c0_45] : memref<1x16xf32, #tpu.memory_space<vmem>>, vector<1x16xf32>
    %97 = vector.broadcast %96 : vector<1x16xf32> to vector<64x16xf32>
    %98 = arith.addf %95, %97 : vector<64x16xf32>
    %99 = arith.addf %98, %1 : vector<64x16xf32>
    %100 = vector.shape_cast %99 : vector<64x16xf32> to vector<4x16x16xf32>
    %c0_46 = arith.constant 0 : index
    %c0_47 = arith.constant 0 : index
    %c0_48 = arith.constant 0 : index
    %101 = vector.load %arg8[%c0_46, %c0_47, %c0_48] : memref<4x16x16xf32, #tpu.memory_space<vmem>>, vector<4x16x16xf32>
    tpu.vector_store %arg8[%c0_46, %c0_47, %c0_48], %100 {strides = array<i32>} : memref<4x16x16xf32, #tpu.memory_space<vmem>>, vector<4x16x16xf32>,
    return
  }
  func.func @transform_0(%arg0: i32) -> (i32, i32, i32) {
    %c0_i32 = arith.constant 0 : i32
    %c0_i32_0 = arith.constant 0 : i32
    %c0_i32_1 = arith.constant 0 : i32
    return %arg0, %c0_i32, %c0_i32_0 : i32, i32, i32
  }
  func.func @transform_1(%arg0: i32) -> (i32, i32) {
    %c0_i32 = arith.constant 0 : i32
    %c0_i32_0 = arith.constant 0 : i32
    %c0_i32_1 = arith.constant 0 : i32
    return %c0_i32, %c0_i32_0 : i32, i32
  }
  func.func @transform_2(%arg0: i32) -> (i32, i32) {
    %c0_i32 = arith.constant 0 : i32
    %c0_i32_0 = arith.constant 0 : i32
    %c0_i32_1 = arith.constant 0 : i32
    return %c0_i32, %c0_i32_0 : i32, i32
  }
  func.func @transform_3(%arg0: i32) -> (i32, i32, i32) {
    %c0_i32 = arith.constant 0 : i32
    %c0_i32_0 = arith.constant 0 : i32
    %c0_i32_1 = arith.constant 0 : i32
    %c0_i32_2 = arith.constant 0 : i32
    return %c0_i32, %c0_i32_0, %c0_i32_1 : i32, i32, i32
  }
  func.func @transform_4(%arg0: i32) -> (i32, i32, i32) {
    %c0_i32 = arith.constant 0 : i32
    %c0_i32_0 = arith.constant 0 : i32
    %c0_i32_1 = arith.constant 0 : i32
    %c0_i32_2 = arith.constant 0 : i32
    return %c0_i32, %c0_i32_0, %c0_i32_1 : i32, i32, i32
  }
  func.func @transform_5(%arg0: i32) -> (i32, i32, i32) {
    %c0_i32 = arith.constant 0 : i32
    %c0_i32_0 = arith.constant 0 : i32
    %c0_i32_1 = arith.constant 0 : i32
    %c0_i32_2 = arith.constant 0 : i32
    return %c0_i32, %c0_i32_0, %c0_i32_1 : i32, i32, i32
  }
  func.func @transform_6(%arg0: i32) -> (i32, i32) {
    %c0_i32 = arith.constant 0 : i32
    %c0_i32_0 = arith.constant 0 : i32
    %c0_i32_1 = arith.constant 0 : i32
    return %c0_i32, %c0_i32_0 : i32, i32
  }
  func.func @transform_7(%arg0: i32) -> (i32, i32, i32) {
    %c0_i32 = arith.constant 0 : i32
    %c0_i32_0 = arith.constant 0 : i32
    %c0_i32_1 = arith.constant 0 : i32
    return %arg0, %c0_i32, %c0_i32_0 : i32, i32, i32
  }
}

module attributes {stable_mosaic.version = 11 : i64} {
  func.func @_mlp_kernel(%arg0: i32, %arg1: memref<128x16xf32, #tpu.memory_space<vmem>>, %arg2: memref<1x16xf32, #tpu.memory_space<vmem>>, %arg3: memref<1x16xf32, #tpu.memory_space<vmem>>, %arg4: memref<16x64xbf16, #tpu.memory_space<vmem>>, %arg5: memref<1x64xf32, #tpu.memory_space<vmem>>, %arg6: memref<64x16xbf16, #tpu.memory_space<vmem>>, %arg7: memref<1x16xf32, #tpu.memory_space<vmem>>, %arg8: memref<128x16xf32, #tpu.memory_space<vmem>>) attributes {dimension_semantics = [#tpu.dimension_semantics<parallel>], iteration_bounds = array<i64: 1>, scalar_prefetch = 0 : i64, scratch_operands = 0 : i64, tpu.core_type = #tpu.core_type<tc>, window_params = [{transform_indices = @transform_0, window_bounds = array<i64: 128, 16>}, {pipeline_mode = #tpu.pipeline_mode<synchronous>, transform_indices = @transform_1, window_bounds = array<i64: 1, 16>}, {pipeline_mode = #tpu.pipeline_mode<synchronous>, transform_indices = @transform_2, window_bounds = array<i64: 1, 16>}, {pipeline_mode = #tpu.pipeline_mode<synchronous>, transform_indices = @transform_3, window_bounds = array<i64: 16, 64>}, {pipeline_mode = #tpu.pipeline_mode<synchronous>, transform_indices = @transform_4, window_bounds = array<i64: 1, 64>}, {pipeline_mode = #tpu.pipeline_mode<synchronous>, transform_indices = @transform_5, window_bounds = array<i64: 64, 16>}, {pipeline_mode = #tpu.pipeline_mode<synchronous>, transform_indices = @transform_6, window_bounds = array<i64: 1, 16>}, {transform_indices = @transform_7, window_bounds = array<i64: 128, 16>}]} {
    %c0 = arith.constant 0 : index
    %c0_0 = arith.constant 0 : index
    %0 = vector.load %arg1[%c0, %c0_0] : memref<128x16xf32, #tpu.memory_space<vmem>>, vector<128x16xf32>
    %cst = arith.constant dense<0.000000e+00> : vector<128xf32>
    %1 = vector.multi_reduction <add>, %0, %cst [1] : vector<128x16xf32> to vector<128xf32>
    %2 = vector.shape_cast %1 : vector<128xf32> to vector<128x1xf32>
    %cst_1 = arith.constant 1.600000e+01 : f32
    %3 = vector.broadcast %cst_1 : f32 to vector<128x1xf32>
    %4 = arith.divf %2, %3 : vector<128x1xf32>
    %5 = vector.broadcast %4 : vector<128x1xf32> to vector<128x16xf32>
    %6 = arith.subf %0, %5 : vector<128x16xf32>
    %7 = arith.mulf %6, %6 : vector<128x16xf32>
    %cst_2 = arith.constant dense<0.000000e+00> : vector<128xf32>
    %8 = vector.multi_reduction <add>, %7, %cst_2 [1] : vector<128x16xf32> to vector<128xf32>
    %9 = vector.shape_cast %8 : vector<128xf32> to vector<128x1xf32>
    %cst_3 = arith.constant 1.600000e+01 : f32
    %10 = vector.broadcast %cst_3 : f32 to vector<128x1xf32>
    %11 = arith.divf %9, %10 : vector<128x1xf32>
    %12 = vector.broadcast %4 : vector<128x1xf32> to vector<128x16xf32>
    %13 = arith.subf %0, %12 : vector<128x16xf32>
    %cst_4 = arith.constant 9.99999974E-6 : f32
    %14 = vector.broadcast %cst_4 : f32 to vector<128x1xf32>
    %15 = arith.addf %11, %14 : vector<128x1xf32>
    %16 = math.rsqrt %15 : vector<128x1xf32>
    %17 = vector.broadcast %16 : vector<128x1xf32> to vector<128x16xf32>
    %18 = arith.mulf %13, %17 : vector<128x16xf32>
    %c0_5 = arith.constant 0 : index
    %c0_6 = arith.constant 0 : index
    %19 = vector.load %arg2[%c0_5, %c0_6] : memref<1x16xf32, #tpu.memory_space<vmem>>, vector<1x16xf32>
    %20 = vector.broadcast %19 : vector<1x16xf32> to vector<128x16xf32>
    %21 = arith.mulf %18, %20 : vector<128x16xf32>
    %c0_7 = arith.constant 0 : index
    %c0_8 = arith.constant 0 : index
    %22 = vector.load %arg3[%c0_7, %c0_8] : memref<1x16xf32, #tpu.memory_space<vmem>>, vector<1x16xf32>
    %23 = vector.broadcast %22 : vector<1x16xf32> to vector<128x16xf32>
    %24 = arith.addf %21, %23 : vector<128x16xf32>
    %25 = arith.truncf %24 : vector<128x16xf32> to vector<128x16xbf16>
    %c0_9 = arith.constant 0 : index
    %c0_10 = arith.constant 0 : index
    %26 = vector.load %arg4[%c0_9, %c0_10] : memref<16x64xbf16, #tpu.memory_space<vmem>>, vector<16x64xbf16>
    %cst_11 = arith.constant dense<0.000000e+00> : vector<128x64xf32>
    %27 = tpu.matmul %25, %26, %cst_11 {dimension_numbers = #tpu.dot_dimension_numbers<[1], [0], [0], [1], [0, 0, 1, 1], [], []>} : vector<128x16xbf16>, vector<16x64xbf16>, vector<128x64xf32> -> vector<128x64xf32>
    %c0_12 = arith.constant 0 : index
    %c0_13 = arith.constant 0 : index
    %28 = vector.load %arg5[%c0_12, %c0_13] : memref<1x64xf32, #tpu.memory_space<vmem>>, vector<1x64xf32>
    %29 = vector.broadcast %28 : vector<1x64xf32> to vector<128x64xf32>
    %30 = arith.addf %27, %29 : vector<128x64xf32>
    %31 = arith.mulf %30, %30 : vector<128x64xf32>
    %32 = arith.mulf %30, %31 : vector<128x64xf32>
    %cst_14 = arith.constant 4.471500e-02 : f32
    %33 = vector.broadcast %cst_14 : f32 to vector<128x64xf32>
    %34 = arith.mulf %33, %32 : vector<128x64xf32>
    %35 = arith.addf %30, %34 : vector<128x64xf32>
    %cst_15 = arith.constant 0.797884583 : f32
    %36 = vector.broadcast %cst_15 : f32 to vector<128x64xf32>
    %37 = arith.mulf %36, %35 : vector<128x64xf32>
    %38 = math.tanh %37 : vector<128x64xf32>
    %cst_16 = arith.constant 1.000000e+00 : f32
    %39 = vector.broadcast %cst_16 : f32 to vector<128x64xf32>
    %40 = arith.addf %39, %38 : vector<128x64xf32>
    %cst_17 = arith.constant 5.000000e-01 : f32
    %41 = vector.broadcast %cst_17 : f32 to vector<128x64xf32>
    %42 = arith.mulf %41, %40 : vector<128x64xf32>
    %43 = arith.mulf %30, %42 : vector<128x64xf32>
    %44 = arith.truncf %43 : vector<128x64xf32> to vector<128x64xbf16>
    %c0_18 = arith.constant 0 : index
    %c0_19 = arith.constant 0 : index
    %45 = vector.load %arg6[%c0_18, %c0_19] : memref<64x16xbf16, #tpu.memory_space<vmem>>, vector<64x16xbf16>
    %cst_20 = arith.constant dense<0.000000e+00> : vector<128x16xf32>
    %46 = tpu.matmul %44, %45, %cst_20 {dimension_numbers = #tpu.dot_dimension_numbers<[1], [0], [0], [1], [0, 0, 1, 1], [], []>} : vector<128x64xbf16>, vector<64x16xbf16>, vector<128x16xf32> -> vector<128x16xf32>
    %c0_21 = arith.constant 0 : index
    %c0_22 = arith.constant 0 : index
    %47 = vector.load %arg7[%c0_21, %c0_22] : memref<1x16xf32, #tpu.memory_space<vmem>>, vector<1x16xf32>
    %48 = vector.broadcast %47 : vector<1x16xf32> to vector<128x16xf32>
    %49 = arith.addf %46, %48 : vector<128x16xf32>
    %50 = arith.addf %49, %0 : vector<128x16xf32>
    %c0_23 = arith.constant 0 : index
    %c0_24 = arith.constant 0 : index
    %51 = vector.load %arg8[%c0_23, %c0_24] : memref<128x16xf32, #tpu.memory_space<vmem>>, vector<128x16xf32>
    tpu.vector_store %arg8[%c0_23, %c0_24], %50 {strides = array<i32>} : memref<128x16xf32, #tpu.memory_space<vmem>>, vector<128x16xf32>,
    return
  }
  func.func @transform_0(%arg0: i32) -> (i32, i32) {
    %c0_i32 = arith.constant 0 : i32
    %c0_i32_0 = arith.constant 0 : i32
    return %arg0, %c0_i32 : i32, i32
  }
  func.func @transform_1(%arg0: i32) -> (i32, i32) {
    %c0_i32 = arith.constant 0 : i32
    %c0_i32_0 = arith.constant 0 : i32
    %c0_i32_1 = arith.constant 0 : i32
    return %c0_i32, %c0_i32_0 : i32, i32
  }
  func.func @transform_2(%arg0: i32) -> (i32, i32) {
    %c0_i32 = arith.constant 0 : i32
    %c0_i32_0 = arith.constant 0 : i32
    %c0_i32_1 = arith.constant 0 : i32
    return %c0_i32, %c0_i32_0 : i32, i32
  }
  func.func @transform_3(%arg0: i32) -> (i32, i32) {
    %c0_i32 = arith.constant 0 : i32
    %c0_i32_0 = arith.constant 0 : i32
    %c0_i32_1 = arith.constant 0 : i32
    return %c0_i32, %c0_i32_0 : i32, i32
  }
  func.func @transform_4(%arg0: i32) -> (i32, i32) {
    %c0_i32 = arith.constant 0 : i32
    %c0_i32_0 = arith.constant 0 : i32
    %c0_i32_1 = arith.constant 0 : i32
    return %c0_i32, %c0_i32_0 : i32, i32
  }
  func.func @transform_5(%arg0: i32) -> (i32, i32) {
    %c0_i32 = arith.constant 0 : i32
    %c0_i32_0 = arith.constant 0 : i32
    %c0_i32_1 = arith.constant 0 : i32
    return %c0_i32, %c0_i32_0 : i32, i32
  }
  func.func @transform_6(%arg0: i32) -> (i32, i32) {
    %c0_i32 = arith.constant 0 : i32
    %c0_i32_0 = arith.constant 0 : i32
    %c0_i32_1 = arith.constant 0 : i32
    return %c0_i32, %c0_i32_0 : i32, i32
  }
  func.func @transform_7(%arg0: i32) -> (i32, i32) {
    %c0_i32 = arith.constant 0 : i32
    %c0_i32_0 = arith.constant 0 : i32
    return %arg0, %c0_i32 : i32, i32
  }
}

module attributes {stable_mosaic.version = 11 : i64} {
  func.func @_wmsa_kernel(%arg0: i32, %arg1: memref<4x16x16xf32, #tpu.memory_space<vmem>>, %arg2: memref<1x16xf32, #tpu.memory_space<vmem>>, %arg3: memref<1x16xf32, #tpu.memory_space<vmem>>, %arg4: memref<6x16x16xbf16, #tpu.memory_space<vmem>>, %arg5: memref<4x16x16xf32, #tpu.memory_space<vmem>>, %arg6: memref<2x16x16xbf16, #tpu.memory_space<vmem>>, %arg7: memref<1x16xf32, #tpu.memory_space<vmem>>, %arg8: memref<4x16x16xf32, #tpu.memory_space<vmem>>) attributes {dimension_semantics = [#tpu.dimension_semantics<parallel>], iteration_bounds = array<i64: 2>, scalar_prefetch = 0 : i64, scratch_operands = 0 : i64, tpu.core_type = #tpu.core_type<tc>, window_params = [{transform_indices = @transform_0, window_bounds = array<i64: 4, 16, 16>}, {pipeline_mode = #tpu.pipeline_mode<synchronous>, transform_indices = @transform_1, window_bounds = array<i64: 1, 16>}, {pipeline_mode = #tpu.pipeline_mode<synchronous>, transform_indices = @transform_2, window_bounds = array<i64: 1, 16>}, {pipeline_mode = #tpu.pipeline_mode<synchronous>, transform_indices = @transform_3, window_bounds = array<i64: 6, 16, 16>}, {transform_indices = @transform_4, window_bounds = array<i64: 4, 16, 16>}, {pipeline_mode = #tpu.pipeline_mode<synchronous>, transform_indices = @transform_5, window_bounds = array<i64: 2, 16, 16>}, {pipeline_mode = #tpu.pipeline_mode<synchronous>, transform_indices = @transform_6, window_bounds = array<i64: 1, 16>}, {transform_indices = @transform_7, window_bounds = array<i64: 4, 16, 16>}]} {
    %c0 = arith.constant 0 : index
    %c0_0 = arith.constant 0 : index
    %c0_1 = arith.constant 0 : index
    %0 = vector.load %arg1[%c0, %c0_0, %c0_1] : memref<4x16x16xf32, #tpu.memory_space<vmem>>, vector<4x16x16xf32>
    %1 = vector.shape_cast %0 : vector<4x16x16xf32> to vector<64x16xf32>
    %cst = arith.constant dense<0.000000e+00> : vector<64xf32>
    %2 = vector.multi_reduction <add>, %1, %cst [1] : vector<64x16xf32> to vector<64xf32>
    %3 = vector.shape_cast %2 : vector<64xf32> to vector<64x1xf32>
    %cst_2 = arith.constant 1.600000e+01 : f32
    %4 = vector.broadcast %cst_2 : f32 to vector<64x1xf32>
    %5 = arith.divf %3, %4 : vector<64x1xf32>
    %6 = vector.broadcast %5 : vector<64x1xf32> to vector<64x16xf32>
    %7 = arith.subf %1, %6 : vector<64x16xf32>
    %8 = arith.mulf %7, %7 : vector<64x16xf32>
    %cst_3 = arith.constant dense<0.000000e+00> : vector<64xf32>
    %9 = vector.multi_reduction <add>, %8, %cst_3 [1] : vector<64x16xf32> to vector<64xf32>
    %10 = vector.shape_cast %9 : vector<64xf32> to vector<64x1xf32>
    %cst_4 = arith.constant 1.600000e+01 : f32
    %11 = vector.broadcast %cst_4 : f32 to vector<64x1xf32>
    %12 = arith.divf %10, %11 : vector<64x1xf32>
    %13 = vector.broadcast %5 : vector<64x1xf32> to vector<64x16xf32>
    %14 = arith.subf %1, %13 : vector<64x16xf32>
    %cst_5 = arith.constant 9.99999974E-6 : f32
    %15 = vector.broadcast %cst_5 : f32 to vector<64x1xf32>
    %16 = arith.addf %12, %15 : vector<64x1xf32>
    %17 = math.rsqrt %16 : vector<64x1xf32>
    %18 = vector.broadcast %17 : vector<64x1xf32> to vector<64x16xf32>
    %19 = arith.mulf %14, %18 : vector<64x16xf32>
    %c0_6 = arith.constant 0 : index
    %c0_7 = arith.constant 0 : index
    %20 = vector.load %arg2[%c0_6, %c0_7] : memref<1x16xf32, #tpu.memory_space<vmem>>, vector<1x16xf32>
    %21 = vector.broadcast %20 : vector<1x16xf32> to vector<64x16xf32>
    %22 = arith.mulf %19, %21 : vector<64x16xf32>
    %c0_8 = arith.constant 0 : index
    %c0_9 = arith.constant 0 : index
    %23 = vector.load %arg3[%c0_8, %c0_9] : memref<1x16xf32, #tpu.memory_space<vmem>>, vector<1x16xf32>
    %24 = vector.broadcast %23 : vector<1x16xf32> to vector<64x16xf32>
    %25 = arith.addf %22, %24 : vector<64x16xf32>
    %26 = arith.truncf %25 : vector<64x16xf32> to vector<64x16xbf16>
    %c0_10 = arith.constant 0 : index
    %c0_11 = arith.constant 0 : index
    %c0_12 = arith.constant 0 : index
    %27 = vector.load %arg4[%c0_10, %c0_11, %c0_12] : memref<6x16x16xbf16, #tpu.memory_space<vmem>>, vector<1x16x16xbf16>
    %28 = vector.shape_cast %27 : vector<1x16x16xbf16> to vector<16x16xbf16>
    %cst_13 = arith.constant dense<0.000000e+00> : vector<64x16xf32>
    %29 = tpu.matmul %26, %28, %cst_13 {dimension_numbers = #tpu.dot_dimension_numbers<[1], [0], [0], [1], [0, 0, 1, 1], [], []>} : vector<64x16xbf16>, vector<16x16xbf16>, vector<64x16xf32> -> vector<64x16xf32>
    %30 = arith.truncf %29 : vector<64x16xf32> to vector<64x16xbf16>
    %c1 = arith.constant 1 : index
    %c0_14 = arith.constant 0 : index
    %c0_15 = arith.constant 0 : index
    %31 = vector.load %arg4[%c1, %c0_14, %c0_15] : memref<6x16x16xbf16, #tpu.memory_space<vmem>>, vector<1x16x16xbf16>
    %32 = vector.shape_cast %31 : vector<1x16x16xbf16> to vector<16x16xbf16>
    %cst_16 = arith.constant dense<0.000000e+00> : vector<64x16xf32>
    %33 = tpu.matmul %26, %32, %cst_16 {dimension_numbers = #tpu.dot_dimension_numbers<[1], [0], [0], [1], [0, 0, 1, 1], [], []>} : vector<64x16xbf16>, vector<16x16xbf16>, vector<64x16xf32> -> vector<64x16xf32>
    %34 = arith.truncf %33 : vector<64x16xf32> to vector<64x16xbf16>
    %35 = vector.shape_cast %30 : vector<64x16xbf16> to vector<1x64x16xbf16>
    %36 = vector.shape_cast %34 : vector<64x16xbf16> to vector<1x64x16xbf16>
    %37 = tpu.concatenate %35, %36 in 0 : vector<1x64x16xbf16>, vector<1x64x16xbf16> -> vector<2x64x16xbf16>
    %38 = vector.shape_cast %37 : vector<2x64x16xbf16> to vector<8x16x16xbf16>
    %c2 = arith.constant 2 : index
    %c0_17 = arith.constant 0 : index
    %c0_18 = arith.constant 0 : index
    %39 = vector.load %arg4[%c2, %c0_17, %c0_18] : memref<6x16x16xbf16, #tpu.memory_space<vmem>>, vector<1x16x16xbf16>
    %40 = vector.shape_cast %39 : vector<1x16x16xbf16> to vector<16x16xbf16>
    %cst_19 = arith.constant dense<0.000000e+00> : vector<64x16xf32>
    %41 = tpu.matmul %26, %40, %cst_19 {dimension_numbers = #tpu.dot_dimension_numbers<[1], [0], [0], [1], [0, 0, 1, 1], [], []>} : vector<64x16xbf16>, vector<16x16xbf16>, vector<64x16xf32> -> vector<64x16xf32>
    %42 = arith.truncf %41 : vector<64x16xf32> to vector<64x16xbf16>
    %c3 = arith.constant 3 : index
    %c0_20 = arith.constant 0 : index
    %c0_21 = arith.constant 0 : index
    %43 = vector.load %arg4[%c3, %c0_20, %c0_21] : memref<6x16x16xbf16, #tpu.memory_space<vmem>>, vector<1x16x16xbf16>
    %44 = vector.shape_cast %43 : vector<1x16x16xbf16> to vector<16x16xbf16>
    %cst_22 = arith.constant dense<0.000000e+00> : vector<64x16xf32>
    %45 = tpu.matmul %26, %44, %cst_22 {dimension_numbers = #tpu.dot_dimension_numbers<[1], [0], [0], [1], [0, 0, 1, 1], [], []>} : vector<64x16xbf16>, vector<16x16xbf16>, vector<64x16xf32> -> vector<64x16xf32>
    %46 = arith.truncf %45 : vector<64x16xf32> to vector<64x16xbf16>
    %47 = vector.shape_cast %42 : vector<64x16xbf16> to vector<1x64x16xbf16>
    %48 = vector.shape_cast %46 : vector<64x16xbf16> to vector<1x64x16xbf16>
    %49 = tpu.concatenate %47, %48 in 0 : vector<1x64x16xbf16>, vector<1x64x16xbf16> -> vector<2x64x16xbf16>
    %50 = vector.shape_cast %49 : vector<2x64x16xbf16> to vector<8x16x16xbf16>
    %c4 = arith.constant 4 : index
    %c0_23 = arith.constant 0 : index
    %c0_24 = arith.constant 0 : index
    %51 = vector.load %arg4[%c4, %c0_23, %c0_24] : memref<6x16x16xbf16, #tpu.memory_space<vmem>>, vector<1x16x16xbf16>
    %52 = vector.shape_cast %51 : vector<1x16x16xbf16> to vector<16x16xbf16>
    %cst_25 = arith.constant dense<0.000000e+00> : vector<64x16xf32>
    %53 = tpu.matmul %26, %52, %cst_25 {dimension_numbers = #tpu.dot_dimension_numbers<[1], [0], [0], [1], [0, 0, 1, 1], [], []>} : vector<64x16xbf16>, vector<16x16xbf16>, vector<64x16xf32> -> vector<64x16xf32>
    %54 = arith.truncf %53 : vector<64x16xf32> to vector<64x16xbf16>
    %c5 = arith.constant 5 : index
    %c0_26 = arith.constant 0 : index
    %c0_27 = arith.constant 0 : index
    %55 = vector.load %arg4[%c5, %c0_26, %c0_27] : memref<6x16x16xbf16, #tpu.memory_space<vmem>>, vector<1x16x16xbf16>
    %56 = vector.shape_cast %55 : vector<1x16x16xbf16> to vector<16x16xbf16>
    %cst_28 = arith.constant dense<0.000000e+00> : vector<64x16xf32>
    %57 = tpu.matmul %26, %56, %cst_28 {dimension_numbers = #tpu.dot_dimension_numbers<[1], [0], [0], [1], [0, 0, 1, 1], [], []>} : vector<64x16xbf16>, vector<16x16xbf16>, vector<64x16xf32> -> vector<64x16xf32>
    %58 = arith.truncf %57 : vector<64x16xf32> to vector<64x16xbf16>
    %59 = vector.shape_cast %54 : vector<64x16xbf16> to vector<1x64x16xbf16>
    %60 = vector.shape_cast %58 : vector<64x16xbf16> to vector<1x64x16xbf16>
    %61 = tpu.concatenate %59, %60 in 0 : vector<1x64x16xbf16>, vector<1x64x16xbf16> -> vector<2x64x16xbf16>
    %62 = vector.shape_cast %61 : vector<2x64x16xbf16> to vector<8x16x16xbf16>
    %cst_29 = arith.constant dense<0.000000e+00> : vector<8x16x16xf32>
    %63 = tpu.matmul %38, %50, %cst_29 {dimension_numbers = #tpu.dot_dimension_numbers<[2], [2], [1], [1], [0, 0, 0, 1, 1, 1], [0], [0]>} : vector<8x16x16xbf16>, vector<8x16x16xbf16>, vector<8x16x16xf32> -> vector<8x16x16xf32>
    %64 = vector.shape_cast %63 : vector<8x16x16xf32> to vector<2x4x16x16xf32>
    %c0_30 = arith.constant 0 : index
    %c0_31 = arith.constant 0 : index
    %c0_32 = arith.constant 0 : index
    %65 = vector.load %arg5[%c0_30, %c0_31, %c0_32] : memref<4x16x16xf32, #tpu.memory_space<vmem>>, vector<4x16x16xf32>
    %66 = vector.shape_cast %65 : vector<4x16x16xf32> to vector<1x4x16x16xf32>
    %67 = vector.broadcast %66 : vector<1x4x16x16xf32> to vector<2x4x16x16xf32>
    %68 = arith.addf %64, %67 : vector<2x4x16x16xf32>
    %cst_33 = arith.constant dense<0xFF800000> : vector<2x4x16xf32>
    %69 = vector.multi_reduction <maximumf>, %68, %cst_33 [3] : vector<2x4x16x16xf32> to vector<2x4x16xf32>
    %70 = vector.shape_cast %69 : vector<2x4x16xf32> to vector<2x4x16x1xf32>
    %71 = vector.broadcast %70 : vector<2x4x16x1xf32> to vector<2x4x16x16xf32>
    %72 = arith.subf %68, %71 : vector<2x4x16x16xf32>
    %73 = math.exp %72 : vector<2x4x16x16xf32>
    %cst_34 = arith.constant dense<0.000000e+00> : vector<2x4x16xf32>
    %74 = vector.multi_reduction <add>, %73, %cst_34 [3] : vector<2x4x16x16xf32> to vector<2x4x16xf32>
    %75 = vector.shape_cast %74 : vector<2x4x16xf32> to vector<2x4x16x1xf32>
    %76 = vector.shape_cast %73 : vector<2x4x16x16xf32> to vector<8x16x16xf32>
    %77 = arith.truncf %76 : vector<8x16x16xf32> to vector<8x16x16xbf16>
    %cst_35 = arith.constant dense<0.000000e+00> : vector<8x16x16xf32>
    %78 = tpu.matmul %77, %62, %cst_35 {dimension_numbers = #tpu.dot_dimension_numbers<[2], [1], [1], [2], [0, 0, 0, 1, 1, 2], [0], [0]>} : vector<8x16x16xbf16>, vector<8x16x16xbf16>, vector<8x16x16xf32> -> vector<8x16x16xf32>
    %79 = vector.shape_cast %75 : vector<2x4x16x1xf32> to vector<8x16x1xf32>
    %80 = tpu.reciprocal %79 {approx = true} : vector<8x16x1xf32> -> vector<8x16x1xf32>
    %81 = vector.broadcast %80 : vector<8x16x1xf32> to vector<8x16x16xf32>
    %82 = arith.mulf %78, %81 : vector<8x16x16xf32>
    %83 = vector.shape_cast %82 : vector<8x16x16xf32> to vector<2x64x16xf32>
    %84 = arith.truncf %83 : vector<2x64x16xf32> to vector<2x64x16xbf16>
    %85 = vector.extract_strided_slice %84 {offsets = [0, 0, 0], sizes = [1, 64, 16], strides = [1, 1, 1]} : vector<2x64x16xbf16> to vector<1x64x16xbf16>
    %86 = vector.shape_cast %85 : vector<1x64x16xbf16> to vector<64x16xbf16>
    %c0_36 = arith.constant 0 : index
    %c0_37 = arith.constant 0 : index
    %c0_38 = arith.constant 0 : index
    %87 = vector.load %arg6[%c0_36, %c0_37, %c0_38] : memref<2x16x16xbf16, #tpu.memory_space<vmem>>, vector<1x16x16xbf16>
    %88 = vector.shape_cast %87 : vector<1x16x16xbf16> to vector<16x16xbf16>
    %cst_39 = arith.constant dense<0.000000e+00> : vector<64x16xf32>
    %89 = tpu.matmul %86, %88, %cst_39 {dimension_numbers = #tpu.dot_dimension_numbers<[1], [0], [0], [1], [0, 0, 1, 1], [], []>} : vector<64x16xbf16>, vector<16x16xbf16>, vector<64x16xf32> -> vector<64x16xf32>
    %90 = vector.extract_strided_slice %84 {offsets = [1, 0, 0], sizes = [1, 64, 16], strides = [1, 1, 1]} : vector<2x64x16xbf16> to vector<1x64x16xbf16>
    %91 = vector.shape_cast %90 : vector<1x64x16xbf16> to vector<64x16xbf16>
    %c1_40 = arith.constant 1 : index
    %c0_41 = arith.constant 0 : index
    %c0_42 = arith.constant 0 : index
    %92 = vector.load %arg6[%c1_40, %c0_41, %c0_42] : memref<2x16x16xbf16, #tpu.memory_space<vmem>>, vector<1x16x16xbf16>
    %93 = vector.shape_cast %92 : vector<1x16x16xbf16> to vector<16x16xbf16>
    %cst_43 = arith.constant dense<0.000000e+00> : vector<64x16xf32>
    %94 = tpu.matmul %91, %93, %cst_43 {dimension_numbers = #tpu.dot_dimension_numbers<[1], [0], [0], [1], [0, 0, 1, 1], [], []>} : vector<64x16xbf16>, vector<16x16xbf16>, vector<64x16xf32> -> vector<64x16xf32>
    %95 = arith.addf %89, %94 : vector<64x16xf32>
    %c0_44 = arith.constant 0 : index
    %c0_45 = arith.constant 0 : index
    %96 = vector.load %arg7[%c0_44, %c0_45] : memref<1x16xf32, #tpu.memory_space<vmem>>, vector<1x16xf32>
    %97 = vector.broadcast %96 : vector<1x16xf32> to vector<64x16xf32>
    %98 = arith.addf %95, %97 : vector<64x16xf32>
    %99 = arith.addf %98, %1 : vector<64x16xf32>
    %100 = vector.shape_cast %99 : vector<64x16xf32> to vector<4x16x16xf32>
    %c0_46 = arith.constant 0 : index
    %c0_47 = arith.constant 0 : index
    %c0_48 = arith.constant 0 : index
    %101 = vector.load %arg8[%c0_46, %c0_47, %c0_48] : memref<4x16x16xf32, #tpu.memory_space<vmem>>, vector<4x16x16xf32>
    tpu.vector_store %arg8[%c0_46, %c0_47, %c0_48], %100 {strides = array<i32>} : memref<4x16x16xf32, #tpu.memory_space<vmem>>, vector<4x16x16xf32>,
    return
  }
  func.func @transform_0(%arg0: i32) -> (i32, i32, i32) {
    %c0_i32 = arith.constant 0 : i32
    %c0_i32_0 = arith.constant 0 : i32
    %c0_i32_1 = arith.constant 0 : i32
    return %arg0, %c0_i32, %c0_i32_0 : i32, i32, i32
  }
  func.func @transform_1(%arg0: i32) -> (i32, i32) {
    %c0_i32 = arith.constant 0 : i32
    %c0_i32_0 = arith.constant 0 : i32
    %c0_i32_1 = arith.constant 0 : i32
    return %c0_i32, %c0_i32_0 : i32, i32
  }
  func.func @transform_2(%arg0: i32) -> (i32, i32) {
    %c0_i32 = arith.constant 0 : i32
    %c0_i32_0 = arith.constant 0 : i32
    %c0_i32_1 = arith.constant 0 : i32
    return %c0_i32, %c0_i32_0 : i32, i32
  }
  func.func @transform_3(%arg0: i32) -> (i32, i32, i32) {
    %c0_i32 = arith.constant 0 : i32
    %c0_i32_0 = arith.constant 0 : i32
    %c0_i32_1 = arith.constant 0 : i32
    %c0_i32_2 = arith.constant 0 : i32
    return %c0_i32, %c0_i32_0, %c0_i32_1 : i32, i32, i32
  }
  func.func @transform_4(%arg0: i32) -> (i32, i32, i32) {
    %c1_i32 = arith.constant 1 : i32
    %c0_i32 = arith.constant 0 : i32
    %0 = arith.cmpi eq, %c1_i32, %c0_i32 : i32
    %c1_i32_0 = arith.constant 1 : i32
    %1 = arith.select %0, %c1_i32_0, %c1_i32 : i32
    %2 = arith.remsi %arg0, %1 : i32
    %c0_i32_1 = arith.constant 0 : i32
    %3 = arith.cmpi ne, %2, %c0_i32_1 : i32
    %c0_i32_2 = arith.constant 0 : i32
    %4 = arith.cmpi slt, %2, %c0_i32_2 : i32
    %c0_i32_3 = arith.constant 0 : i32
    %5 = arith.cmpi slt, %1, %c0_i32_3 : i32
    %6 = arith.xori %4, %5 : i1
    %7 = arith.andi %6, %3 : i1
    %8 = arith.addi %2, %1 : i32
    %9 = arith.select %7, %8, %2 : i32
    %c0_i32_4 = arith.constant 0 : i32
    %c0_i32_5 = arith.constant 0 : i32
    %c0_i32_6 = arith.constant 0 : i32
    return %9, %c0_i32_4, %c0_i32_5 : i32, i32, i32
  }
  func.func @transform_5(%arg0: i32) -> (i32, i32, i32) {
    %c0_i32 = arith.constant 0 : i32
    %c0_i32_0 = arith.constant 0 : i32
    %c0_i32_1 = arith.constant 0 : i32
    %c0_i32_2 = arith.constant 0 : i32
    return %c0_i32, %c0_i32_0, %c0_i32_1 : i32, i32, i32
  }
  func.func @transform_6(%arg0: i32) -> (i32, i32) {
    %c0_i32 = arith.constant 0 : i32
    %c0_i32_0 = arith.constant 0 : i32
    %c0_i32_1 = arith.constant 0 : i32
    return %c0_i32, %c0_i32_0 : i32, i32
  }
  func.func @transform_7(%arg0: i32) -> (i32, i32, i32) {
    %c0_i32 = arith.constant 0 : i32
    %c0_i32_0 = arith.constant 0 : i32
    %c0_i32_1 = arith.constant 0 : i32
    return %arg0, %c0_i32, %c0_i32_0 : i32, i32, i32
  }
}

</mosaic_0001>

<llo_original>
// kernel: sub.19
$region0: #{sub.19}
  %s0 = inlined_call_operand.vmem [shape: s32[4,4,2], index: 0, kind: input, shape index: {}]
  %s1 = inlined_call_operand.vmem [shape: s32[16,2], index: 1, kind: output, shape index: {}]
  $region1: #{sub.19} parent=0
    #allocation0 [shape = 'u8[4096]{0}', space=vmem, size = 0x1000, scoped, tag = 'scoped mem for output reshape']
    #allocation1 [shape = 'u8[8192]{0}', space=vmem, size = 0x2000, scoped, tag = 'scoped mem for input reshape']
    %s3 = sshllo.u32 0, 4
    %s4 = scalar_lea.vmem %s0, 4
    %v5 = vld [vmem:[%s4] sm:%s3]
    %s6 = scalar_lea.vmem [#allocation1], 8
    %7 = vst [vmem:[%s6] sm:%s3] %v5
    %v8 = vld [vmem:[%s0] sm:%s3]
    %9 = vst [vmem:[#allocation1] sm:%s3] %v8
    %s10 = smov 3
    %v11 = vld [vmem:[#allocation1] ss:$8 sm:%s10]
    %vm12 = vcmask 31744
    %13 = vst.msk [vmem:[#allocation0] sm:$0x3] %vm12, %v11
    %s14 = scalar_lea.vmem [#allocation1], 3
    %s15 = smov 3
    %v16 = vld [vmem:[%s14] ss:$8 sm:%s15]
    %17 = vrot.lane.b32.xlu0 %v16, 12
    %v18 = vpop.permute.xlu0 %17
    %vm19 = vcmask 130144
    %20 = vst.msk [vmem:[#allocation0] sm:$0x3] %vm19, %v18
    %s21 = scalar_lea.vmem [#allocation1], 2
    %s22 = smov 3
    %v23 = vld [vmem:[%s21] ss:$8 sm:%s22]
    %24 = vrot.lane.b32.xlu0 %v23, 8
    %v25 = vpop.permute.xlu0 %24
    %vm26 = vcmask 97344
    %27 = vst.msk [vmem:[#allocation0] sm:$0x3] %vm26, %v25
    %s28 = scalar_lea.vmem [#allocation1], 1
    %s29 = smov 3
    %v30 = vld [vmem:[%s28] ss:$8 sm:%s29]
    %31 = vrot.lane.b32.xlu0 %v30, 4
    %v32 = vpop.permute.xlu0 %31
    %vm33 = vcmask 64544
    %34 = vst.msk [vmem:[#allocation0] sm:$0x3] %vm33, %v32
    %s36 = sshllo.u32 0, 2
    %v38 = vld [vmem:[#allocation0] sm:%s36]
    %s39 = sshllo.u32 0, 2
    %40 = vst [vmem:[%s1] sm:%s39] %v38

// kernel: _lambda_.5
$region0: #{_lambda_.5}
  #allocation0 [shape = 'u32[]', space=smem, size = 0x4, offset = 0x4, fixed_abs, tag = 'smem constant byte address 0x4 - core index']
  #allocation1 [shape = 'u32[144,128]{1,0:T(1,128)}', space=vmem, size = 0x12000, scoped, tag = 'internal scratch']
  %s0 = inlined_call_operand.vmem [shape: f32[128,16], index: 0, kind: input, shape index: {}]
  %s1 = inlined_call_operand.vmem [shape: bf16[16,16], index: 1, kind: input, shape index: {}]
  %s2 = inlined_call_operand.vmem [shape: f32[1,16], index: 2, kind: input, shape index: {}]
  %s3 = inlined_call_operand.vmem [shape: f32[128,16], index: 3, kind: output, shape index: {}]
  %s4 = sld [smem:[#allocation0]]
  $region22: #{_lambda_.5} parent=0
    _
  %s6 = ssub.s32 1, %s4
  %s7 = scalar_select 0, %s6, %s4
  // Predicated region
  $region2: #{_lambda_.5} parent=0 // pred_check
    _
  $region3: #{_lambda_.5} parent=0 // pred_check_branch
    %9 = sbr.rel (0) target = $region5
  $region4: #{_lambda_.5} parent=0 // pred_region
    _
  $region5: #{_lambda_.5} parent=0 // pred_fallthru
    _
  // Predicated region
  $region6: #{_lambda_.5} parent=0 // pred_check
    _
  $region7: #{_lambda_.5} parent=0 // pred_check_branch
    %11 = sbr.rel (0) target = $region9
  $region8: #{_lambda_.5} parent=0 // pred_region
    _
  $region9: #{_lambda_.5} parent=0 // pred_fallthru
    _
  // Predicated region
  $region10: #{_lambda_.5} parent=0 // pred_check
    _
  $region11: #{_lambda_.5} parent=0 // pred_check_branch
    %13 = sbr.rel (0) target = $region13
  $region12: #{_lambda_.5} parent=0 // pred_region
    _
  $region13: #{_lambda_.5} parent=0 // pred_fallthru
    _
  %v15 = vld [vmem:[%s0] sm:$0xff]
  %v16 = vld [vmem:[%s0 + $0x8] sm:$0xff]
  %v17 = vld [vmem:[%s0 + $0x10] sm:$0xff]
  %v18 = vld [vmem:[%s0 + $0x18] sm:$0xff]
  %v19 = vld [vmem:[%s0 + $0x20] sm:$0xff]
  %v20 = vld [vmem:[%s0 + $0x28] sm:$0xff]
  %v21 = vld [vmem:[%s0 + $0x30] sm:$0xff]
  %v22 = vld [vmem:[%s0 + $0x38] sm:$0xff]
  %v23 = vld [vmem:[%s0 + $0x40] sm:$0xff]
  %v24 = vld [vmem:[%s0 + $0x48] sm:$0xff]
  %v25 = vld [vmem:[%s0 + $0x50] sm:$0xff]
  %v26 = vld [vmem:[%s0 + $0x58] sm:$0xff]
  %v27 = vld [vmem:[%s0 + $0x60] sm:$0xff]
  %v28 = vld [vmem:[%s0 + $0x68] sm:$0xff]
  %v29 = vld [vmem:[%s0 + $0x70] sm:$0xff]
  %v30 = vld [vmem:[%s0 + $0x78] sm:$0xff]
  %v31 = vpack.c.bf16 %v16, %v15
  %v32 = vpack.c.bf16 %v18, %v17
  %v33 = vpack.c.bf16 %v20, %v19
  %v34 = vpack.c.bf16 %v22, %v21
  %v35 = vpack.c.bf16 %v24, %v23
  %v36 = vpack.c.bf16 %v26, %v25
  %v37 = vpack.c.bf16 %v28, %v27
  %v38 = vpack.c.bf16 %v30, %v29
  %v39 = vld [vmem:[%s1] sm:$0xf]
  %v40 = vld [vmem:[%s1 + $0x4] sm:$0xf]
  %v41 = vld [vmem:[%s2] sm:$0x1]
  %v43 = vlaneseq
  %v44 = vshrl.u32 %v43, 7
  %v45 = vsub.s32 0, %v44
  %v46 = vrot.slane %v41, %v45
  %v50 = vunpack.c.l.b16 %v39
  %v51 = vunpack.c.l.b16 %v40
  %v52 = vpack.c.b16 %v51, %v50
  %vm54 = vcmask 130048
  %v56 = vsel %vm54, %v31, 0
  %v59 = vsel %vm54, %v32, 0
  %v62 = vsel %vm54, %v33, 0
  %v65 = vsel %vm54, %v34, 0
  %v68 = vsel %vm54, %v35, 0
  %v71 = vsel %vm54, %v36, 0
  %v74 = vsel %vm54, %v37, 0
  %v77 = vsel %vm54, %v38, 0
  %79 = vmatprep.subr.bf16.mxu0 0
  %80 = vmatpush1.bf16.msra.mxu0 %v52
  %81 = vmatprep.subr.bf16.mxu0 0
  %82 = vmatpush1.bf16.msra.mxu0 0
  %83 = vmatprep.subr.bf16.mxu0 0
  %84 = vmatpush1.bf16.msra.mxu0 0
  %85 = vmatprep.subr.bf16.mxu0 0
  %86 = vmatpush1.bf16.msra.mxu0 0
  %87 = vmatprep.subr.bf16.mxu0 0
  %88 = vmatpush1.bf16.msra.mxu0 0
  %89 = vmatprep.subr.bf16.mxu0 0
  %90 = vmatpush1.bf16.msra.mxu0 0
  %91 = vmatprep.subr.bf16.mxu0 0
  %92 = vmatpush1.bf16.msra.mxu0 0
  %93 = vmatprep.subr.bf16.mxu0 0
  %94 = vmatpush1.bf16.msra.mxu0 0
  %95 = vmatprep.subr.bf16.mxu0 0
  %96 = vmatpush1.bf16.msra.mxu0 0
  %97 = vmatprep.subr.bf16.mxu0 0
  %98 = vmatpush1.bf16.msra.mxu0 0
  %99 = vmatprep.subr.bf16.mxu0 0
  %100 = vmatpush1.bf16.msra.mxu0 0
  %101 = vmatprep.subr.bf16.mxu0 0
  %102 = vmatpush1.bf16.msra.mxu0 0
  %103 = vmatprep.subr.bf16.mxu0 0
  %104 = vmatpush1.bf16.msra.mxu0 0
  %105 = vmatprep.subr.bf16.mxu0 0
  %106 = vmatpush1.bf16.msra.mxu0 0
  %107 = vmatprep.subr.bf16.mxu0 0
  %108 = vmatpush1.bf16.msra.mxu0 0
  %109 = vmatprep.subr.bf16.mxu0 0
  %110 = vmatpush1.bf16.msra.mxu0 0
  %111 = vmatprep.mubr.bf16.mxu0 0
  %112 = vmatmul.mubr.bf16.gmra.mrb[0].mxu0 %v56
  %v113 = vpop.f32.mrb[0].mxu0
  %v114 = vadd.f32 %v46, %v113
  %v115 = vpop.f32.mrb[0].mxu0
  %v116 = vpop.f32.mrb[0].mxu0
  %v117 = vadd.f32 %v46, %v116
  %v118 = vpop.f32.mrb[0].mxu0
  %119 = vmatprep.mubr.bf16.mxu0 0
  %120 = vmatmul.mubr.bf16.gmra.mrb[0].mxu0 %v59
  %v121 = vpop.f32.mrb[0].mxu0
  %v122 = vadd.f32 %v46, %v121
  %v123 = vpop.f32.mrb[0].mxu0
  %v124 = vpop.f32.mrb[0].mxu0
  %v125 = vadd.f32 %v46, %v124
  %v126 = vpop.f32.mrb[0].mxu0
  %127 = vmatprep.mubr.bf16.mxu0 0
  %128 = vmatmul.mubr.bf16.gmra.mrb[0].mxu0 %v62
  %v129 = vpop.f32.mrb[0].mxu0
  %v130 = vadd.f32 %v46, %v129
  %v131 = vpop.f32.mrb[0].mxu0
  %v132 = vpop.f32.mrb[0].mxu0
  %v133 = vadd.f32 %v46, %v132
  %v134 = vpop.f32.mrb[0].mxu0
  %135 = vmatprep.mubr.bf16.mxu0 0
  %136 = vmatmul.mubr.bf16.gmra.mrb[0].mxu0 %v65
  %v137 = vpop.f32.mrb[0].mxu0
  %v138 = vadd.f32 %v46, %v137
  %v139 = vpop.f32.mrb[0].mxu0
  %v140 = vpop.f32.mrb[0].mxu0
  %v141 = vadd.f32 %v46, %v140
  %v142 = vpop.f32.mrb[0].mxu0
  %143 = vmatprep.mubr.bf16.mxu0 0
  %144 = vmatmul.mubr.bf16.gmra.mrb[0].mxu0 %v68
  %v145 = vpop.f32.mrb[0].mxu0
  %v146 = vadd.f32 %v46, %v145
  %v147 = vpop.f32.mrb[0].mxu0
  %v148 = vpop.f32.mrb[0].mxu0
  %v149 = vadd.f32 %v46, %v148
  %v150 = vpop.f32.mrb[0].mxu0
  %151 = vmatprep.mubr.bf16.mxu0 0
  %152 = vmatmul.mubr.bf16.gmra.mrb[0].mxu0 %v71
  %v153 = vpop.f32.mrb[0].mxu0
  %v154 = vadd.f32 %v46, %v153
  %v155 = vpop.f32.mrb[0].mxu0
  %v156 = vpop.f32.mrb[0].mxu0
  %v157 = vadd.f32 %v46, %v156
  %v158 = vpop.f32.mrb[0].mxu0
  %159 = vmatprep.mubr.bf16.mxu0 0
  %160 = vmatmul.mubr.bf16.gmra.mrb[0].mxu0 %v74
  %v161 = vpop.f32.mrb[0].mxu0
  %v162 = vadd.f32 %v46, %v161
  %v163 = vpop.f32.mrb[0].mxu0
  %v164 = vpop.f32.mrb[0].mxu0
  %v165 = vadd.f32 %v46, %v164
  %v166 = vpop.f32.mrb[0].mxu0
  %167 = vmatprep.mubr.bf16.mxu0 0
  %168 = vmatmul.mubr.bf16.gmra.mrb[0].mxu0 %v77
  %v169 = vpop.f32.mrb[0].mxu0
  %v170 = vadd.f32 %v46, %v169
  %v171 = vpop.f32.mrb[0].mxu0
  %v172 = vpop.f32.mrb[0].mxu0
  %v173 = vadd.f32 %v46, %v172
  %v174 = vpop.f32.mrb[0].mxu0
  %175 = vdwg.mxu0
  %176 = vst.msk [vmem:[%s3] sm:$0xff] %vm54, %v114
  %177 = vst.msk [vmem:[%s3 + $0x8] sm:$0xff] %vm54, %v117
  %178 = vst.msk [vmem:[%s3 + $0x10] sm:$0xff] %vm54, %v122
  %179 = vst.msk [vmem:[%s3 + $0x18] sm:$0xff] %vm54, %v125
  %180 = vst.msk [vmem:[%s3 + $0x20] sm:$0xff] %vm54, %v130
  %181 = vst.msk [vmem:[%s3 + $0x28] sm:$0xff] %vm54, %v133
  %182 = vst.msk [vmem:[%s3 + $0x30] sm:$0xff] %vm54, %v138
  %183 = vst.msk [vmem:[%s3 + $0x38] sm:$0xff] %vm54, %v141
  %184 = vst.msk [vmem:[%s3 + $0x40] sm:$0xff] %vm54, %v146
  %185 = vst.msk [vmem:[%s3 + $0x48] sm:$0xff] %vm54, %v149
  %186 = vst.msk [vmem:[%s3 + $0x50] sm:$0xff] %vm54, %v154
  %187 = vst.msk [vmem:[%s3 + $0x58] sm:$0xff] %vm54, %v157
  %188 = vst.msk [vmem:[%s3 + $0x60] sm:$0xff] %vm54, %v162
  %189 = vst.msk [vmem:[%s3 + $0x68] sm:$0xff] %vm54, %v165
  %190 = vst.msk [vmem:[%s3 + $0x70] sm:$0xff] %vm54, %v170
  %191 = vst.msk [vmem:[%s3 + $0x78] sm:$0xff] %vm54, %v173
  // Predicated region
  $region14: #{_lambda_.5} parent=0 // pred_check
    _
  $region15: #{_lambda_.5} parent=0 // pred_check_branch
    %193 = sbr.rel (0) target = $region17
  $region16: #{_lambda_.5} parent=0 // pred_region
    _
  $region17: #{_lambda_.5} parent=0 // pred_fallthru
    _
  // Predicated region
  $region18: #{_lambda_.5} parent=0 // pred_check
    _
  $region19: #{_lambda_.5} parent=0 // pred_check_branch
    %195 = sbr.rel (0) target = $region21
  $region20: #{_lambda_.5} parent=0 // pred_region
    _
  $region21: #{_lambda_.5} parent=0 // pred_fallthru
    _

// kernel: _lambda_.7
$region0: #{_lambda_.7}
  #allocation0 [shape = 'u32[]', space=smem, size = 0x4, offset = 0x4, fixed_abs, tag = 'smem constant byte address 0x4 - core index']
  #allocation1 [shape = 'u32[144,128]{1,0:T(1,128)}', space=vmem, size = 0x12000, scoped, tag = 'internal scratch']
  %s0 = inlined_call_operand.vmem [shape: f32[128,16], index: 0, kind: input, shape index: {}]
  %s1 = inlined_call_operand.vmem [shape: f32[1,16], index: 1, kind: input, shape index: {}]
  %s2 = inlined_call_operand.vmem [shape: f32[1,16], index: 2, kind: input, shape index: {}]
  %s3 = inlined_call_operand.vmem [shape: bf16[16,64], index: 3, kind: input, shape index: {}]
  %s4 = inlined_call_operand.vmem [shape: f32[1,64], index: 4, kind: input, shape index: {}]
  %s5 = inlined_call_operand.vmem [shape: bf16[64,16], index: 5, kind: input, shape index: {}]
  %s6 = inlined_call_operand.vmem [shape: f32[1,16], index: 6, kind: input, shape index: {}]
  %s7 = inlined_call_operand.vmem [shape: f32[128,16], index: 7, kind: output, shape index: {}]
  %s8 = sld [smem:[#allocation0]]
  $region38: #{_lambda_.7} parent=0
    _
  %s10 = ssub.s32 1, %s8
  %s11 = scalar_select 0, %s10, %s8
  // Predicated region
  $region2: #{_lambda_.7} parent=0 // pred_check
    _
  $region3: #{_lambda_.7} parent=0 // pred_check_branch
    %13 = sbr.rel (0) target = $region5
  $region4: #{_lambda_.7} parent=0 // pred_region
    _
  $region5: #{_lambda_.7} parent=0 // pred_fallthru
    _
  // Predicated region
  $region6: #{_lambda_.7} parent=0 // pred_check
    _
  $region7: #{_lambda_.7} parent=0 // pred_check_branch
    %15 = sbr.rel (0) target = $region9
  $region8: #{_lambda_.7} parent=0 // pred_region
    _
  $region9: #{_lambda_.7} parent=0 // pred_fallthru
    _
  // Predicated region
  $region10: #{_lambda_.7} parent=0 // pred_check
    _
  $region11: #{_lambda_.7} parent=0 // pred_check_branch
    %17 = sbr.rel (0) target = $region13
  $region12: #{_lambda_.7} parent=0 // pred_region
    _
  $region13: #{_lambda_.7} parent=0 // pred_fallthru
    _
  // Predicated region
  $region14: #{_lambda_.7} parent=0 // pred_check
    _
  $region15: #{_lambda_.7} parent=0 // pred_check_branch
    %19 = sbr.rel (0) target = $region17
  $region16: #{_lambda_.7} parent=0 // pred_region
    _
  $region17: #{_lambda_.7} parent=0 // pred_fallthru
    _
  // Predicated region
  $region18: #{_lambda_.7} parent=0 // pred_check
    _
  $region19: #{_lambda_.7} parent=0 // pred_check_branch
    %21 = sbr.rel (0) target = $region21
  $region20: #{_lambda_.7} parent=0 // pred_region
    _
  $region21: #{_lambda_.7} parent=0 // pred_fallthru
    _
  // Predicated region
  $region22: #{_lambda_.7} parent=0 // pred_check
    _
  $region23: #{_lambda_.7} parent=0 // pred_check_branch
    %23 = sbr.rel (0) target = $region25
  $region24: #{_lambda_.7} parent=0 // pred_region
    _
  $region25: #{_lambda_.7} parent=0 // pred_fallthru
    _
  // Predicated region
  $region26: #{_lambda_.7} parent=0 // pred_check
    _
  $region27: #{_lambda_.7} parent=0 // pred_check_branch
    %25 = sbr.rel (0) target = $region29
  $region28: #{_lambda_.7} parent=0 // pred_region
    _
  $region29: #{_lambda_.7} parent=0 // pred_fallthru
    _
  %v27 = vld [vmem:[%s0] sm:$0xff]
  %v28 = vld [vmem:[%s0 + $0x8] sm:$0xff]
  %v29 = vld [vmem:[%s0 + $0x10] sm:$0xff]
  %v30 = vld [vmem:[%s0 + $0x18] sm:$0xff]
  %v31 = vld [vmem:[%s0 + $0x20] sm:$0xff]
  %v32 = vld [vmem:[%s0 + $0x28] sm:$0xff]
  %v33 = vld [vmem:[%s0 + $0x30] sm:$0xff]
  %v34 = vld [vmem:[%s0 + $0x38] sm:$0xff]
  %v35 = vld [vmem:[%s0 + $0x40] sm:$0xff]
  %v36 = vld [vmem:[%s0 + $0x48] sm:$0xff]
  %v37 = vld [vmem:[%s0 + $0x50] sm:$0xff]
  %v38 = vld [vmem:[%s0 + $0x58] sm:$0xff]
  %v39 = vld [vmem:[%s0 + $0x60] sm:$0xff]
  %v40 = vld [vmem:[%s0 + $0x68] sm:$0xff]
  %v41 = vld [vmem:[%s0 + $0x70] sm:$0xff]
  %v42 = vld [vmem:[%s0 + $0x78] sm:$0xff]
  %vm43 = vcmask 130048
  %v44 = vsel %vm43, %v27, 0.0
  %45 = vadd.xlane.f32.xlu0 %v44
  %v46 = vpop.xlane.xlu0 %45
  %v47 = vsel %vm43, %v28, 0.0
  %48 = vadd.xlane.f32.xlu0 %v47
  %v49 = vpop.xlane.xlu0 %48
  %v50 = vsel %vm43, %v29, 0.0
  %51 = vadd.xlane.f32.xlu0 %v50
  %v52 = vpop.xlane.xlu0 %51
  %v53 = vsel %vm43, %v30, 0.0
  %54 = vadd.xlane.f32.xlu0 %v53
  %v55 = vpop.xlane.xlu0 %54
  %v56 = vsel %vm43, %v31, 0.0
  %57 = vadd.xlane.f32.xlu0 %v56
  %v58 = vpop.xlane.xlu0 %57
  %v59 = vsel %vm43, %v32, 0.0
  %60 = vadd.xlane.f32.xlu0 %v59
  %v61 = vpop.xlane.xlu0 %60
  %v62 = vsel %vm43, %v33, 0.0
  %63 = vadd.xlane.f32.xlu0 %v62
  %v64 = vpop.xlane.xlu0 %63
  %v65 = vsel %vm43, %v34, 0.0
  %66 = vadd.xlane.f32.xlu0 %v65
  %v67 = vpop.xlane.xlu0 %66
  %v68 = vsel %vm43, %v35, 0.0
  %69 = vadd.xlane.f32.xlu0 %v68
  %v70 = vpop.xlane.xlu0 %69
  %v71 = vsel %vm43, %v36, 0.0
  %72 = vadd.xlane.f32.xlu0 %v71
  %v73 = vpop.xlane.xlu0 %72
  %v74 = vsel %vm43, %v37, 0.0
  %75 = vadd.xlane.f32.xlu0 %v74
  %v76 = vpop.xlane.xlu0 %75
  %v77 = vsel %vm43, %v38, 0.0
  %78 = vadd.xlane.f32.xlu0 %v77
  %v79 = vpop.xlane.xlu0 %78
  %v80 = vsel %vm43, %v39, 0.0
  %81 = vadd.xlane.f32.xlu0 %v80
  %v82 = vpop.xlane.xlu0 %81
  %v83 = vsel %vm43, %v40, 0.0
  %84 = vadd.xlane.f32.xlu0 %v83
  %v85 = vpop.xlane.xlu0 %84
  %v86 = vsel %vm43, %v41, 0.0
  %87 = vadd.xlane.f32.xlu0 %v86
  %v88 = vpop.xlane.xlu0 %87
  %v89 = vsel %vm43, %v42, 0.0
  %90 = vadd.xlane.f32.xlu0 %v89
  %v91 = vpop.xlane.xlu0 %90
  %v92 = vrcp.pop 16.0
  %v93 = vmul.f32 %v46, %v92
  %v94 = vmul.f32 %v49, %v92
  %v95 = vmul.f32 %v52, %v92
  %v96 = vmul.f32 %v55, %v92
  %v97 = vmul.f32 %v58, %v92
  %v98 = vmul.f32 %v61, %v92
  %v99 = vmul.f32 %v64, %v92
  %v100 = vmul.f32 %v67, %v92
  %v101 = vmul.f32 %v70, %v92
  %v102 = vmul.f32 %v73, %v92
  %v103 = vmul.f32 %v76, %v92
  %v104 = vmul.f32 %v79, %v92
  %v105 = vmul.f32 %v82, %v92
  %v106 = vmul.f32 %v85, %v92
  %v107 = vmul.f32 %v88, %v92
  %v108 = vmul.f32 %v91, %v92
  %v109 = vsub.f32 %v27, %v93
  %v110 = vsub.f32 %v28, %v94
  %v111 = vsub.f32 %v29, %v95
  %v112 = vsub.f32 %v30, %v96
  %v113 = vsub.f32 %v31, %v97
  %v114 = vsub.f32 %v32, %v98
  %v115 = vsub.f32 %v33, %v99
  %v116 = vsub.f32 %v34, %v100
  %v117 = vsub.f32 %v35, %v101
  %v118 = vsub.f32 %v36, %v102
  %v119 = vsub.f32 %v37, %v103
  %v120 = vsub.f32 %v38, %v104
  %v121 = vsub.f32 %v39, %v105
  %v122 = vsub.f32 %v40, %v106
  %v123 = vsub.f32 %v41, %v107
  %v124 = vsub.f32 %v42, %v108
  %v125 = vmul.f32 %v109, %v109
  %v126 = vmul.f32 %v110, %v110
  %v127 = vmul.f32 %v111, %v111
  %v128 = vmul.f32 %v112, %v112
  %v129 = vmul.f32 %v113, %v113
  %v130 = vmul.f32 %v114, %v114
  %v131 = vmul.f32 %v115, %v115
  %v132 = vmul.f32 %v116, %v116
  %v133 = vmul.f32 %v117, %v117
  %v134 = vmul.f32 %v118, %v118
  %v135 = vmul.f32 %v119, %v119
  %v136 = vmul.f32 %v120, %v120
  %v137 = vmul.f32 %v121, %v121
  %v138 = vmul.f32 %v122, %v122
  %v139 = vmul.f32 %v123, %v123
  %v140 = vmul.f32 %v124, %v124
  %v141 = vsel %vm43, %v125, 0.0
  %142 = vadd.xlane.f32.xlu0 %v141
  %v143 = vpop.xlane.xlu0 %142
  %v144 = vsel %vm43, %v126, 0.0
  %145 = vadd.xlane.f32.xlu0 %v144
  %v146 = vpop.xlane.xlu0 %145
  %v147 = vsel %vm43, %v127, 0.0
  %148 = vadd.xlane.f32.xlu0 %v147
  %v149 = vpop.xlane.xlu0 %148
  %v150 = vsel %vm43, %v128, 0.0
  %151 = vadd.xlane.f32.xlu0 %v150
  %v152 = vpop.xlane.xlu0 %151
  %v153 = vsel %vm43, %v129, 0.0
  %154 = vadd.xlane.f32.xlu0 %v153
  %v155 = vpop.xlane.xlu0 %154
  %v156 = vsel %vm43, %v130, 0.0
  %157 = vadd.xlane.f32.xlu0 %v156
  %v158 = vpop.xlane.xlu0 %157
  %v159 = vsel %vm43, %v131, 0.0
  %160 = vadd.xlane.f32.xlu0 %v159
  %v161 = vpop.xlane.xlu0 %160
  %v162 = vsel %vm43, %v132, 0.0
  %163 = vadd.xlane.f32.xlu0 %v162
  %v164 = vpop.xlane.xlu0 %163
  %v165 = vsel %vm43, %v133, 0.0
  %166 = vadd.xlane.f32.xlu0 %v165
  %v167 = vpop.xlane.xlu0 %166
  %v168 = vsel %vm43, %v134, 0.0
  %169 = vadd.xlane.f32.xlu0 %v168
  %v170 = vpop.xlane.xlu0 %169
  %v171 = vsel %vm43, %v135, 0.0
  %172 = vadd.xlane.f32.xlu0 %v171
  %v173 = vpop.xlane.xlu0 %172
  %v174 = vsel %vm43, %v136, 0.0
  %175 = vadd.xlane.f32.xlu0 %v174
  %v176 = vpop.xlane.xlu0 %175
  %v177 = vsel %vm43, %v137, 0.0
  %178 = vadd.xlane.f32.xlu0 %v177
  %v179 = vpop.xlane.xlu0 %178
  %v180 = vsel %vm43, %v138, 0.0
  %181 = vadd.xlane.f32.xlu0 %v180
  %v182 = vpop.xlane.xlu0 %181
  %v183 = vsel %vm43, %v139, 0.0
  %184 = vadd.xlane.f32.xlu0 %v183
  %v185 = vpop.xlane.xlu0 %184
  %v186 = vsel %vm43, %v140, 0.0
  %187 = vadd.xlane.f32.xlu0 %v186
  %v188 = vpop.xlane.xlu0 %187
  %v189 = vmul.f32 %v143, %v92
  %v190 = vmul.f32 %v146, %v92
  %v191 = vmul.f32 %v149, %v92
  %v192 = vmul.f32 %v152, %v92
  %v193 = vmul.f32 %v155, %v92
  %v194 = vmul.f32 %v158, %v92
  %v195 = vmul.f32 %v161, %v92
  %v196 = vmul.f32 %v164, %v92
  %v197 = vmul.f32 %v167, %v92
  %v198 = vmul.f32 %v170, %v92
  %v199 = vmul.f32 %v173, %v92
  %v200 = vmul.f32 %v176, %v92
  %v201 = vmul.f32 %v179, %v92
  %v202 = vmul.f32 %v182, %v92
  %v203 = vmul.f32 %v185, %v92
  %v204 = vmul.f32 %v188, %v92
  %v205 = vadd.f32 %v189, 1e-05
  %v206 = vadd.f32 %v190, 1e-05
  %v207 = vadd.f32 %v191, 1e-05
  %v208 = vadd.f32 %v192, 1e-05
  %v209 = vadd.f32 %v193, 1e-05
  %v210 = vadd.f32 %v194, 1e-05
  %v211 = vadd.f32 %v195, 1e-05
  %v212 = vadd.f32 %v196, 1e-05
  %v213 = vadd.f32 %v197, 1e-05
  %v214 = vadd.f32 %v198, 1e-05
  %v215 = vadd.f32 %v199, 1e-05
  %v216 = vadd.f32 %v200, 1e-05
  %v217 = vadd.f32 %v201, 1e-05
  %v218 = vadd.f32 %v202, 1e-05
  %v219 = vadd.f32 %v203, 1e-05
  %v220 = vadd.f32 %v204, 1e-05
  %v221 = vrsqrt.pop %v205
  %v222 = vrsqrt.pop %v206
  %v223 = vrsqrt.pop %v207
  %v224 = vrsqrt.pop %v208
  %v225 = vrsqrt.pop %v209
  %v226 = vrsqrt.pop %v210
  %v227 = vrsqrt.pop %v211
  %v228 = vrsqrt.pop %v212
  %v229 = vrsqrt.pop %v213
  %v230 = vrsqrt.pop %v214
  %v231 = vrsqrt.pop %v215
  %v232 = vrsqrt.pop %v216
  %v233 = vrsqrt.pop %v217
  %v234 = vrsqrt.pop %v218
  %v235 = vrsqrt.pop %v219
  %v236 = vrsqrt.pop %v220
  %v237 = vmul.f32 %v109, %v221
  %v238 = vmul.f32 %v110, %v222
  %v239 = vmul.f32 %v111, %v223
  %v240 = vmul.f32 %v112, %v224
  %v241 = vmul.f32 %v113, %v225
  %v242 = vmul.f32 %v114, %v226
  %v243 = vmul.f32 %v115, %v227
  %v244 = vmul.f32 %v116, %v228
  %v245 = vmul.f32 %v117, %v229
  %v246 = vmul.f32 %v118, %v230
  %v247 = vmul.f32 %v119, %v231
  %v248 = vmul.f32 %v120, %v232
  %v249 = vmul.f32 %v121, %v233
  %v250 = vmul.f32 %v122, %v234
  %v251 = vmul.f32 %v123, %v235
  %v252 = vmul.f32 %v124, %v236
  %v253 = vld [vmem:[%s1] sm:$0x1]
  %v255 = vlaneseq
  %v256 = vshrl.u32 %v255, 7
  %v257 = vsub.s32 0, %v256
  %v258 = vrot.slane %v253, %v257
  %v260 = vmul.f32 %v237, %v258
  %v261 = vmul.f32 %v238, %v258
  %v262 = vmul.f32 %v239, %v258
  %v263 = vmul.f32 %v240, %v258
  %v264 = vmul.f32 %v241, %v258
  %v265 = vmul.f32 %v242, %v258
  %v266 = vmul.f32 %v243, %v258
  %v267 = vmul.f32 %v244, %v258
  %v268 = vmul.f32 %v245, %v258
  %v269 = vmul.f32 %v246, %v258
  %v270 = vmul.f32 %v247, %v258
  %v271 = vmul.f32 %v248, %v258
  %v272 = vmul.f32 %v249, %v258
  %v273 = vmul.f32 %v250, %v258
  %v274 = vmul.f32 %v251, %v258
  %v275 = vmul.f32 %v252, %v258
  %v276 = vld [vmem:[%s2] sm:$0x1]
  %v278 = vlaneseq
  %v279 = vshrl.u32 %v278, 7
  %v280 = vsub.s32 0, %v279
  %v281 = vrot.slane %v276, %v280
  %v283 = vadd.f32 %v260, %v281
  %v284 = vadd.f32 %v261, %v281
  %v285 = vadd.f32 %v262, %v281
  %v286 = vadd.f32 %v263, %v281
  %v287 = vadd.f32 %v264, %v281
  %v288 = vadd.f32 %v265, %v281
  %v289 = vadd.f32 %v266, %v281
  %v290 = vadd.f32 %v267, %v281
  %v291 = vadd.f32 %v268, %v281
  %v292 = vadd.f32 %v269, %v281
  %v293 = vadd.f32 %v270, %v281
  %v294 = vadd.f32 %v271, %v281
  %v295 = vadd.f32 %v272, %v281
  %v296 = vadd.f32 %v273, %v281
  %v297 = vadd.f32 %v274, %v281
  %v298 = vadd.f32 %v275, %v281
  %v299 = vpack.c.bf16 %v284, %v283
  %v300 = vpack.c.bf16 %v286, %v285
  %v301 = vpack.c.bf16 %v288, %v287
  %v302 = vpack.c.bf16 %v290, %v289
  %v303 = vpack.c.bf16 %v292, %v291
  %v304 = vpack.c.bf16 %v294, %v293
  %v305 = vpack.c.bf16 %v296, %v295
  %v306 = vpack.c.bf16 %v298, %v297
  %v307 = vld [vmem:[%s3] sm:$0xf]
  %v308 = vld [vmem:[%s3 + $0x4] sm:$0xf]
  %v309 = vld [vmem:[%s4] sm:$0x1]
  %v311 = vlaneseq
  %v312 = vshrl.u32 %v311, 7
  %v313 = vsub.s32 0, %v312
  %v314 = vrot.slane %v309, %v313
  %v318 = vunpack.c.l.b16 %v307
  %v319 = vunpack.c.l.b16 %v308
  %v320 = vpack.c.b16 %v319, %v318
  %v323 = vsel %vm43, %v299, 0
  %v326 = vsel %vm43, %v300, 0
  %v329 = vsel %vm43, %v301, 0
  %v332 = vsel %vm43, %v302, 0
  %v335 = vsel %vm43, %v303, 0
  %v338 = vsel %vm43, %v304, 0
  %v341 = vsel %vm43, %v305, 0
  %v344 = vsel %vm43, %v306, 0
  %346 = vmatprep.subr.bf16.mxu0 0
  %347 = vmatpush1.bf16.msra.mxu0 %v320
  %348 = vmatprep.subr.bf16.mxu0 0
  %349 = vmatpush1.bf16.msra.mxu0 0
  %350 = vmatprep.subr.bf16.mxu0 0
  %351 = vmatpush1.bf16.msra.mxu0 0
  %352 = vmatprep.subr.bf16.mxu0 0
  %353 = vmatpush1.bf16.msra.mxu0 0
  %354 = vmatprep.subr.bf16.mxu0 0
  %355 = vmatpush1.bf16.msra.mxu0 0
  %356 = vmatprep.subr.bf16.mxu0 0
  %357 = vmatpush1.bf16.msra.mxu0 0
  %358 = vmatprep.subr.bf16.mxu0 0
  %359 = vmatpush1.bf16.msra.mxu0 0
  %360 = vmatprep.subr.bf16.mxu0 0
  %361 = vmatpush1.bf16.msra.mxu0 0
  %362 = vmatprep.subr.bf16.mxu0 0
  %363 = vmatpush1.bf16.msra.mxu0 0
  %364 = vmatprep.subr.bf16.mxu0 0
  %365 = vmatpush1.bf16.msra.mxu0 0
  %366 = vmatprep.subr.bf16.mxu0 0
  %367 = vmatpush1.bf16.msra.mxu0 0
  %368 = vmatprep.subr.bf16.mxu0 0
  %369 = vmatpush1.bf16.msra.mxu0 0
  %370 = vmatprep.subr.bf16.mxu0 0
  %371 = vmatpush1.bf16.msra.mxu0 0
  %372 = vmatprep.subr.bf16.mxu0 0
  %373 = vmatpush1.bf16.msra.mxu0 0
  %374 = vmatprep.subr.bf16.mxu0 0
  %375 = vmatpush1.bf16.msra.mxu0 0
  %376 = vmatprep.subr.bf16.mxu0 0
  %377 = vmatpush1.bf16.msra.mxu0 0
  %378 = vmatprep.mubr.bf16.mxu0 0
  %379 = vmatmul.mubr.bf16.gmra.mrb[0].mxu0 %v323
  %v380 = vpop.f32.mrb[0].mxu0
  %v381 = vadd.f32 %v314, %v380
  %v382 = vpop.f32.mrb[0].mxu0
  %v383 = vpop.f32.mrb[0].mxu0
  %v384 = vadd.f32 %v314, %v383
  %v385 = vpop.f32.mrb[0].mxu0
  %386 = vmatprep.mubr.bf16.mxu0 0
  %387 = vmatmul.mubr.bf16.gmra.mrb[0].mxu0 %v326
  %v388 = vpop.f32.mrb[0].mxu0
  %v389 = vadd.f32 %v314, %v388
  %v390 = vpop.f32.mrb[0].mxu0
  %v391 = vpop.f32.mrb[0].mxu0
  %v392 = vadd.f32 %v314, %v391
  %v393 = vpop.f32.mrb[0].mxu0
  %394 = vmatprep.mubr.bf16.mxu0 0
  %395 = vmatmul.mubr.bf16.gmra.mrb[0].mxu0 %v329
  %v396 = vpop.f32.mrb[0].mxu0
  %v397 = vadd.f32 %v314, %v396
  %v398 = vpop.f32.mrb[0].mxu0
  %v399 = vpop.f32.mrb[0].mxu0
  %v400 = vadd.f32 %v314, %v399
  %v401 = vpop.f32.mrb[0].mxu0
  %402 = vmatprep.mubr.bf16.mxu0 0
  %403 = vmatmul.mubr.bf16.gmra.mrb[0].mxu0 %v332
  %v404 = vpop.f32.mrb[0].mxu0
  %v405 = vadd.f32 %v314, %v404
  %v406 = vpop.f32.mrb[0].mxu0
  %v407 = vpop.f32.mrb[0].mxu0
  %v408 = vadd.f32 %v314, %v407
  %v409 = vpop.f32.mrb[0].mxu0
  %410 = vmatprep.mubr.bf16.mxu0 0
  %411 = vmatmul.mubr.bf16.gmra.mrb[0].mxu0 %v335
  %v412 = vpop.f32.mrb[0].mxu0
  %v413 = vadd.f32 %v314, %v412
  %v414 = vpop.f32.mrb[0].mxu0
  %v415 = vpop.f32.mrb[0].mxu0
  %v416 = vadd.f32 %v314, %v415
  %v417 = vpop.f32.mrb[0].mxu0
  %418 = vmatprep.mubr.bf16.mxu0 0
  %419 = vmatmul.mubr.bf16.gmra.mrb[0].mxu0 %v338
  %v420 = vpop.f32.mrb[0].mxu0
  %v421 = vadd.f32 %v314, %v420
  %v422 = vpop.f32.mrb[0].mxu0
  %v423 = vpop.f32.mrb[0].mxu0
  %v424 = vadd.f32 %v314, %v423
  %v425 = vpop.f32.mrb[0].mxu0
  %426 = vmatprep.mubr.bf16.mxu0 0
  %427 = vmatmul.mubr.bf16.gmra.mrb[0].mxu0 %v341
  %v428 = vpop.f32.mrb[0].mxu0
  %v429 = vadd.f32 %v314, %v428
  %v430 = vpop.f32.mrb[0].mxu0
  %v431 = vpop.f32.mrb[0].mxu0
  %v432 = vadd.f32 %v314, %v431
  %v433 = vpop.f32.mrb[0].mxu0
  %434 = vmatprep.mubr.bf16.mxu0 0
  %435 = vmatmul.mubr.bf16.gmra.mrb[0].mxu0 %v344
  %v436 = vpop.f32.mrb[0].mxu0
  %v437 = vadd.f32 %v314, %v436
  %v438 = vpop.f32.mrb[0].mxu0
  %v439 = vpop.f32.mrb[0].mxu0
  %v440 = vadd.f32 %v314, %v439
  %v441 = vpop.f32.mrb[0].mxu0
  %442 = vdwg.mxu0
  %v443 = vmul.f32 %v381, %v381
  %v444 = vmul.f32 %v384, %v384
  %v445 = vmul.f32 %v389, %v389
  %v446 = vmul.f32 %v392, %v392
  %v447 = vmul.f32 %v397, %v397
  %v448 = vmul.f32 %v400, %v400
  %v449 = vmul.f32 %v405, %v405
  %v450 = vmul.f32 %v408, %v408
  %v451 = vmul.f32 %v413, %v413
  %v452 = vmul.f32 %v416, %v416
  %v453 = vmul.f32 %v421, %v421
  %v454 = vmul.f32 %v424, %v424
  %v455 = vmul.f32 %v429, %v429
  %v456 = vmul.f32 %v432, %v432
  %v457 = vmul.f32 %v437, %v437
  %v458 = vmul.f32 %v440, %v440
  %v459 = vmul.f32 %v381, %v443
  %v460 = vmul.f32 %v384, %v444
  %v461 = vmul.f32 %v389, %v445
  %v462 = vmul.f32 %v392, %v446
  %v463 = vmul.f32 %v397, %v447
  %v464 = vmul.f32 %v400, %v448
  %v465 = vmul.f32 %v405, %v449
  %v466 = vmul.f32 %v408, %v450
  %v467 = vmul.f32 %v413, %v451
  %v468 = vmul.f32 %v416, %v452
  %v469 = vmul.f32 %v421, %v453
  %v470 = vmul.f32 %v424, %v454
  %v471 = vmul.f32 %v429, %v455
  %v472 = vmul.f32 %v432, %v456
  %v473 = vmul.f32 %v437, %v457
  %v474 = vmul.f32 %v440, %v458
  %v475 = vmul.f32 %v459, 0.044715
  %v476 = vmul.f32 %v460, 0.044715
  %v477 = vmul.f32 %v461, 0.044715
  %v478 = vmul.f32 %v462, 0.044715
  %v479 = vmul.f32 %v463, 0.044715
  %v480 = vmul.f32 %v464, 0.044715
  %v481 = vmul.f32 %v465, 0.044715
  %v482 = vmul.f32 %v466, 0.044715
  %v483 = vmul.f32 %v467, 0.044715
  %v484 = vmul.f32 %v468, 0.044715
  %v485 = vmul.f32 %v469, 0.044715
  %v486 = vmul.f32 %v470, 0.044715
  %v487 = vmul.f32 %v471, 0.044715
  %v488 = vmul.f32 %v472, 0.044715
  %v489 = vmul.f32 %v473, 0.044715
  %v490 = vmul.f32 %v474, 0.044715
  %v491 = vadd.f32 %v381, %v475
  %v492 = vadd.f32 %v384, %v476
  %v493 = vadd.f32 %v389, %v477
  %v494 = vadd.f32 %v392, %v478
  %v495 = vadd.f32 %v397, %v479
  %v496 = vadd.f32 %v400, %v480
  %v497 = vadd.f32 %v405, %v481
  %v498 = vadd.f32 %v408, %v482
  %v499 = vadd.f32 %v413, %v483
  %v500 = vadd.f32 %v416, %v484
  %v501 = vadd.f32 %v421, %v485
  %v502 = vadd.f32 %v424, %v486
  %v503 = vadd.f32 %v429, %v487
  %v504 = vadd.f32 %v432, %v488
  %v505 = vadd.f32 %v437, %v489
  %v506 = vadd.f32 %v440, %v490
  %v507 = vmul.f32 %v491, 0.7978846
  %v508 = vmul.f32 %v492, 0.7978846
  %v509 = vmul.f32 %v493, 0.7978846
  %v510 = vmul.f32 %v494, 0.7978846
  %v511 = vmul.f32 %v495, 0.7978846
  %v512 = vmul.f32 %v496, 0.7978846
  %v513 = vmul.f32 %v497, 0.7978846
  %v514 = vmul.f32 %v498, 0.7978846
  %v515 = vmul.f32 %v499, 0.7978846
  %v516 = vmul.f32 %v500, 0.7978846
  %v517 = vmul.f32 %v501, 0.7978846
  %v518 = vmul.f32 %v502, 0.7978846
  %v519 = vmul.f32 %v503, 0.7978846
  %v520 = vmul.f32 %v504, 0.7978846
  %v521 = vmul.f32 %v505, 0.7978846
  %v522 = vmul.f32 %v506, 0.7978846
  %v523 = vtanh.pop %v507
  %v524 = vtanh.pop %v508
  %v525 = vtanh.pop %v509
  %v526 = vtanh.pop %v510
  %v527 = vtanh.pop %v511
  %v528 = vtanh.pop %v512
  %v529 = vtanh.pop %v513
  %v530 = vtanh.pop %v514
  %v531 = vtanh.pop %v515
  %v532 = vtanh.pop %v516
  %v533 = vtanh.pop %v517
  %v534 = vtanh.pop %v518
  %v535 = vtanh.pop %v519
  %v536 = vtanh.pop %v520
  %v537 = vtanh.pop %v521
  %v538 = vtanh.pop %v522
  %v539 = vadd.f32 %v523, 1.0
  %v540 = vadd.f32 %v524, 1.0
  %v541 = vadd.f32 %v525, 1.0
  %v542 = vadd.f32 %v526, 1.0
  %v543 = vadd.f32 %v527, 1.0
  %v544 = vadd.f32 %v528, 1.0
  %v545 = vadd.f32 %v529, 1.0
  %v546 = vadd.f32 %v530, 1.0
  %v547 = vadd.f32 %v531, 1.0
  %v548 = vadd.f32 %v532, 1.0
  %v549 = vadd.f32 %v533, 1.0
  %v550 = vadd.f32 %v534, 1.0
  %v551 = vadd.f32 %v535, 1.0
  %v552 = vadd.f32 %v536, 1.0
  %v553 = vadd.f32 %v537, 1.0
  %v554 = vadd.f32 %v538, 1.0
  %v555 = vmul.f32 %v539, 0.5
  %v556 = vmul.f32 %v540, 0.5
  %v557 = vmul.f32 %v541, 0.5
  %v558 = vmul.f32 %v542, 0.5
  %v559 = vmul.f32 %v543, 0.5
  %v560 = vmul.f32 %v544, 0.5
  %v561 = vmul.f32 %v545, 0.5
  %v562 = vmul.f32 %v546, 0.5
  %v563 = vmul.f32 %v547, 0.5
  %v564 = vmul.f32 %v548, 0.5
  %v565 = vmul.f32 %v549, 0.5
  %v566 = vmul.f32 %v550, 0.5
  %v567 = vmul.f32 %v551, 0.5
  %v568 = vmul.f32 %v552, 0.5
  %v569 = vmul.f32 %v553, 0.5
  %v570 = vmul.f32 %v554, 0.5
  %v571 = vmul.f32 %v381, %v555
  %v572 = vmul.f32 %v384, %v556
  %v573 = vmul.f32 %v389, %v557
  %v574 = vmul.f32 %v392, %v558
  %v575 = vmul.f32 %v397, %v559
  %v576 = vmul.f32 %v400, %v560
  %v577 = vmul.f32 %v405, %v561
  %v578 = vmul.f32 %v408, %v562
  %v579 = vmul.f32 %v413, %v563
  %v580 = vmul.f32 %v416, %v564
  %v581 = vmul.f32 %v421, %v565
  %v582 = vmul.f32 %v424, %v566
  %v583 = vmul.f32 %v429, %v567
  %v584 = vmul.f32 %v432, %v568
  %v585 = vmul.f32 %v437, %v569
  %v586 = vmul.f32 %v440, %v570
  %v587 = vpack.c.bf16 %v572, %v571
  %v588 = vpack.c.bf16 %v574, %v573
  %v589 = vpack.c.bf16 %v576, %v575
  %v590 = vpack.c.bf16 %v578, %v577
  %v591 = vpack.c.bf16 %v580, %v579
  %v592 = vpack.c.bf16 %v582, %v581
  %v593 = vpack.c.bf16 %v584, %v583
  %v594 = vpack.c.bf16 %v586, %v585
  %v595 = vld [vmem:[%s5] sm:$0xf]
  %v596 = vld [vmem:[%s5 + $0x4] sm:$0xf]
  %v597 = vld [vmem:[%s5 + $0x8] sm:$0xf]
  %v598 = vld [vmem:[%s5 + $0xc] sm:$0xf]
  %v599 = vld [vmem:[%s5 + $0x10] sm:$0xf]
  %v600 = vld [vmem:[%s5 + $0x14] sm:$0xf]
  %v601 = vld [vmem:[%s5 + $0x18] sm:$0xf]
  %v602 = vld [vmem:[%s5 + $0x1c] sm:$0xf]
  %v603 = vld [vmem:[%s6] sm:$0x1]
  %v605 = vlaneseq
  %v606 = vshrl.u32 %v605, 7
  %v607 = vsub.s32 0, %v606
  %v608 = vrot.slane %v603, %v607
  %v618 = vunpack.c.l.b16 %v595
  %v619 = vunpack.c.l.b16 %v596
  %v620 = vunpack.c.l.b16 %v597
  %v621 = vunpack.c.l.b16 %v598
  %v622 = vunpack.c.l.b16 %v599
  %v623 = vunpack.c.l.b16 %v600
  %v624 = vunpack.c.l.b16 %v601
  %v625 = vunpack.c.l.b16 %v602
  %v626 = vpack.c.b16 %v619, %v618
  %v627 = vpack.c.b16 %v621, %v620
  %v628 = vpack.c.b16 %v623, %v622
  %v629 = vpack.c.b16 %v625, %v624
  %vm634 = vcmask 523264
  %v636 = vsel %vm634, %v587, 0
  %v639 = vsel %vm634, %v588, 0
  %v642 = vsel %vm634, %v589, 0
  %v645 = vsel %vm634, %v590, 0
  %v648 = vsel %vm634, %v591, 0
  %v651 = vsel %vm634, %v592, 0
  %v654 = vsel %vm634, %v593, 0
  %v657 = vsel %vm634, %v594, 0
  %659 = vmatprep.subr.bf16.mxu0 0
  %660 = vmatpush1.bf16.msra.mxu0 %v626
  %661 = vmatprep.subr.bf16.mxu0 0
  %662 = vmatpush1.bf16.msra.mxu0 %v627
  %663 = vmatprep.subr.bf16.mxu0 0
  %664 = vmatpush1.bf16.msra.mxu0 %v628
  %665 = vmatprep.subr.bf16.mxu0 0
  %666 = vmatpush1.bf16.msra.mxu0 %v629
  %667 = vmatprep.subr.bf16.mxu0 0
  %668 = vmatpush1.bf16.msra.mxu0 0
  %669 = vmatprep.subr.bf16.mxu0 0
  %670 = vmatpush1.bf16.msra.mxu0 0
  %671 = vmatprep.subr.bf16.mxu0 0
  %672 = vmatpush1.bf16.msra.mxu0 0
  %673 = vmatprep.subr.bf16.mxu0 0
  %674 = vmatpush1.bf16.msra.mxu0 0
  %675 = vmatprep.subr.bf16.mxu0 0
  %676 = vmatpush1.bf16.msra.mxu0 0
  %677 = vmatprep.subr.bf16.mxu0 0
  %678 = vmatpush1.bf16.msra.mxu0 0
  %679 = vmatprep.subr.bf16.mxu0 0
  %680 = vmatpush1.bf16.msra.mxu0 0
  %681 = vmatprep.subr.bf16.mxu0 0
  %682 = vmatpush1.bf16.msra.mxu0 0
  %683 = vmatprep.subr.bf16.mxu0 0
  %684 = vmatpush1.bf16.msra.mxu0 0
  %685 = vmatprep.subr.bf16.mxu0 0
  %686 = vmatpush1.bf16.msra.mxu0 0
  %687 = vmatprep.subr.bf16.mxu0 0
  %688 = vmatpush1.bf16.msra.mxu0 0
  %689 = vmatprep.subr.bf16.mxu0 0
  %690 = vmatpush1.bf16.msra.mxu0 0
  %691 = vmatprep.mubr.bf16.mxu0 0
  %692 = vmatmul.mubr.bf16.gmra.mrb[0].mxu0 %v636
  %v693 = vpop.f32.mrb[0].mxu0
  %v694 = vadd.f32 %v608, %v693
  %v695 = vpop.f32.mrb[0].mxu0
  %v696 = vpop.f32.mrb[0].mxu0
  %v697 = vadd.f32 %v608, %v696
  %v698 = vpop.f32.mrb[0].mxu0
  %699 = vmatprep.mubr.bf16.mxu0 0
  %700 = vmatmul.mubr.bf16.gmra.mrb[0].mxu0 %v639
  %v701 = vpop.f32.mrb[0].mxu0
  %v702 = vadd.f32 %v608, %v701
  %v703 = vpop.f32.mrb[0].mxu0
  %v704 = vpop.f32.mrb[0].mxu0
  %v705 = vadd.f32 %v608, %v704
  %v706 = vpop.f32.mrb[0].mxu0
  %707 = vmatprep.mubr.bf16.mxu0 0
  %708 = vmatmul.mubr.bf16.gmra.mrb[0].mxu0 %v642
  %v709 = vpop.f32.mrb[0].mxu0
  %v710 = vadd.f32 %v608, %v709
  %v711 = vpop.f32.mrb[0].mxu0
  %v712 = vpop.f32.mrb[0].mxu0
  %v713 = vadd.f32 %v608, %v712
  %v714 = vpop.f32.mrb[0].mxu0
  %715 = vmatprep.mubr.bf16.mxu0 0
  %716 = vmatmul.mubr.bf16.gmra.mrb[0].mxu0 %v645
  %v717 = vpop.f32.mrb[0].mxu0
  %v718 = vadd.f32 %v608, %v717
  %v719 = vpop.f32.mrb[0].mxu0
  %v720 = vpop.f32.mrb[0].mxu0
  %v721 = vadd.f32 %v608, %v720
  %v722 = vpop.f32.mrb[0].mxu0
  %723 = vmatprep.mubr.bf16.mxu0 0
  %724 = vmatmul.mubr.bf16.gmra.mrb[0].mxu0 %v648
  %v725 = vpop.f32.mrb[0].mxu0
  %v726 = vadd.f32 %v608, %v725
  %v727 = vpop.f32.mrb[0].mxu0
  %v728 = vpop.f32.mrb[0].mxu0
  %v729 = vadd.f32 %v608, %v728
  %v730 = vpop.f32.mrb[0].mxu0
  %731 = vmatprep.mubr.bf16.mxu0 0
  %732 = vmatmul.mubr.bf16.gmra.mrb[0].mxu0 %v651
  %v733 = vpop.f32.mrb[0].mxu0
  %v734 = vadd.f32 %v608, %v733
  %v735 = vpop.f32.mrb[0].mxu0
  %v736 = vpop.f32.mrb[0].mxu0
  %v737 = vadd.f32 %v608, %v736
  %v738 = vpop.f32.mrb[0].mxu0
  %739 = vmatprep.mubr.bf16.mxu0 0
  %740 = vmatmul.mubr.bf16.gmra.mrb[0].mxu0 %v654
  %v741 = vpop.f32.mrb[0].mxu0
  %v742 = vadd.f32 %v608, %v741
  %v743 = vpop.f32.mrb[0].mxu0
  %v744 = vpop.f32.mrb[0].mxu0
  %v745 = vadd.f32 %v608, %v744
  %v746 = vpop.f32.mrb[0].mxu0
  %747 = vmatprep.mubr.bf16.mxu0 0
  %748 = vmatmul.mubr.bf16.gmra.mrb[0].mxu0 %v657
  %v749 = vpop.f32.mrb[0].mxu0
  %v750 = vadd.f32 %v608, %v749
  %v751 = vpop.f32.mrb[0].mxu0
  %v752 = vpop.f32.mrb[0].mxu0
  %v753 = vadd.f32 %v608, %v752
  %v754 = vpop.f32.mrb[0].mxu0
  %755 = vdwg.mxu0
  %v756 = vadd.f32 %v694, %v27
  %v757 = vadd.f32 %v697, %v28
  %v758 = vadd.f32 %v702, %v29
  %v759 = vadd.f32 %v705, %v30
  %v760 = vadd.f32 %v710, %v31
  %v761 = vadd.f32 %v713, %v32
  %v762 = vadd.f32 %v718, %v33
  %v763 = vadd.f32 %v721, %v34
  %v764 = vadd.f32 %v726, %v35
  %v765 = vadd.f32 %v729, %v36
  %v766 = vadd.f32 %v734, %v37
  %v767 = vadd.f32 %v737, %v38
  %v768 = vadd.f32 %v742, %v39
  %v769 = vadd.f32 %v745, %v40
  %v770 = vadd.f32 %v750, %v41
  %v771 = vadd.f32 %v753, %v42
  %772 = vst.msk [vmem:[%s7] sm:$0xff] %vm43, %v756
  %773 = vst.msk [vmem:[%s7 + $0x8] sm:$0xff] %vm43, %v757
  %774 = vst.msk [vmem:[%s7 + $0x10] sm:$0xff] %vm43, %v758
  %775 = vst.msk [vmem:[%s7 + $0x18] sm:$0xff] %vm43, %v759
  %776 = vst.msk [vmem:[%s7 + $0x20] sm:$0xff] %vm43, %v760
  %777 = vst.msk [vmem:[%s7 + $0x28] sm:$0xff] %vm43, %v761
  %778 = vst.msk [vmem:[%s7 + $0x30] sm:$0xff] %vm43, %v762
  %779 = vst.msk [vmem:[%s7 + $0x38] sm:$0xff] %vm43, %v763
  %780 = vst.msk [vmem:[%s7 + $0x40] sm:$0xff] %vm43, %v764
  %781 = vst.msk [vmem:[%s7 + $0x48] sm:$0xff] %vm43, %v765
  %782 = vst.msk [vmem:[%s7 + $0x50] sm:$0xff] %vm43, %v766
  %783 = vst.msk [vmem:[%s7 + $0x58] sm:$0xff] %vm43, %v767
  %784 = vst.msk [vmem:[%s7 + $0x60] sm:$0xff] %vm43, %v768
  %785 = vst.msk [vmem:[%s7 + $0x68] sm:$0xff] %vm43, %v769
  %786 = vst.msk [vmem:[%s7 + $0x70] sm:$0xff] %vm43, %v770
  %787 = vst.msk [vmem:[%s7 + $0x78] sm:$0xff] %vm43, %v771
  // Predicated region
  $region30: #{_lambda_.7} parent=0 // pred_check
    _
  $region31: #{_lambda_.7} parent=0 // pred_check_branch
    %789 = sbr.rel (0) target = $region33
  $region32: #{_lambda_.7} parent=0 // pred_region
    _
  $region33: #{_lambda_.7} parent=0 // pred_fallthru
    _
  // Predicated region
  $region34: #{_lambda_.7} parent=0 // pred_check
    _
  $region35: #{_lambda_.7} parent=0 // pred_check_branch
    %791 = sbr.rel (0) target = $region37
  $region36: #{_lambda_.7} parent=0 // pred_region
    _
  $region37: #{_lambda_.7} parent=0 // pred_fallthru
    _

// kernel: _lambda_.6
$region0: #{_lambda_.6}
  #allocation0 [shape = 'u32[]', space=smem, size = 0x4, offset = 0x4, fixed_abs, tag = 'smem constant byte address 0x4 - core index']
  #allocation1 [shape = 'u32[144,128]{1,0:T(1,128)}', space=vmem, size = 0x12000, scoped, tag = 'internal scratch']
  %s0 = inlined_call_operand.vmem [shape: f32[8,16,16], index: 0, kind: input, shape index: {}]
  %s1 = inlined_call_operand.vmem [shape: f32[1,16], index: 1, kind: input, shape index: {}]
  %s2 = inlined_call_operand.vmem [shape: f32[1,16], index: 2, kind: input, shape index: {}]
  %s3 = inlined_call_operand.vmem [shape: bf16[6,16,16], index: 3, kind: input, shape index: {}]
  %s4 = inlined_call_operand.vmem [shape: f32[1,16,16], index: 4, kind: input, shape index: {}]
  %s5 = inlined_call_operand.vmem [shape: bf16[2,16,16], index: 5, kind: input, shape index: {}]
  %s6 = inlined_call_operand.vmem [shape: f32[1,16], index: 6, kind: input, shape index: {}]
  %s7 = inlined_call_operand.vmem [shape: f32[8,16,16], index: 7, kind: output, shape index: {}]
  %s8 = sld [smem:[#allocation0]]
  $region61: #{_lambda_.6} parent=0
    _
  %s10 = ssub.s32 1, %s8
  %s11 = scalar_select 0, %s10, %s8
  loop: start=0, step=1, limit=4
  $region2: #{_lambda_.6} parent=0 // loop_pre_header
    _
  $region3: #{_lambda_.6} parent=0 // loop_header
    %s13 = sphi 0, %s17
    %p14 = scmp.ge.s32.totalorder %s13, 4
    %s23 = sphi 0, %s25
    %s26 = sphi 0, %s23
    %s27 = sphi 0, %s26
    %s43 = sphi 0, %s27
    %s47 = sphi 0, %s47
    %s49 = sphi 0, %s47
    %s50 = sphi 0, %s49
    %s64 = sphi 0, %s50
    %s68 = sphi 0, %s68
    %s70 = sphi 0, %s68
    %s71 = sphi 0, %s70
    %s85 = sphi 0, %s71
    %s89 = sphi 0, %s89
    %s91 = sphi 0, %s89
    %s92 = sphi 0, %s91
    %s106 = sphi 0, %s92
    %s110 = sphi 0, %s110
    %s112 = sphi 0, %s110
    %s113 = sphi 0, %s112
    %s127 = sphi 0, %s113
    %s131 = sphi 0, %s131
    %s133 = sphi 0, %s131
    %s134 = sphi 0, %s133
    %s148 = sphi 0, %s134
    %s152 = sphi 0, %s152
    %s154 = sphi 0, %s152
    %s155 = sphi 0, %s154
    %s169 = sphi 0, %s155
    %s175 = sphi 0, %s177
    %s178 = sphi 0, %s175
    %s179 = sphi 0, %s178
    %s195 = sphi 0, %s179
  $region4: #{_lambda_.6} parent=0 // loop_header_branch
    %16 = sbr.rel (%p14) target = $region8
  $region5: #{_lambda_.6} parent=0 // loop_body
    %s18 = ssub.s32 %s13, 1
    %s19 = ssub.s32 %s13, 2
    %s20 = sadd.s32 %s13, 1
    %s21 = ssub.s32 %s13, %s20
    %p22 = scmp.eq.s32.totalorder %s21, 0
    %s24 = sadd.s32 %s23, 1
    %s25 = scalar_select %p22, %s23, %s24
    %p28 = pneg %p22
    %p29 = scmp.eq.s32.totalorder %s13, 1
    %p30 = por %p28, %p29
    %p31 = scmp.ne.s32.totalorder %s23, %s26
    %p32 = scmp.eq.s32.totalorder %s13, 0
    %p33 = por %p31, %p32
    %p34 = scmp.ne.s32.totalorder %s23, %s26
    %p35 = scmp.eq.s32.totalorder %s18, 1
    %p36 = por %p34, %p35
    %p37 = scmp.ne.s32.totalorder %s26, %s27
    %p38 = scmp.eq.s32.totalorder %s18, 0
    %p39 = por %p37, %p38
    %p40 = scmp.ne.s32.totalorder %s26, %s27
    %p41 = scmp.eq.s32.totalorder %s19, 1
    %p42 = por %p40, %p41
    %p44 = scmp.ne.s32.totalorder %s27, %s43
    %p45 = scmp.eq.s32.totalorder %s19, 0
    %p46 = por %p44, %p45
    %s48 = sadd.s32 %s47, 1
    %p51 = scmp.eq.s32.totalorder %s13, 1
    %p52 = scmp.ne.s32.totalorder %s47, %s49
    %p53 = scmp.eq.s32.totalorder %s13, 0
    %p54 = por %p52, %p53
    %p55 = scmp.ne.s32.totalorder %s47, %s49
    %p56 = scmp.eq.s32.totalorder %s18, 1
    %p57 = por %p55, %p56
    %p58 = scmp.ne.s32.totalorder %s49, %s50
    %p59 = scmp.eq.s32.totalorder %s18, 0
    %p60 = por %p58, %p59
    %p61 = scmp.ne.s32.totalorder %s49, %s50
    %p62 = scmp.eq.s32.totalorder %s19, 1
    %p63 = por %p61, %p62
    %p65 = scmp.ne.s32.totalorder %s50, %s64
    %p66 = scmp.eq.s32.totalorder %s19, 0
    %p67 = por %p65, %p66
    %s69 = sadd.s32 %s68, 1
    %p72 = scmp.eq.s32.totalorder %s13, 1
    %p73 = scmp.ne.s32.totalorder %s68, %s70
    %p74 = scmp.eq.s32.totalorder %s13, 0
    %p75 = por %p73, %p74
    %p76 = scmp.ne.s32.totalorder %s68, %s70
    %p77 = scmp.eq.s32.totalorder %s18, 1
    %p78 = por %p76, %p77
    %p79 = scmp.ne.s32.totalorder %s70, %s71
    %p80 = scmp.eq.s32.totalorder %s18, 0
    %p81 = por %p79, %p80
    %p82 = scmp.ne.s32.totalorder %s70, %s71
    %p83 = scmp.eq.s32.totalorder %s19, 1
    %p84 = por %p82, %p83
    %p86 = scmp.ne.s32.totalorder %s71, %s85
    %p87 = scmp.eq.s32.totalorder %s19, 0
    %p88 = por %p86, %p87
    %s90 = sadd.s32 %s89, 1
    %p93 = scmp.eq.s32.totalorder %s13, 1
    %p94 = scmp.ne.s32.totalorder %s89, %s91
    %p95 = scmp.eq.s32.totalorder %s13, 0
    %p96 = por %p94, %p95
    %p97 = scmp.ne.s32.totalorder %s89, %s91
    %p98 = scmp.eq.s32.totalorder %s18, 1
    %p99 = por %p97, %p98
    %p100 = scmp.ne.s32.totalorder %s91, %s92
    %p101 = scmp.eq.s32.totalorder %s18, 0
    %p102 = por %p100, %p101
    %p103 = scmp.ne.s32.totalorder %s91, %s92
    %p104 = scmp.eq.s32.totalorder %s19, 1
    %p105 = por %p103, %p104
    %p107 = scmp.ne.s32.totalorder %s92, %s106
    %p108 = scmp.eq.s32.totalorder %s19, 0
    %p109 = por %p107, %p108
    %s111 = sadd.s32 %s110, 1
    %p114 = scmp.eq.s32.totalorder %s13, 1
    %p115 = scmp.ne.s32.totalorder %s110, %s112
    %p116 = scmp.eq.s32.totalorder %s13, 0
    %p117 = por %p115, %p116
    %p118 = scmp.ne.s32.totalorder %s110, %s112
    %p119 = scmp.eq.s32.totalorder %s18, 1
    %p120 = por %p118, %p119
    %p121 = scmp.ne.s32.totalorder %s112, %s113
    %p122 = scmp.eq.s32.totalorder %s18, 0
    %p123 = por %p121, %p122
    %p124 = scmp.ne.s32.totalorder %s112, %s113
    %p125 = scmp.eq.s32.totalorder %s19, 1
    %p126 = por %p124, %p125
    %p128 = scmp.ne.s32.totalorder %s113, %s127
    %p129 = scmp.eq.s32.totalorder %s19, 0
    %p130 = por %p128, %p129
    %s132 = sadd.s32 %s131, 1
    %p135 = scmp.eq.s32.totalorder %s13, 1
    %p136 = scmp.ne.s32.totalorder %s131, %s133
    %p137 = scmp.eq.s32.totalorder %s13, 0
    %p138 = por %p136, %p137
    %p139 = scmp.ne.s32.totalorder %s131, %s133
    %p140 = scmp.eq.s32.totalorder %s18, 1
    %p141 = por %p139, %p140
    %p142 = scmp.ne.s32.totalorder %s133, %s134
    %p143 = scmp.eq.s32.totalorder %s18, 0
    %p144 = por %p142, %p143
    %p145 = scmp.ne.s32.totalorder %s133, %s134
    %p146 = scmp.eq.s32.totalorder %s19, 1
    %p147 = por %p145, %p146
    %p149 = scmp.ne.s32.totalorder %s134, %s148
    %p150 = scmp.eq.s32.totalorder %s19, 0
    %p151 = por %p149, %p150
    %s153 = sadd.s32 %s152, 1
    %p156 = scmp.eq.s32.totalorder %s13, 1
    %p157 = scmp.ne.s32.totalorder %s152, %s154
    %p158 = scmp.eq.s32.totalorder %s13, 0
    %p159 = por %p157, %p158
    %p160 = scmp.ne.s32.totalorder %s152, %s154
    %p161 = scmp.eq.s32.totalorder %s18, 1
    %p162 = por %p160, %p161
    %p163 = scmp.ne.s32.totalorder %s154, %s155
    %p164 = scmp.eq.s32.totalorder %s18, 0
    %p165 = por %p163, %p164
    %p166 = scmp.ne.s32.totalorder %s154, %s155
    %p167 = scmp.eq.s32.totalorder %s19, 1
    %p168 = por %p166, %p167
    %p170 = scmp.ne.s32.totalorder %s155, %s169
    %p171 = scmp.eq.s32.totalorder %s19, 0
    %p172 = por %p170, %p171
    %s173 = ssub.s32 %s13, %s20
    %p174 = scmp.eq.s32.totalorder %s173, 0
    %s176 = sadd.s32 %s175, 1
    %s177 = scalar_select %p174, %s175, %s176
    %p180 = pneg %p174
    %p181 = scmp.eq.s32.totalorder %s13, 1
    %p182 = por %p180, %p181
    %p183 = scmp.ne.s32.totalorder %s175, %s178
    %p184 = scmp.eq.s32.totalorder %s13, 0
    %p185 = por %p183, %p184
    %p186 = scmp.ne.s32.totalorder %s175, %s178
    %p187 = scmp.eq.s32.totalorder %s18, 1
    %p188 = por %p186, %p187
    %p189 = scmp.ne.s32.totalorder %s178, %s179
    %p190 = scmp.eq.s32.totalorder %s18, 0
    %p191 = por %p189, %p190
    %p192 = scmp.ne.s32.totalorder %s178, %s179
    %p193 = scmp.eq.s32.totalorder %s19, 1
    %p194 = por %p192, %p193
    %p196 = scmp.ne.s32.totalorder %s179, %s195
    %p197 = scmp.eq.s32.totalorder %s19, 0
    %p198 = por %p196, %p197
    %p199 = scmp.le.s32.totalorder 1, %s13
    %p200 = scmp.lt.s32.totalorder %s13, 3
    %p201 = pnand %p199, %p200
    %p202 = pneg %p201
    // Predicated region
    $region9: #{_lambda_.6} parent=5 // pred_check
      _
    $region10: #{_lambda_.6} parent=5 // pred_check_branch
      %204 = sbr.rel (%p201) target = $region12
    $region11: #{_lambda_.6} parent=5 // pred_region
      %s205 = ssub.s32 %s13, 1
      // Predicated region
      $region13: #{_lambda_.6} parent=11 // pred_check
        %p206 = pneg %p60
      $region14: #{_lambda_.6} parent=11 // pred_check_branch
        %208 = sbr.rel (%p206) target = $region16
      $region15: #{_lambda_.6} parent=11 // pred_region
        _
      $region16: #{_lambda_.6} parent=11 // pred_fallthru
        _
      // Predicated region
      $region17: #{_lambda_.6} parent=11 // pred_check
        %p209 = pneg %p81
      $region18: #{_lambda_.6} parent=11 // pred_check_branch
        %211 = sbr.rel (%p209) target = $region20
      $region19: #{_lambda_.6} parent=11 // pred_region
        _
      $region20: #{_lambda_.6} parent=11 // pred_fallthru
        _
      // Predicated region
      $region21: #{_lambda_.6} parent=11 // pred_check
        %p212 = pneg %p102
      $region22: #{_lambda_.6} parent=11 // pred_check_branch
        %214 = sbr.rel (%p212) target = $region24
      $region23: #{_lambda_.6} parent=11 // pred_region
        _
      $region24: #{_lambda_.6} parent=11 // pred_fallthru
        _
      // Predicated region
      $region25: #{_lambda_.6} parent=11 // pred_check
        %p215 = pneg %p123
      $region26: #{_lambda_.6} parent=11 // pred_check_branch
        %217 = sbr.rel (%p215) target = $region28
      $region27: #{_lambda_.6} parent=11 // pred_region
        _
      $region28: #{_lambda_.6} parent=11 // pred_fallthru
        _
      // Predicated region
      $region29: #{_lambda_.6} parent=11 // pred_check
        %p218 = pneg %p144
      $region30: #{_lambda_.6} parent=11 // pred_check_branch
        %220 = sbr.rel (%p218) target = $region32
      $region31: #{_lambda_.6} parent=11 // pred_region
        _
      $region32: #{_lambda_.6} parent=11 // pred_fallthru
        _
      // Predicated region
      $region33: #{_lambda_.6} parent=11 // pred_check
        %p221 = pneg %p165
      $region34: #{_lambda_.6} parent=11 // pred_check_branch
        %223 = sbr.rel (%p221) target = $region36
      $region35: #{_lambda_.6} parent=11 // pred_region
        _
      $region36: #{_lambda_.6} parent=11 // pred_fallthru
        _
    $region12: #{_lambda_.6} parent=5 // pred_fallthru
      _
    %p224 = scmp.lt.s32.totalorder %s13, 2
    // Predicated region
    $region37: #{_lambda_.6} parent=5 // pred_check
      %p225 = pneg %p224
    $region38: #{_lambda_.6} parent=5 // pred_check_branch
      %227 = sbr.rel (%p225) target = $region40
    $region39: #{_lambda_.6} parent=5 // pred_region
      // Predicated region
      $region41: #{_lambda_.6} parent=39 // pred_check
        %p228 = pneg %p33
      $region42: #{_lambda_.6} parent=39 // pred_check_branch
        %230 = sbr.rel (%p228) target = $region44
      $region43: #{_lambda_.6} parent=39 // pred_region
        %s231 = smul.u32 4, %s13
        %p232 = scmp.lt.s32.totalorder %s231, 7
        %s233 = scalar_select %p232, %s231, 7
        %s234 = smul.addr %s233, 2
        %s235 = smul.addr %s234, 8
        %s236 = scalar_lea.vmem %s0, %s235
        %s237 = smul.u32 4, %s13
      $region44: #{_lambda_.6} parent=39 // pred_fallthru
        _
    $region40: #{_lambda_.6} parent=5 // pred_fallthru
      _
    %p238 = scmp.le.s32.totalorder 1, %s13
    %p239 = scmp.lt.s32.totalorder %s13, 3
    %p240 = pnand %p238, %p239
    %p241 = pneg %p240
    // Predicated region
    $region45: #{_lambda_.6} parent=5 // pred_check
      _
    $region46: #{_lambda_.6} parent=5 // pred_check_branch
      %243 = sbr.rel (%p240) target = $region48
    $region47: #{_lambda_.6} parent=5 // pred_region
      %s244 = ssub.s32 %s13, 1
      %s245 = smul.u32 4, %s18
      %p246 = scmp.lt.s32.totalorder %s245, 7
      %s247 = scalar_select %p246, %s245, 7
      %s248 = smul.addr %s247, 2
      %s249 = smul.addr %s248, 8
      %s250 = scalar_lea.vmem %s0, %s249
      %p251 = pneg %p39
      %p252 = pneg %p36
      %p253 = pneg %p60
      %p254 = pneg %p57
      %p255 = pneg %p81
      %p256 = pneg %p78
      %p257 = pneg %p102
      %p258 = pneg %p99
      %p259 = pneg %p123
      %p260 = pneg %p120
      %p261 = pneg %p144
      %p262 = pneg %p141
      %p263 = pneg %p165
      %p264 = pneg %p162
      %p265 = pneg %p191
      %p266 = pneg %p188
      %s267 = smul.u32 4, %s18
      %p268 = scmp.lt.s32.totalorder %s267, 7
      %s269 = scalar_select %p268, %s267, 7
      %s270 = smul.addr %s269, 2
      %s271 = smul.addr %s270, 8
      %s272 = scalar_lea.vmem %s7, %s271
      %s273 = smul.u32 4, %s18
      %p274 = scmp.lt.s32.totalorder %s273, 7
      %s275 = scalar_select %p274, %s273, 7
      %s276 = smul.addr %s275, 2
      %s277 = smul.addr %s276, 8
      %s278 = scalar_lea.vmem %s0, %s277
      %s279 = smul.u32 4, %s18
      %s280 = smul.u32 4, %s18
      %p281 = scmp.lt.s32.totalorder %s280, 7
      %s282 = scalar_select %p281, %s280, 7
      %s283 = smul.addr %s282, 2
      %s284 = smul.addr %s283, 8
      %s285 = scalar_lea.vmem %s7, %s284
      %s286 = smul.u32 4, %s18
      %v288 = vld [vmem:[%s278] sm:$0xff]
      %v289 = vld [vmem:[%s278 + $0x8] sm:$0xff]
      %v290 = vld [vmem:[%s278 + $0x10] sm:$0xff]
      %v291 = vld [vmem:[%s278 + $0x18] sm:$0xff]
      %v292 = vld [vmem:[%s278 + $0x20] sm:$0xff]
      %v293 = vld [vmem:[%s278 + $0x28] sm:$0xff]
      %v294 = vld [vmem:[%s278 + $0x30] sm:$0xff]
      %v295 = vld [vmem:[%s278 + $0x38] sm:$0xff]
      %vm296 = vcmask 130048
      %v297 = vsel %vm296, %v288, 0.0
      %298 = vadd.xlane.f32.xlu0 %v297
      %v299 = vpop.xlane.xlu0 %298
      %v300 = vsel %vm296, %v289, 0.0
      %301 = vadd.xlane.f32.xlu0 %v300
      %v302 = vpop.xlane.xlu0 %301
      %v303 = vsel %vm296, %v290, 0.0
      %304 = vadd.xlane.f32.xlu0 %v303
      %v305 = vpop.xlane.xlu0 %304
      %v306 = vsel %vm296, %v291, 0.0
      %307 = vadd.xlane.f32.xlu0 %v306
      %v308 = vpop.xlane.xlu0 %307
      %v309 = vsel %vm296, %v292, 0.0
      %310 = vadd.xlane.f32.xlu0 %v309
      %v311 = vpop.xlane.xlu0 %310
      %v312 = vsel %vm296, %v293, 0.0
      %313 = vadd.xlane.f32.xlu0 %v312
      %v314 = vpop.xlane.xlu0 %313
      %v315 = vsel %vm296, %v294, 0.0
      %316 = vadd.xlane.f32.xlu0 %v315
      %v317 = vpop.xlane.xlu0 %316
      %v318 = vsel %vm296, %v295, 0.0
      %319 = vadd.xlane.f32.xlu0 %v318
      %v320 = vpop.xlane.xlu0 %319
      %v321 = vrcp.pop 16.0
      %v322 = vmul.f32 %v299, %v321
      %v323 = vmul.f32 %v302, %v321
      %v324 = vmul.f32 %v305, %v321
      %v325 = vmul.f32 %v308, %v321
      %v326 = vmul.f32 %v311, %v321
      %v327 = vmul.f32 %v314, %v321
      %v328 = vmul.f32 %v317, %v321
      %v329 = vmul.f32 %v320, %v321
      %v330 = vsub.f32 %v288, %v322
      %v331 = vsub.f32 %v289, %v323
      %v332 = vsub.f32 %v290, %v324
      %v333 = vsub.f32 %v291, %v325
      %v334 = vsub.f32 %v292, %v326
      %v335 = vsub.f32 %v293, %v327
      %v336 = vsub.f32 %v294, %v328
      %v337 = vsub.f32 %v295, %v329
      %v338 = vmul.f32 %v330, %v330
      %v339 = vmul.f32 %v331, %v331
      %v340 = vmul.f32 %v332, %v332
      %v341 = vmul.f32 %v333, %v333
      %v342 = vmul.f32 %v334, %v334
      %v343 = vmul.f32 %v335, %v335
      %v344 = vmul.f32 %v336, %v336
      %v345 = vmul.f32 %v337, %v337
      %v346 = vsel %vm296, %v338, 0.0
      %347 = vadd.xlane.f32.xlu0 %v346
      %v348 = vpop.xlane.xlu0 %347
      %v349 = vsel %vm296, %v339, 0.0
      %350 = vadd.xlane.f32.xlu0 %v349
      %v351 = vpop.xlane.xlu0 %350
      %v352 = vsel %vm296, %v340, 0.0
      %353 = vadd.xlane.f32.xlu0 %v352
      %v354 = vpop.xlane.xlu0 %353
      %v355 = vsel %vm296, %v341, 0.0
      %356 = vadd.xlane.f32.xlu0 %v355
      %v357 = vpop.xlane.xlu0 %356
      %v358 = vsel %vm296, %v342, 0.0
      %359 = vadd.xlane.f32.xlu0 %v358
      %v360 = vpop.xlane.xlu0 %359
      %v361 = vsel %vm296, %v343, 0.0
      %362 = vadd.xlane.f32.xlu0 %v361
      %v363 = vpop.xlane.xlu0 %362
      %v364 = vsel %vm296, %v344, 0.0
      %365 = vadd.xlane.f32.xlu0 %v364
      %v366 = vpop.xlane.xlu0 %365
      %v367 = vsel %vm296, %v345, 0.0
      %368 = vadd.xlane.f32.xlu0 %v367
      %v369 = vpop.xlane.xlu0 %368
      %v370 = vmul.f32 %v348, %v321
      %v371 = vmul.f32 %v351, %v321
      %v372 = vmul.f32 %v354, %v321
      %v373 = vmul.f32 %v357, %v321
      %v374 = vmul.f32 %v360, %v321
      %v375 = vmul.f32 %v363, %v321
      %v376 = vmul.f32 %v366, %v321
      %v377 = vmul.f32 %v369, %v321
      %v378 = vadd.f32 %v370, 1e-05
      %v379 = vadd.f32 %v371, 1e-05
      %v380 = vadd.f32 %v372, 1e-05
      %v381 = vadd.f32 %v373, 1e-05
      %v382 = vadd.f32 %v374, 1e-05
      %v383 = vadd.f32 %v375, 1e-05
      %v384 = vadd.f32 %v376, 1e-05
      %v385 = vadd.f32 %v377, 1e-05
      %v386 = vrsqrt.pop %v378
      %v387 = vrsqrt.pop %v379
      %v388 = vrsqrt.pop %v380
      %v389 = vrsqrt.pop %v381
      %v390 = vrsqrt.pop %v382
      %v391 = vrsqrt.pop %v383
      %v392 = vrsqrt.pop %v384
      %v393 = vrsqrt.pop %v385
      %v394 = vmul.f32 %v330, %v386
      %v395 = vmul.f32 %v331, %v387
      %v396 = vmul.f32 %v332, %v388
      %v397 = vmul.f32 %v333, %v389
      %v398 = vmul.f32 %v334, %v390
      %v399 = vmul.f32 %v335, %v391
      %v400 = vmul.f32 %v336, %v392
      %v401 = vmul.f32 %v337, %v393
      %v402 = vld [vmem:[%s1] sm:$0x1]
      %v404 = vlaneseq
      %v405 = vshrl.u32 %v404, 7
      %v406 = vsub.s32 0, %v405
      %v407 = vrot.slane %v402, %v406
      %v409 = vmul.f32 %v394, %v407
      %v410 = vmul.f32 %v395, %v407
      %v411 = vmul.f32 %v396, %v407
      %v412 = vmul.f32 %v397, %v407
      %v413 = vmul.f32 %v398, %v407
      %v414 = vmul.f32 %v399, %v407
      %v415 = vmul.f32 %v400, %v407
      %v416 = vmul.f32 %v401, %v407
      %v417 = vld [vmem:[%s2] sm:$0x1]
      %v419 = vlaneseq
      %v420 = vshrl.u32 %v419, 7
      %v421 = vsub.s32 0, %v420
      %v422 = vrot.slane %v417, %v421
      %v424 = vadd.f32 %v409, %v422
      %v425 = vadd.f32 %v410, %v422
      %v426 = vadd.f32 %v411, %v422
      %v427 = vadd.f32 %v412, %v422
      %v428 = vadd.f32 %v413, %v422
      %v429 = vadd.f32 %v414, %v422
      %v430 = vadd.f32 %v415, %v422
      %v431 = vadd.f32 %v416, %v422
      %v432 = vpack.c.bf16 %v425, %v424
      %v433 = vpack.c.bf16 %v427, %v426
      %v434 = vpack.c.bf16 %v429, %v428
      %v435 = vpack.c.bf16 %v431, %v430
      %v436 = vld [vmem:[%s3] sm:$0xf]
      %v437 = vld [vmem:[%s3 + $0x4] sm:$0xf]
      %v440 = vunpack.c.l.b16 %v436
      %v441 = vunpack.c.l.b16 %v437
      %v442 = vpack.c.b16 %v441, %v440
      %v445 = vsel %vm296, %v432, 0
      %v448 = vsel %vm296, %v433, 0
      %v451 = vsel %vm296, %v434, 0
      %v454 = vsel %vm296, %v435, 0
      %456 = vmatprep.subr.bf16.mxu0 0
      %457 = vmatpush1.bf16.msra.mxu0 %v442
      %458 = vmatprep.subr.bf16.mxu0 0
      %459 = vmatpush1.bf16.msra.mxu0 0
      %460 = vmatprep.subr.bf16.mxu0 0
      %461 = vmatpush1.bf16.msra.mxu0 0
      %462 = vmatprep.subr.bf16.mxu0 0
      %463 = vmatpush1.bf16.msra.mxu0 0
      %464 = vmatprep.subr.bf16.mxu0 0
      %465 = vmatpush1.bf16.msra.mxu0 0
      %466 = vmatprep.subr.bf16.mxu0 0
      %467 = vmatpush1.bf16.msra.mxu0 0
      %468 = vmatprep.subr.bf16.mxu0 0
      %469 = vmatpush1.bf16.msra.mxu0 0
      %470 = vmatprep.subr.bf16.mxu0 0
      %471 = vmatpush1.bf16.msra.mxu0 0
      %472 = vmatprep.subr.bf16.mxu0 0
      %473 = vmatpush1.bf16.msra.mxu0 0
      %474 = vmatprep.subr.bf16.mxu0 0
      %475 = vmatpush1.bf16.msra.mxu0 0
      %476 = vmatprep.subr.bf16.mxu0 0
      %477 = vmatpush1.bf16.msra.mxu0 0
      %478 = vmatprep.subr.bf16.mxu0 0
      %479 = vmatpush1.bf16.msra.mxu0 0
      %480 = vmatprep.subr.bf16.mxu0 0
      %481 = vmatpush1.bf16.msra.mxu0 0
      %482 = vmatprep.subr.bf16.mxu0 0
      %483 = vmatpush1.bf16.msra.mxu0 0
      %484 = vmatprep.subr.bf16.mxu0 0
      %485 = vmatpush1.bf16.msra.mxu0 0
      %486 = vmatprep.subr.bf16.mxu0 0
      %487 = vmatpush1.bf16.msra.mxu0 0
      %488 = vmatprep.mubr.bf16.mxu0 0
      %489 = vmatmul.mubr.bf16.gmra.mrb[0].mxu0 %v445
      %v490 = vpop.f32.mrb[0].mxu0
      %v491 = vadd.f32 0.0, %v490
      %v492 = vpop.f32.mrb[0].mxu0
      %v493 = vpop.f32.mrb[0].mxu0
      %v494 = vadd.f32 0.0, %v493
      %v495 = vpop.f32.mrb[0].mxu0
      %496 = vmatprep.mubr.bf16.mxu0 0
      %497 = vmatmul.mubr.bf16.gmra.mrb[0].mxu0 %v448
      %v498 = vpop.f32.mrb[0].mxu0
      %v499 = vadd.f32 0.0, %v498
      %v500 = vpop.f32.mrb[0].mxu0
      %v501 = vpop.f32.mrb[0].mxu0
      %v502 = vadd.f32 0.0, %v501
      %v503 = vpop.f32.mrb[0].mxu0
      %504 = vmatprep.mubr.bf16.mxu0 0
      %505 = vmatmul.mubr.bf16.gmra.mrb[0].mxu0 %v451
      %v506 = vpop.f32.mrb[0].mxu0
      %v507 = vadd.f32 0.0, %v506
      %v508 = vpop.f32.mrb[0].mxu0
      %v509 = vpop.f32.mrb[0].mxu0
      %v510 = vadd.f32 0.0, %v509
      %v511 = vpop.f32.mrb[0].mxu0
      %512 = vmatprep.mubr.bf16.mxu0 0
      %513 = vmatmul.mubr.bf16.gmra.mrb[0].mxu0 %v454
      %v514 = vpop.f32.mrb[0].mxu0
      %v515 = vadd.f32 0.0, %v514
      %v516 = vpop.f32.mrb[0].mxu0
      %v517 = vpop.f32.mrb[0].mxu0
      %v518 = vadd.f32 0.0, %v517
      %v519 = vpop.f32.mrb[0].mxu0
      %520 = vdwg.mxu0
      %v521 = vpack.c.bf16 %v494, %v491
      %v522 = vpack.c.bf16 %v502, %v499
      %v523 = vpack.c.bf16 %v510, %v507
      %v524 = vpack.c.bf16 %v518, %v515
      %s525 = scalar_lea.vmem %s3, 8
      %v526 = vld [vmem:[%s525] sm:$0xf]
      %v527 = vld [vmem:[%s525 + $0x4] sm:$0xf]
      %v530 = vunpack.c.l.b16 %v526
      %v531 = vunpack.c.l.b16 %v527
      %v532 = vpack.c.b16 %v531, %v530
      %534 = vmatprep.subr.bf16.mxu0 0
      %535 = vmatpush1.bf16.msra.mxu0 %v532
      %536 = vmatprep.subr.bf16.mxu0 0
      %537 = vmatpush1.bf16.msra.mxu0 0
      %538 = vmatprep.subr.bf16.mxu0 0
      %539 = vmatpush1.bf16.msra.mxu0 0
      %540 = vmatprep.subr.bf16.mxu0 0
      %541 = vmatpush1.bf16.msra.mxu0 0
      %542 = vmatprep.subr.bf16.mxu0 0
      %543 = vmatpush1.bf16.msra.mxu0 0
      %544 = vmatprep.subr.bf16.mxu0 0
      %545 = vmatpush1.bf16.msra.mxu0 0
      %546 = vmatprep.subr.bf16.mxu0 0
      %547 = vmatpush1.bf16.msra.mxu0 0
      %548 = vmatprep.subr.bf16.mxu0 0
      %549 = vmatpush1.bf16.msra.mxu0 0
      %550 = vmatprep.subr.bf16.mxu0 0
      %551 = vmatpush1.bf16.msra.mxu0 0
      %552 = vmatprep.subr.bf16.mxu0 0
      %553 = vmatpush1.bf16.msra.mxu0 0
      %554 = vmatprep.subr.bf16.mxu0 0
      %555 = vmatpush1.bf16.msra.mxu0 0
      %556 = vmatprep.subr.bf16.mxu0 0
      %557 = vmatpush1.bf16.msra.mxu0 0
      %558 = vmatprep.subr.bf16.mxu0 0
      %559 = vmatpush1.bf16.msra.mxu0 0
      %560 = vmatprep.subr.bf16.mxu0 0
      %561 = vmatpush1.bf16.msra.mxu0 0
      %562 = vmatprep.subr.bf16.mxu0 0
      %563 = vmatpush1.bf16.msra.mxu0 0
      %564 = vmatprep.subr.bf16.mxu0 0
      %565 = vmatpush1.bf16.msra.mxu0 0
      %566 = vmatprep.mubr.bf16.mxu0 0
      %567 = vmatmul.mubr.bf16.gmra.mrb[0].mxu0 %v445
      %v568 = vpop.f32.mrb[0].mxu0
      %v569 = vadd.f32 0.0, %v568
      %v570 = vpop.f32.mrb[0].mxu0
      %v571 = vpop.f32.mrb[0].mxu0
      %v572 = vadd.f32 0.0, %v571
      %v573 = vpop.f32.mrb[0].mxu0
      %574 = vmatprep.mubr.bf16.mxu0 0
      %575 = vmatmul.mubr.bf16.gmra.mrb[0].mxu0 %v448
      %v576 = vpop.f32.mrb[0].mxu0
      %v577 = vadd.f32 0.0, %v576
      %v578 = vpop.f32.mrb[0].mxu0
      %v579 = vpop.f32.mrb[0].mxu0
      %v580 = vadd.f32 0.0, %v579
      %v581 = vpop.f32.mrb[0].mxu0
      %582 = vmatprep.mubr.bf16.mxu0 0
      %583 = vmatmul.mubr.bf16.gmra.mrb[0].mxu0 %v451
      %v584 = vpop.f32.mrb[0].mxu0
      %v585 = vadd.f32 0.0, %v584
      %v586 = vpop.f32.mrb[0].mxu0
      %v587 = vpop.f32.mrb[0].mxu0
      %v588 = vadd.f32 0.0, %v587
      %v589 = vpop.f32.mrb[0].mxu0
      %590 = vmatprep.mubr.bf16.mxu0 0
      %591 = vmatmul.mubr.bf16.gmra.mrb[0].mxu0 %v454
      %v592 = vpop.f32.mrb[0].mxu0
      %v593 = vadd.f32 0.0, %v592
      %v594 = vpop.f32.mrb[0].mxu0
      %v595 = vpop.f32.mrb[0].mxu0
      %v596 = vadd.f32 0.0, %v595
      %v597 = vpop.f32.mrb[0].mxu0
      %598 = vdwg.mxu0
      %v599 = vpack.c.bf16 %v572, %v569
      %v600 = vpack.c.bf16 %v580, %v577
      %v601 = vpack.c.bf16 %v588, %v585
      %v602 = vpack.c.bf16 %v596, %v593
      %s603 = scalar_lea.vmem %s3, 16
      %v604 = vld [vmem:[%s603] sm:$0xf]
      %v605 = vld [vmem:[%s603 + $0x4] sm:$0xf]
      %v608 = vunpack.c.l.b16 %v604
      %v609 = vunpack.c.l.b16 %v605
      %v610 = vpack.c.b16 %v609, %v608
      %612 = vmatprep.subr.bf16.mxu0 0
      %613 = vmatpush1.bf16.msra.mxu0 %v610
      %614 = vmatprep.subr.bf16.mxu0 0
      %615 = vmatpush1.bf16.msra.mxu0 0
      %616 = vmatprep.subr.bf16.mxu0 0
      %617 = vmatpush1.bf16.msra.mxu0 0
      %618 = vmatprep.subr.bf16.mxu0 0
      %619 = vmatpush1.bf16.msra.mxu0 0
      %620 = vmatprep.subr.bf16.mxu0 0
      %621 = vmatpush1.bf16.msra.mxu0 0
      %622 = vmatprep.subr.bf16.mxu0 0
      %623 = vmatpush1.bf16.msra.mxu0 0
      %624 = vmatprep.subr.bf16.mxu0 0
      %625 = vmatpush1.bf16.msra.mxu0 0
      %626 = vmatprep.subr.bf16.mxu0 0
      %627 = vmatpush1.bf16.msra.mxu0 0
      %628 = vmatprep.subr.bf16.mxu0 0
      %629 = vmatpush1.bf16.msra.mxu0 0
      %630 = vmatprep.subr.bf16.mxu0 0
      %631 = vmatpush1.bf16.msra.mxu0 0
      %632 = vmatprep.subr.bf16.mxu0 0
      %633 = vmatpush1.bf16.msra.mxu0 0
      %634 = vmatprep.subr.bf16.mxu0 0
      %635 = vmatpush1.bf16.msra.mxu0 0
      %636 = vmatprep.subr.bf16.mxu0 0
      %637 = vmatpush1.bf16.msra.mxu0 0
      %638 = vmatprep.subr.bf16.mxu0 0
      %639 = vmatpush1.bf16.msra.mxu0 0
      %640 = vmatprep.subr.bf16.mxu0 0
      %641 = vmatpush1.bf16.msra.mxu0 0
      %642 = vmatprep.subr.bf16.mxu0 0
      %643 = vmatpush1.bf16.msra.mxu0 0
      %644 = vmatprep.mubr.bf16.mxu0 0
      %645 = vmatmul.mubr.bf16.gmra.mrb[0].mxu0 %v445
      %v646 = vpop.f32.mrb[0].mxu0
      %v647 = vadd.f32 0.0, %v646
      %v648 = vpop.f32.mrb[0].mxu0
      %v649 = vpop.f32.mrb[0].mxu0
      %v650 = vadd.f32 0.0, %v649
      %v651 = vpop.f32.mrb[0].mxu0
      %652 = vmatprep.mubr.bf16.mxu0 0
      %653 = vmatmul.mubr.bf16.gmra.mrb[0].mxu0 %v448
      %v654 = vpop.f32.mrb[0].mxu0
      %v655 = vadd.f32 0.0, %v654
      %v656 = vpop.f32.mrb[0].mxu0
      %v657 = vpop.f32.mrb[0].mxu0
      %v658 = vadd.f32 0.0, %v657
      %v659 = vpop.f32.mrb[0].mxu0
      %660 = vmatprep.mubr.bf16.mxu0 0
      %661 = vmatmul.mubr.bf16.gmra.mrb[0].mxu0 %v451
      %v662 = vpop.f32.mrb[0].mxu0
      %v663 = vadd.f32 0.0, %v662
      %v664 = vpop.f32.mrb[0].mxu0
      %v665 = vpop.f32.mrb[0].mxu0
      %v666 = vadd.f32 0.0, %v665
      %v667 = vpop.f32.mrb[0].mxu0
      %668 = vmatprep.mubr.bf16.mxu0 0
      %669 = vmatmul.mubr.bf16.gmra.mrb[0].mxu0 %v454
      %v670 = vpop.f32.mrb[0].mxu0
      %v671 = vadd.f32 0.0, %v670
      %v672 = vpop.f32.mrb[0].mxu0
      %v673 = vpop.f32.mrb[0].mxu0
      %v674 = vadd.f32 0.0, %v673
      %v675 = vpop.f32.mrb[0].mxu0
      %676 = vdwg.mxu0
      %v677 = vpack.c.bf16 %v650, %v647
      %v678 = vpack.c.bf16 %v658, %v655
      %v679 = vpack.c.bf16 %v666, %v663
      %v680 = vpack.c.bf16 %v674, %v671
      %s681 = scalar_lea.vmem %s3, 24
      %v682 = vld [vmem:[%s681] sm:$0xf]
      %v683 = vld [vmem:[%s681 + $0x4] sm:$0xf]
      %v686 = vunpack.c.l.b16 %v682
      %v687 = vunpack.c.l.b16 %v683
      %v688 = vpack.c.b16 %v687, %v686
      %690 = vmatprep.subr.bf16.mxu0 0
      %691 = vmatpush1.bf16.msra.mxu0 %v688
      %692 = vmatprep.subr.bf16.mxu0 0
      %693 = vmatpush1.bf16.msra.mxu0 0
      %694 = vmatprep.subr.bf16.mxu0 0
      %695 = vmatpush1.bf16.msra.mxu0 0
      %696 = vmatprep.subr.bf16.mxu0 0
      %697 = vmatpush1.bf16.msra.mxu0 0
      %698 = vmatprep.subr.bf16.mxu0 0
      %699 = vmatpush1.bf16.msra.mxu0 0
      %700 = vmatprep.subr.bf16.mxu0 0
      %701 = vmatpush1.bf16.msra.mxu0 0
      %702 = vmatprep.subr.bf16.mxu0 0
      %703 = vmatpush1.bf16.msra.mxu0 0
      %704 = vmatprep.subr.bf16.mxu0 0
      %705 = vmatpush1.bf16.msra.mxu0 0
      %706 = vmatprep.subr.bf16.mxu0 0
      %707 = vmatpush1.bf16.msra.mxu0 0
      %708 = vmatprep.subr.bf16.mxu0 0
      %709 = vmatpush1.bf16.msra.mxu0 0
      %710 = vmatprep.subr.bf16.mxu0 0
      %711 = vmatpush1.bf16.msra.mxu0 0
      %712 = vmatprep.subr.bf16.mxu0 0
      %713 = vmatpush1.bf16.msra.mxu0 0
      %714 = vmatprep.subr.bf16.mxu0 0
      %715 = vmatpush1.bf16.msra.mxu0 0
      %716 = vmatprep.subr.bf16.mxu0 0
      %717 = vmatpush1.bf16.msra.mxu0 0
      %718 = vmatprep.subr.bf16.mxu0 0
      %719 = vmatpush1.bf16.msra.mxu0 0
      %720 = vmatprep.subr.bf16.mxu0 0
      %721 = vmatpush1.bf16.msra.mxu0 0
      %722 = vmatprep.mubr.bf16.mxu0 0
      %723 = vmatmul.mubr.bf16.gmra.mrb[0].mxu0 %v445
      %v724 = vpop.f32.mrb[0].mxu0
      %v725 = vadd.f32 0.0, %v724
      %v726 = vpop.f32.mrb[0].mxu0
      %v727 = vpop.f32.mrb[0].mxu0
      %v728 = vadd.f32 0.0, %v727
      %v729 = vpop.f32.mrb[0].mxu0
      %730 = vmatprep.mubr.bf16.mxu0 0
      %731 = vmatmul.mubr.bf16.gmra.mrb[0].mxu0 %v448
      %v732 = vpop.f32.mrb[0].mxu0
      %v733 = vadd.f32 0.0, %v732
      %v734 = vpop.f32.mrb[0].mxu0
      %v735 = vpop.f32.mrb[0].mxu0
      %v736 = vadd.f32 0.0, %v735
      %v737 = vpop.f32.mrb[0].mxu0
      %738 = vmatprep.mubr.bf16.mxu0 0
      %739 = vmatmul.mubr.bf16.gmra.mrb[0].mxu0 %v451
      %v740 = vpop.f32.mrb[0].mxu0
      %v741 = vadd.f32 0.0, %v740
      %v742 = vpop.f32.mrb[0].mxu0
      %v743 = vpop.f32.mrb[0].mxu0
      %v744 = vadd.f32 0.0, %v743
      %v745 = vpop.f32.mrb[0].mxu0
      %746 = vmatprep.mubr.bf16.mxu0 0
      %747 = vmatmul.mubr.bf16.gmra.mrb[0].mxu0 %v454
      %v748 = vpop.f32.mrb[0].mxu0
      %v749 = vadd.f32 0.0, %v748
      %v750 = vpop.f32.mrb[0].mxu0
      %v751 = vpop.f32.mrb[0].mxu0
      %v752 = vadd.f32 0.0, %v751
      %v753 = vpop.f32.mrb[0].mxu0
      %754 = vdwg.mxu0
      %v755 = vpack.c.bf16 %v728, %v725
      %v756 = vpack.c.bf16 %v736, %v733
      %v757 = vpack.c.bf16 %v744, %v741
      %v758 = vpack.c.bf16 %v752, %v749
      %s759 = scalar_lea.vmem %s3, 32
      %v760 = vld [vmem:[%s759] sm:$0xf]
      %v761 = vld [vmem:[%s759 + $0x4] sm:$0xf]
      %v764 = vunpack.c.l.b16 %v760
      %v765 = vunpack.c.l.b16 %v761
      %v766 = vpack.c.b16 %v765, %v764
      %768 = vmatprep.subr.bf16.mxu0 0
      %769 = vmatpush1.bf16.msra.mxu0 %v766
      %770 = vmatprep.subr.bf16.mxu0 0
      %771 = vmatpush1.bf16.msra.mxu0 0
      %772 = vmatprep.subr.bf16.mxu0 0
      %773 = vmatpush1.bf16.msra.mxu0 0
      %774 = vmatprep.subr.bf16.mxu0 0
      %775 = vmatpush1.bf16.msra.mxu0 0
      %776 = vmatprep.subr.bf16.mxu0 0
      %777 = vmatpush1.bf16.msra.mxu0 0
      %778 = vmatprep.subr.bf16.mxu0 0
      %779 = vmatpush1.bf16.msra.mxu0 0
      %780 = vmatprep.subr.bf16.mxu0 0
      %781 = vmatpush1.bf16.msra.mxu0 0
      %782 = vmatprep.subr.bf16.mxu0 0
      %783 = vmatpush1.bf16.msra.mxu0 0
      %784 = vmatprep.subr.bf16.mxu0 0
      %785 = vmatpush1.bf16.msra.mxu0 0
      %786 = vmatprep.subr.bf16.mxu0 0
      %787 = vmatpush1.bf16.msra.mxu0 0
      %788 = vmatprep.subr.bf16.mxu0 0
      %789 = vmatpush1.bf16.msra.mxu0 0
      %790 = vmatprep.subr.bf16.mxu0 0
      %791 = vmatpush1.bf16.msra.mxu0 0
      %792 = vmatprep.subr.bf16.mxu0 0
      %793 = vmatpush1.bf16.msra.mxu0 0
      %794 = vmatprep.subr.bf16.mxu0 0
      %795 = vmatpush1.bf16.msra.mxu0 0
      %796 = vmatprep.subr.bf16.mxu0 0
      %797 = vmatpush1.bf16.msra.mxu0 0
      %798 = vmatprep.subr.bf16.mxu0 0
      %799 = vmatpush1.bf16.msra.mxu0 0
      %800 = vmatprep.mubr.bf16.mxu0 0
      %801 = vmatmul.mubr.bf16.gmra.mrb[0].mxu0 %v445
      %v802 = vpop.f32.mrb[0].mxu0
      %v803 = vadd.f32 0.0, %v802
      %v804 = vpop.f32.mrb[0].mxu0
      %v805 = vpop.f32.mrb[0].mxu0
      %v806 = vadd.f32 0.0, %v805
      %v807 = vpop.f32.mrb[0].mxu0
      %808 = vmatprep.mubr.bf16.mxu0 0
      %809 = vmatmul.mubr.bf16.gmra.mrb[0].mxu0 %v448
      %v810 = vpop.f32.mrb[0].mxu0
      %v811 = vadd.f32 0.0, %v810
      %v812 = vpop.f32.mrb[0].mxu0
      %v813 = vpop.f32.mrb[0].mxu0
      %v814 = vadd.f32 0.0, %v813
      %v815 = vpop.f32.mrb[0].mxu0
      %816 = vmatprep.mubr.bf16.mxu0 0
      %817 = vmatmul.mubr.bf16.gmra.mrb[0].mxu0 %v451
      %v818 = vpop.f32.mrb[0].mxu0
      %v819 = vadd.f32 0.0, %v818
      %v820 = vpop.f32.mrb[0].mxu0
      %v821 = vpop.f32.mrb[0].mxu0
      %v822 = vadd.f32 0.0, %v821
      %v823 = vpop.f32.mrb[0].mxu0
      %824 = vmatprep.mubr.bf16.mxu0 0
      %825 = vmatmul.mubr.bf16.gmra.mrb[0].mxu0 %v454
      %v826 = vpop.f32.mrb[0].mxu0
      %v827 = vadd.f32 0.0, %v826
      %v828 = vpop.f32.mrb[0].mxu0
      %v829 = vpop.f32.mrb[0].mxu0
      %v830 = vadd.f32 0.0, %v829
      %v831 = vpop.f32.mrb[0].mxu0
      %832 = vdwg.mxu0
      %v833 = vpack.c.bf16 %v806, %v803
      %v834 = vpack.c.bf16 %v814, %v811
      %v835 = vpack.c.bf16 %v822, %v819
      %v836 = vpack.c.bf16 %v830, %v827
      %s837 = scalar_lea.vmem %s3, 40
      %v838 = vld [vmem:[%s837] sm:$0xf]
      %v839 = vld [vmem:[%s837 + $0x4] sm:$0xf]
      %v842 = vunpack.c.l.b16 %v838
      %v843 = vunpack.c.l.b16 %v839
      %v844 = vpack.c.b16 %v843, %v842
      %846 = vmatprep.subr.bf16.mxu0 0
      %847 = vmatpush1.bf16.msra.mxu0 %v844
      %848 = vmatprep.subr.bf16.mxu0 0
      %849 = vmatpush1.bf16.msra.mxu0 0
      %850 = vmatprep.subr.bf16.mxu0 0
      %851 = vmatpush1.bf16.msra.mxu0 0
      %852 = vmatprep.subr.bf16.mxu0 0
      %853 = vmatpush1.bf16.msra.mxu0 0
      %854 = vmatprep.subr.bf16.mxu0 0
      %855 = vmatpush1.bf16.msra.mxu0 0
      %856 = vmatprep.subr.bf16.mxu0 0
      %857 = vmatpush1.bf16.msra.mxu0 0
      %858 = vmatprep.subr.bf16.mxu0 0
      %859 = vmatpush1.bf16.msra.mxu0 0
      %860 = vmatprep.subr.bf16.mxu0 0
      %861 = vmatpush1.bf16.msra.mxu0 0
      %862 = vmatprep.subr.bf16.mxu0 0
      %863 = vmatpush1.bf16.msra.mxu0 0
      %864 = vmatprep.subr.bf16.mxu0 0
      %865 = vmatpush1.bf16.msra.mxu0 0
      %866 = vmatprep.subr.bf16.mxu0 0
      %867 = vmatpush1.bf16.msra.mxu0 0
      %868 = vmatprep.subr.bf16.mxu0 0
      %869 = vmatpush1.bf16.msra.mxu0 0
      %870 = vmatprep.subr.bf16.mxu0 0
      %871 = vmatpush1.bf16.msra.mxu0 0
      %872 = vmatprep.subr.bf16.mxu0 0
      %873 = vmatpush1.bf16.msra.mxu0 0
      %874 = vmatprep.subr.bf16.mxu0 0
      %875 = vmatpush1.bf16.msra.mxu0 0
      %876 = vmatprep.subr.bf16.mxu0 0
      %877 = vmatpush1.bf16.msra.mxu0 0
      %878 = vmatprep.mubr.bf16.mxu0 0
      %879 = vmatmul.mubr.bf16.gmra.mrb[0].mxu0 %v445
      %v880 = vpop.f32.mrb[0].mxu0
      %v881 = vadd.f32 0.0, %v880
      %v882 = vpop.f32.mrb[0].mxu0
      %v883 = vpop.f32.mrb[0].mxu0
      %v884 = vadd.f32 0.0, %v883
      %v885 = vpop.f32.mrb[0].mxu0
      %886 = vmatprep.mubr.bf16.mxu0 0
      %887 = vmatmul.mubr.bf16.gmra.mrb[0].mxu0 %v448
      %v888 = vpop.f32.mrb[0].mxu0
      %v889 = vadd.f32 0.0, %v888
      %v890 = vpop.f32.mrb[0].mxu0
      %v891 = vpop.f32.mrb[0].mxu0
      %v892 = vadd.f32 0.0, %v891
      %v893 = vpop.f32.mrb[0].mxu0
      %894 = vmatprep.mubr.bf16.mxu0 0
      %895 = vmatmul.mubr.bf16.gmra.mrb[0].mxu0 %v451
      %v896 = vpop.f32.mrb[0].mxu0
      %v897 = vadd.f32 0.0, %v896
      %v898 = vpop.f32.mrb[0].mxu0
      %v899 = vpop.f32.mrb[0].mxu0
      %v900 = vadd.f32 0.0, %v899
      %v901 = vpop.f32.mrb[0].mxu0
      %902 = vmatprep.mubr.bf16.mxu0 0
      %903 = vmatmul.mubr.bf16.gmra.mrb[0].mxu0 %v454
      %v904 = vpop.f32.mrb[0].mxu0
      %v905 = vadd.f32 0.0, %v904
      %v906 = vpop.f32.mrb[0].mxu0
      %v907 = vpop.f32.mrb[0].mxu0
      %v908 = vadd.f32 0.0, %v907
      %v909 = vpop.f32.mrb[0].mxu0
      %910 = vdwg.mxu0
      %v911 = vpack.c.bf16 %v884, %v881
      %v912 = vpack.c.bf16 %v892, %v889
      %v913 = vpack.c.bf16 %v900, %v897
      %v914 = vpack.c.bf16 %v908, %v905
      %v916 = vsel %vm296, %v521, 0
      %v919 = vsel %vm296, %v677, 0
      %921 = vmatprep.subr.bf16.mxu0 0
      %922 = vmatpush1.bf16.xpose.msra.mxu0 %v919
      %923 = vmatprep.subr.bf16.mxu0 0
      %924 = vmatpush1.bf16.xpose.msra.mxu0 0
      %925 = vmatprep.subr.bf16.mxu0 0
      %926 = vmatpush1.bf16.xpose.msra.mxu0 0
      %927 = vmatprep.subr.bf16.mxu0 0
      %928 = vmatpush1.bf16.xpose.msra.mxu0 0
      %929 = vmatprep.subr.bf16.mxu0 0
      %930 = vmatpush1.bf16.xpose.msra.mxu0 0
      %931 = vmatprep.subr.bf16.mxu0 0
      %932 = vmatpush1.bf16.xpose.msra.mxu0 0
      %933 = vmatprep.subr.bf16.mxu0 0
      %934 = vmatpush1.bf16.xpose.msra.mxu0 0
      %935 = vmatprep.subr.bf16.mxu0 0
      %936 = vmatpush1.bf16.xpose.msra.mxu0 0
      %937 = vmatprep.subr.bf16.mxu0 0
      %938 = vmatpush1.bf16.xpose.msra.mxu0 0
      %939 = vmatprep.subr.bf16.mxu0 0
      %940 = vmatpush1.bf16.xpose.msra.mxu0 0
      %941 = vmatprep.subr.bf16.mxu0 0
      %942 = vmatpush1.bf16.xpose.msra.mxu0 0
      %943 = vmatprep.subr.bf16.mxu0 0
      %944 = vmatpush1.bf16.xpose.msra.mxu0 0
      %945 = vmatprep.subr.bf16.mxu0 0
      %946 = vmatpush1.bf16.xpose.msra.mxu0 0
      %947 = vmatprep.subr.bf16.mxu0 0
      %948 = vmatpush1.bf16.xpose.msra.mxu0 0
      %949 = vmatprep.subr.bf16.mxu0 0
      %950 = vmatpush1.bf16.xpose.msra.mxu0 0
      %951 = vmatprep.subr.bf16.mxu0 0
      %952 = vmatpush1.bf16.xpose.msra.mxu0 0
      %953 = vmatprep.mubr.bf16.mxu0 0
      %954 = vmatmul.mubr.bf16.gmra.mrb[0].mxu0 %v916
      %v955 = vpop.f32.mrb[0].mxu0
      %v956 = vadd.f32 0.0, %v955
      %v957 = vpop.f32.mrb[0].mxu0
      %v958 = vpop.f32.mrb[0].mxu0
      %v959 = vadd.f32 0.0, %v958
      %v960 = vpop.f32.mrb[0].mxu0
      %961 = vdwg.mxu0
      %v963 = vsel %vm296, %v522, 0
      %v966 = vsel %vm296, %v678, 0
      %968 = vmatprep.subr.bf16.mxu0 0
      %969 = vmatpush1.bf16.xpose.msra.mxu0 %v966
      %970 = vmatprep.subr.bf16.mxu0 0
      %971 = vmatpush1.bf16.xpose.msra.mxu0 0
      %972 = vmatprep.subr.bf16.mxu0 0
      %973 = vmatpush1.bf16.xpose.msra.mxu0 0
      %974 = vmatprep.subr.bf16.mxu0 0
      %975 = vmatpush1.bf16.xpose.msra.mxu0 0
      %976 = vmatprep.subr.bf16.mxu0 0
      %977 = vmatpush1.bf16.xpose.msra.mxu0 0
      %978 = vmatprep.subr.bf16.mxu0 0
      %979 = vmatpush1.bf16.xpose.msra.mxu0 0
      %980 = vmatprep.subr.bf16.mxu0 0
      %981 = vmatpush1.bf16.xpose.msra.mxu0 0
      %982 = vmatprep.subr.bf16.mxu0 0
      %983 = vmatpush1.bf16.xpose.msra.mxu0 0
      %984 = vmatprep.subr.bf16.mxu0 0
      %985 = vmatpush1.bf16.xpose.msra.mxu0 0
      %986 = vmatprep.subr.bf16.mxu0 0
      %987 = vmatpush1.bf16.xpose.msra.mxu0 0
      %988 = vmatprep.subr.bf16.mxu0 0
      %989 = vmatpush1.bf16.xpose.msra.mxu0 0
      %990 = vmatprep.subr.bf16.mxu0 0
      %991 = vmatpush1.bf16.xpose.msra.mxu0 0
      %992 = vmatprep.subr.bf16.mxu0 0
      %993 = vmatpush1.bf16.xpose.msra.mxu0 0
      %994 = vmatprep.subr.bf16.mxu0 0
      %995 = vmatpush1.bf16.xpose.msra.mxu0 0
      %996 = vmatprep.subr.bf16.mxu0 0
      %997 = vmatpush1.bf16.xpose.msra.mxu0 0
      %998 = vmatprep.subr.bf16.mxu0 0
      %999 = vmatpush1.bf16.xpose.msra.mxu0 0
      %1000 = vmatprep.mubr.bf16.mxu0 0
      %1001 = vmatmul.mubr.bf16.gmra.mrb[0].mxu0 %v963
      %v1002 = vpop.f32.mrb[0].mxu0
      %v1003 = vadd.f32 0.0, %v1002
      %v1004 = vpop.f32.mrb[0].mxu0
      %v1005 = vpop.f32.mrb[0].mxu0
      %v1006 = vadd.f32 0.0, %v1005
      %v1007 = vpop.f32.mrb[0].mxu0
      %1008 = vdwg.mxu0
      %v1010 = vsel %vm296, %v523, 0
      %v1013 = vsel %vm296, %v679, 0
      %1015 = vmatprep.subr.bf16.mxu0 0
      %1016 = vmatpush1.bf16.xpose.msra.mxu0 %v1013
      %1017 = vmatprep.subr.bf16.mxu0 0
      %1018 = vmatpush1.bf16.xpose.msra.mxu0 0
      %1019 = vmatprep.subr.bf16.mxu0 0
      %1020 = vmatpush1.bf16.xpose.msra.mxu0 0
      %1021 = vmatprep.subr.bf16.mxu0 0
      %1022 = vmatpush1.bf16.xpose.msra.mxu0 0
      %1023 = vmatprep.subr.bf16.mxu0 0
      %1024 = vmatpush1.bf16.xpose.msra.mxu0 0
      %1025 = vmatprep.subr.bf16.mxu0 0
      %1026 = vmatpush1.bf16.xpose.msra.mxu0 0
      %1027 = vmatprep.subr.bf16.mxu0 0
      %1028 = vmatpush1.bf16.xpose.msra.mxu0 0
      %1029 = vmatprep.subr.bf16.mxu0 0
      %1030 = vmatpush1.bf16.xpose.msra.mxu0 0
      %1031 = vmatprep.subr.bf16.mxu0 0
      %1032 = vmatpush1.bf16.xpose.msra.mxu0 0
      %1033 = vmatprep.subr.bf16.mxu0 0
      %1034 = vmatpush1.bf16.xpose.msra.mxu0 0
      %1035 = vmatprep.subr.bf16.mxu0 0
      %1036 = vmatpush1.bf16.xpose.msra.mxu0 0
      %1037 = vmatprep.subr.bf16.mxu0 0
      %1038 = vmatpush1.bf16.xpose.msra.mxu0 0
      %1039 = vmatprep.subr.bf16.mxu0 0
      %1040 = vmatpush1.bf16.xpose.msra.mxu0 0
      %1041 = vmatprep.subr.bf16.mxu0 0
      %1042 = vmatpush1.bf16.xpose.msra.mxu0 0
      %1043 = vmatprep.subr.bf16.mxu0 0
      %1044 = vmatpush1.bf16.xpose.msra.mxu0 0
      %1045 = vmatprep.subr.bf16.mxu0 0
      %1046 = vmatpush1.bf16.xpose.msra.mxu0 0
      %1047 = vmatprep.mubr.bf16.mxu0 0
      %1048 = vmatmul.mubr.bf16.gmra.mrb[0].mxu0 %v1010
      %v1049 = vpop.f32.mrb[0].mxu0
      %v1050 = vadd.f32 0.0, %v1049
      %v1051 = vpop.f32.mrb[0].mxu0
      %v1052 = vpop.f32.mrb[0].mxu0
      %v1053 = vadd.f32 0.0, %v1052
      %v1054 = vpop.f32.mrb[0].mxu0
      %1055 = vdwg.mxu0
      %v1057 = vsel %vm296, %v524, 0
      %v1060 = vsel %vm296, %v680, 0
      %1062 = vmatprep.subr.bf16.mxu0 0
      %1063 = vmatpush1.bf16.xpose.msra.mxu0 %v1060
      %1064 = vmatprep.subr.bf16.mxu0 0
      %1065 = vmatpush1.bf16.xpose.msra.mxu0 0
      %1066 = vmatprep.subr.bf16.mxu0 0
      %1067 = vmatpush1.bf16.xpose.msra.mxu0 0
      %1068 = vmatprep.subr.bf16.mxu0 0
      %1069 = vmatpush1.bf16.xpose.msra.mxu0 0
      %1070 = vmatprep.subr.bf16.mxu0 0
      %1071 = vmatpush1.bf16.xpose.msra.mxu0 0
      %1072 = vmatprep.subr.bf16.mxu0 0
      %1073 = vmatpush1.bf16.xpose.msra.mxu0 0
      %1074 = vmatprep.subr.bf16.mxu0 0
      %1075 = vmatpush1.bf16.xpose.msra.mxu0 0
      %1076 = vmatprep.subr.bf16.mxu0 0
      %1077 = vmatpush1.bf16.xpose.msra.mxu0 0
      %1078 = vmatprep.subr.bf16.mxu0 0
      %1079 = vmatpush1.bf16.xpose.msra.mxu0 0
      %1080 = vmatprep.subr.bf16.mxu0 0
      %1081 = vmatpush1.bf16.xpose.msra.mxu0 0
      %1082 = vmatprep.subr.bf16.mxu0 0
      %1083 = vmatpush1.bf16.xpose.msra.mxu0 0
      %1084 = vmatprep.subr.bf16.mxu0 0
      %1085 = vmatpush1.bf16.xpose.msra.mxu0 0
      %1086 = vmatprep.subr.bf16.mxu0 0
      %1087 = vmatpush1.bf16.xpose.msra.mxu0 0
      %1088 = vmatprep.subr.bf16.mxu0 0
      %1089 = vmatpush1.bf16.xpose.msra.mxu0 0
      %1090 = vmatprep.subr.bf16.mxu0 0
      %1091 = vmatpush1.bf16.xpose.msra.mxu0 0
      %1092 = vmatprep.subr.bf16.mxu0 0
      %1093 = vmatpush1.bf16.xpose.msra.mxu0 0
      %1094 = vmatprep.mubr.bf16.mxu0 0
      %1095 = vmatmul.mubr.bf16.gmra.mrb[0].mxu0 %v1057
      %v1096 = vpop.f32.mrb[0].mxu0
      %v1097 = vadd.f32 0.0, %v1096
      %v1098 = vpop.f32.mrb[0].mxu0
      %v1099 = vpop.f32.mrb[0].mxu0
      %v1100 = vadd.f32 0.0, %v1099
      %v1101 = vpop.f32.mrb[0].mxu0
      %1102 = vdwg.mxu0
      %v1104 = vsel %vm296, %v599, 0
      %v1107 = vsel %vm296, %v755, 0
      %1109 = vmatprep.subr.bf16.mxu0 0
      %1110 = vmatpush1.bf16.xpose.msra.mxu0 %v1107
      %1111 = vmatprep.subr.bf16.mxu0 0
      %1112 = vmatpush1.bf16.xpose.msra.mxu0 0
      %1113 = vmatprep.subr.bf16.mxu0 0
      %1114 = vmatpush1.bf16.xpose.msra.mxu0 0
      %1115 = vmatprep.subr.bf16.mxu0 0
      %1116 = vmatpush1.bf16.xpose.msra.mxu0 0
      %1117 = vmatprep.subr.bf16.mxu0 0
      %1118 = vmatpush1.bf16.xpose.msra.mxu0 0
      %1119 = vmatprep.subr.bf16.mxu0 0
      %1120 = vmatpush1.bf16.xpose.msra.mxu0 0
      %1121 = vmatprep.subr.bf16.mxu0 0
      %1122 = vmatpush1.bf16.xpose.msra.mxu0 0
      %1123 = vmatprep.subr.bf16.mxu0 0
      %1124 = vmatpush1.bf16.xpose.msra.mxu0 0
      %1125 = vmatprep.subr.bf16.mxu0 0
      %1126 = vmatpush1.bf16.xpose.msra.mxu0 0
      %1127 = vmatprep.subr.bf16.mxu0 0
      %1128 = vmatpush1.bf16.xpose.msra.mxu0 0
      %1129 = vmatprep.subr.bf16.mxu0 0
      %1130 = vmatpush1.bf16.xpose.msra.mxu0 0
      %1131 = vmatprep.subr.bf16.mxu0 0
      %1132 = vmatpush1.bf16.xpose.msra.mxu0 0
      %1133 = vmatprep.subr.bf16.mxu0 0
      %1134 = vmatpush1.bf16.xpose.msra.mxu0 0
      %1135 = vmatprep.subr.bf16.mxu0 0
      %1136 = vmatpush1.bf16.xpose.msra.mxu0 0
      %1137 = vmatprep.subr.bf16.mxu0 0
      %1138 = vmatpush1.bf16.xpose.msra.mxu0 0
      %1139 = vmatprep.subr.bf16.mxu0 0
      %1140 = vmatpush1.bf16.xpose.msra.mxu0 0
      %1141 = vmatprep.mubr.bf16.mxu0 0
      %1142 = vmatmul.mubr.bf16.gmra.mrb[0].mxu0 %v1104
      %v1143 = vpop.f32.mrb[0].mxu0
      %v1144 = vadd.f32 0.0, %v1143
      %v1145 = vpop.f32.mrb[0].mxu0
      %v1146 = vpop.f32.mrb[0].mxu0
      %v1147 = vadd.f32 0.0, %v1146
      %v1148 = vpop.f32.mrb[0].mxu0
      %1149 = vdwg.mxu0
      %v1151 = vsel %vm296, %v600, 0
      %v1154 = vsel %vm296, %v756, 0
      %1156 = vmatprep.subr.bf16.mxu0 0
      %1157 = vmatpush1.bf16.xpose.msra.mxu0 %v1154
      %1158 = vmatprep.subr.bf16.mxu0 0
      %1159 = vmatpush1.bf16.xpose.msra.mxu0 0
      %1160 = vmatprep.subr.bf16.mxu0 0
      %1161 = vmatpush1.bf16.xpose.msra.mxu0 0
      %1162 = vmatprep.subr.bf16.mxu0 0
      %1163 = vmatpush1.bf16.xpose.msra.mxu0 0
      %1164 = vmatprep.subr.bf16.mxu0 0
      %1165 = vmatpush1.bf16.xpose.msra.mxu0 0
      %1166 = vmatprep.subr.bf16.mxu0 0
      %1167 = vmatpush1.bf16.xpose.msra.mxu0 0
      %1168 = vmatprep.subr.bf16.mxu0 0
      %1169 = vmatpush1.bf16.xpose.msra.mxu0 0
      %1170 = vmatprep.subr.bf16.mxu0 0
      %1171 = vmatpush1.bf16.xpose.msra.mxu0 0
      %1172 = vmatprep.subr.bf16.mxu0 0
      %1173 = vmatpush1.bf16.xpose.msra.mxu0 0
      %1174 = vmatprep.subr.bf16.mxu0 0
      %1175 = vmatpush1.bf16.xpose.msra.mxu0 0
      %1176 = vmatprep.subr.bf16.mxu0 0
      %1177 = vmatpush1.bf16.xpose.msra.mxu0 0
      %1178 = vmatprep.subr.bf16.mxu0 0
      %1179 = vmatpush1.bf16.xpose.msra.mxu0 0
      %1180 = vmatprep.subr.bf16.mxu0 0
      %1181 = vmatpush1.bf16.xpose.msra.mxu0 0
      %1182 = vmatprep.subr.bf16.mxu0 0
      %1183 = vmatpush1.bf16.xpose.msra.mxu0 0
      %1184 = vmatprep.subr.bf16.mxu0 0
      %1185 = vmatpush1.bf16.xpose.msra.mxu0 0
      %1186 = vmatprep.subr.bf16.mxu0 0
      %1187 = vmatpush1.bf16.xpose.msra.mxu0 0
      %1188 = vmatprep.mubr.bf16.mxu0 0
      %1189 = vmatmul.mubr.bf16.gmra.mrb[0].mxu0 %v1151
      %v1190 = vpop.f32.mrb[0].mxu0
      %v1191 = vadd.f32 0.0, %v1190
      %v1192 = vpop.f32.mrb[0].mxu0
      %v1193 = vpop.f32.mrb[0].mxu0
      %v1194 = vadd.f32 0.0, %v1193
      %v1195 = vpop.f32.mrb[0].mxu0
      %1196 = vdwg.mxu0
      %v1198 = vsel %vm296, %v601, 0
      %v1201 = vsel %vm296, %v757, 0
      %1203 = vmatprep.subr.bf16.mxu0 0
      %1204 = vmatpush1.bf16.xpose.msra.mxu0 %v1201
      %1205 = vmatprep.subr.bf16.mxu0 0
      %1206 = vmatpush1.bf16.xpose.msra.mxu0 0
      %1207 = vmatprep.subr.bf16.mxu0 0
      %1208 = vmatpush1.bf16.xpose.msra.mxu0 0
      %1209 = vmatprep.subr.bf16.mxu0 0
      %1210 = vmatpush1.bf16.xpose.msra.mxu0 0
      %1211 = vmatprep.subr.bf16.mxu0 0
      %1212 = vmatpush1.bf16.xpose.msra.mxu0 0
      %1213 = vmatprep.subr.bf16.mxu0 0
      %1214 = vmatpush1.bf16.xpose.msra.mxu0 0
      %1215 = vmatprep.subr.bf16.mxu0 0
      %1216 = vmatpush1.bf16.xpose.msra.mxu0 0
      %1217 = vmatprep.subr.bf16.mxu0 0
      %1218 = vmatpush1.bf16.xpose.msra.mxu0 0
      %1219 = vmatprep.subr.bf16.mxu0 0
      %1220 = vmatpush1.bf16.xpose.msra.mxu0 0
      %1221 = vmatprep.subr.bf16.mxu0 0
      %1222 = vmatpush1.bf16.xpose.msra.mxu0 0
      %1223 = vmatprep.subr.bf16.mxu0 0
      %1224 = vmatpush1.bf16.xpose.msra.mxu0 0
      %1225 = vmatprep.subr.bf16.mxu0 0
      %1226 = vmatpush1.bf16.xpose.msra.mxu0 0
      %1227 = vmatprep.subr.bf16.mxu0 0
      %1228 = vmatpush1.bf16.xpose.msra.mxu0 0
      %1229 = vmatprep.subr.bf16.mxu0 0
      %1230 = vmatpush1.bf16.xpose.msra.mxu0 0
      %1231 = vmatprep.subr.bf16.mxu0 0
      %1232 = vmatpush1.bf16.xpose.msra.mxu0 0
      %1233 = vmatprep.subr.bf16.mxu0 0
      %1234 = vmatpush1.bf16.xpose.msra.mxu0 0
      %1235 = vmatprep.mubr.bf16.mxu0 0
      %1236 = vmatmul.mubr.bf16.gmra.mrb[0].mxu0 %v1198
      %v1237 = vpop.f32.mrb[0].mxu0
      %v1238 = vadd.f32 0.0, %v1237
      %v1239 = vpop.f32.mrb[0].mxu0
      %v1240 = vpop.f32.mrb[0].mxu0
      %v1241 = vadd.f32 0.0, %v1240
      %v1242 = vpop.f32.mrb[0].mxu0
      %1243 = vdwg.mxu0
      %v1245 = vsel %vm296, %v602, 0
      %v1248 = vsel %vm296, %v758, 0
      %1250 = vmatprep.subr.bf16.mxu0 0
      %1251 = vmatpush1.bf16.xpose.msra.mxu0 %v1248
      %1252 = vmatprep.subr.bf16.mxu0 0
      %1253 = vmatpush1.bf16.xpose.msra.mxu0 0
      %1254 = vmatprep.subr.bf16.mxu0 0
      %1255 = vmatpush1.bf16.xpose.msra.mxu0 0
      %1256 = vmatprep.subr.bf16.mxu0 0
      %1257 = vmatpush1.bf16.xpose.msra.mxu0 0
      %1258 = vmatprep.subr.bf16.mxu0 0
      %1259 = vmatpush1.bf16.xpose.msra.mxu0 0
      %1260 = vmatprep.subr.bf16.mxu0 0
      %1261 = vmatpush1.bf16.xpose.msra.mxu0 0
      %1262 = vmatprep.subr.bf16.mxu0 0
      %1263 = vmatpush1.bf16.xpose.msra.mxu0 0
      %1264 = vmatprep.subr.bf16.mxu0 0
      %1265 = vmatpush1.bf16.xpose.msra.mxu0 0
      %1266 = vmatprep.subr.bf16.mxu0 0
      %1267 = vmatpush1.bf16.xpose.msra.mxu0 0
      %1268 = vmatprep.subr.bf16.mxu0 0
      %1269 = vmatpush1.bf16.xpose.msra.mxu0 0
      %1270 = vmatprep.subr.bf16.mxu0 0
      %1271 = vmatpush1.bf16.xpose.msra.mxu0 0
      %1272 = vmatprep.subr.bf16.mxu0 0
      %1273 = vmatpush1.bf16.xpose.msra.mxu0 0
      %1274 = vmatprep.subr.bf16.mxu0 0
      %1275 = vmatpush1.bf16.xpose.msra.mxu0 0
      %1276 = vmatprep.subr.bf16.mxu0 0
      %1277 = vmatpush1.bf16.xpose.msra.mxu0 0
      %1278 = vmatprep.subr.bf16.mxu0 0
      %1279 = vmatpush1.bf16.xpose.msra.mxu0 0
      %1280 = vmatprep.subr.bf16.mxu0 0
      %1281 = vmatpush1.bf16.xpose.msra.mxu0 0
      %1282 = vmatprep.mubr.bf16.mxu0 0
      %1283 = vmatmul.mubr.bf16.gmra.mrb[0].mxu0 %v1245
      %v1284 = vpop.f32.mrb[0].mxu0
      %v1285 = vadd.f32 0.0, %v1284
      %v1286 = vpop.f32.mrb[0].mxu0
      %v1287 = vpop.f32.mrb[0].mxu0
      %v1288 = vadd.f32 0.0, %v1287
      %v1289 = vpop.f32.mrb[0].mxu0
      %1290 = vdwg.mxu0
      %v1291 = vld [vmem:[%s4] sm:$0xff]
      %v1292 = vld [vmem:[%s4 + $0x8] sm:$0xff]
      %v1293 = vadd.f32 %v956, %v1291
      %v1294 = vadd.f32 %v959, %v1292
      %v1295 = vadd.f32 %v1003, %v1291
      %v1296 = vadd.f32 %v1006, %v1292
      %v1297 = vadd.f32 %v1050, %v1291
      %v1298 = vadd.f32 %v1053, %v1292
      %v1299 = vadd.f32 %v1097, %v1291
      %v1300 = vadd.f32 %v1100, %v1292
      %v1301 = vadd.f32 %v1144, %v1291
      %v1302 = vadd.f32 %v1147, %v1292
      %v1303 = vadd.f32 %v1191, %v1291
      %v1304 = vadd.f32 %v1194, %v1292
      %v1305 = vadd.f32 %v1238, %v1291
      %v1306 = vadd.f32 %v1241, %v1292
      %v1307 = vadd.f32 %v1285, %v1291
      %v1308 = vadd.f32 %v1288, %v1292
      %v1309 = vsel %vm296, %v1293, -inf
      %1310 = vmax.xlane.f32.xlu0 %v1309
      %v1311 = vpop.xlane.xlu0 %1310
      %v1312 = vsel %vm296, %v1294, -inf
      %1313 = vmax.xlane.f32.xlu0 %v1312
      %v1314 = vpop.xlane.xlu0 %1313
      %v1315 = vsel %vm296, %v1295, -inf
      %1316 = vmax.xlane.f32.xlu0 %v1315
      %v1317 = vpop.xlane.xlu0 %1316
      %v1318 = vsel %vm296, %v1296, -inf
      %1319 = vmax.xlane.f32.xlu0 %v1318
      %v1320 = vpop.xlane.xlu0 %1319
      %v1321 = vsel %vm296, %v1297, -inf
      %1322 = vmax.xlane.f32.xlu0 %v1321
      %v1323 = vpop.xlane.xlu0 %1322
      %v1324 = vsel %vm296, %v1298, -inf
      %1325 = vmax.xlane.f32.xlu0 %v1324
      %v1326 = vpop.xlane.xlu0 %1325
      %v1327 = vsel %vm296, %v1299, -inf
      %1328 = vmax.xlane.f32.xlu0 %v1327
      %v1329 = vpop.xlane.xlu0 %1328
      %v1330 = vsel %vm296, %v1300, -inf
      %1331 = vmax.xlane.f32.xlu0 %v1330
      %v1332 = vpop.xlane.xlu0 %1331
      %v1333 = vsel %vm296, %v1301, -inf
      %1334 = vmax.xlane.f32.xlu0 %v1333
      %v1335 = vpop.xlane.xlu0 %1334
      %v1336 = vsel %vm296, %v1302, -inf
      %1337 = vmax.xlane.f32.xlu0 %v1336
      %v1338 = vpop.xlane.xlu0 %1337
      %v1339 = vsel %vm296, %v1303, -inf
      %1340 = vmax.xlane.f32.xlu0 %v1339
      %v1341 = vpop.xlane.xlu0 %1340
      %v1342 = vsel %vm296, %v1304, -inf
      %1343 = vmax.xlane.f32.xlu0 %v1342
      %v1344 = vpop.xlane.xlu0 %1343
      %v1345 = vsel %vm296, %v1305, -inf
      %1346 = vmax.xlane.f32.xlu0 %v1345
      %v1347 = vpop.xlane.xlu0 %1346
      %v1348 = vsel %vm296, %v1306, -inf
      %1349 = vmax.xlane.f32.xlu0 %v1348
      %v1350 = vpop.xlane.xlu0 %1349
      %v1351 = vsel %vm296, %v1307, -inf
      %1352 = vmax.xlane.f32.xlu0 %v1351
      %v1353 = vpop.xlane.xlu0 %1352
      %v1354 = vsel %vm296, %v1308, -inf
      %1355 = vmax.xlane.f32.xlu0 %v1354
      %v1356 = vpop.xlane.xlu0 %1355
      %v1357 = vsub.f32 %v1293, %v1311
      %v1358 = vsub.f32 %v1294, %v1314
      %v1359 = vsub.f32 %v1295, %v1317
      %v1360 = vsub.f32 %v1296, %v1320
      %v1361 = vsub.f32 %v1297, %v1323
      %v1362 = vsub.f32 %v1298, %v1326
      %v1363 = vsub.f32 %v1299, %v1329
      %v1364 = vsub.f32 %v1300, %v1332
      %v1365 = vsub.f32 %v1301, %v1335
      %v1366 = vsub.f32 %v1302, %v1338
      %v1367 = vsub.f32 %v1303, %v1341
      %v1368 = vsub.f32 %v1304, %v1344
      %v1369 = vsub.f32 %v1305, %v1347
      %v1370 = vsub.f32 %v1306, %v1350
      %v1371 = vsub.f32 %v1307, %v1353
      %v1372 = vsub.f32 %v1308, %v1356
      %v1373 = vmul.f32 %v1357, 1.442695
      %v1374 = vpow.pop %v1373
      %v1375 = vmul.f32 %v1358, 1.442695
      %v1376 = vpow.pop %v1375
      %v1377 = vmul.f32 %v1359, 1.442695
      %v1378 = vpow.pop %v1377
      %v1379 = vmul.f32 %v1360, 1.442695
      %v1380 = vpow.pop %v1379
      %v1381 = vmul.f32 %v1361, 1.442695
      %v1382 = vpow.pop %v1381
      %v1383 = vmul.f32 %v1362, 1.442695
      %v1384 = vpow.pop %v1383
      %v1385 = vmul.f32 %v1363, 1.442695
      %v1386 = vpow.pop %v1385
      %v1387 = vmul.f32 %v1364, 1.442695
      %v1388 = vpow.pop %v1387
      %v1389 = vmul.f32 %v1365, 1.442695
      %v1390 = vpow.pop %v1389
      %v1391 = vmul.f32 %v1366, 1.442695
      %v1392 = vpow.pop %v1391
      %v1393 = vmul.f32 %v1367, 1.442695
      %v1394 = vpow.pop %v1393
      %v1395 = vmul.f32 %v1368, 1.442695
      %v1396 = vpow.pop %v1395
      %v1397 = vmul.f32 %v1369, 1.442695
      %v1398 = vpow.pop %v1397
      %v1399 = vmul.f32 %v1370, 1.442695
      %v1400 = vpow.pop %v1399
      %v1401 = vmul.f32 %v1371, 1.442695
      %v1402 = vpow.pop %v1401
      %v1403 = vmul.f32 %v1372, 1.442695
      %v1404 = vpow.pop %v1403
      %v1405 = vsel %vm296, %v1374, 0.0
      %1406 = vadd.xlane.f32.xlu0 %v1405
      %v1407 = vpop.xlane.xlu0 %1406
      %v1408 = vsel %vm296, %v1376, 0.0
      %1409 = vadd.xlane.f32.xlu0 %v1408
      %v1410 = vpop.xlane.xlu0 %1409
      %v1411 = vsel %vm296, %v1378, 0.0
      %1412 = vadd.xlane.f32.xlu0 %v1411
      %v1413 = vpop.xlane.xlu0 %1412
      %v1414 = vsel %vm296, %v1380, 0.0
      %1415 = vadd.xlane.f32.xlu0 %v1414
      %v1416 = vpop.xlane.xlu0 %1415
      %v1417 = vsel %vm296, %v1382, 0.0
      %1418 = vadd.xlane.f32.xlu0 %v1417
      %v1419 = vpop.xlane.xlu0 %1418
      %v1420 = vsel %vm296, %v1384, 0.0
      %1421 = vadd.xlane.f32.xlu0 %v1420
      %v1422 = vpop.xlane.xlu0 %1421
      %v1423 = vsel %vm296, %v1386, 0.0
      %1424 = vadd.xlane.f32.xlu0 %v1423
      %v1425 = vpop.xlane.xlu0 %1424
      %v1426 = vsel %vm296, %v1388, 0.0
      %1427 = vadd.xlane.f32.xlu0 %v1426
      %v1428 = vpop.xlane.xlu0 %1427
      %v1429 = vsel %vm296, %v1390, 0.0
      %1430 = vadd.xlane.f32.xlu0 %v1429
      %v1431 = vpop.xlane.xlu0 %1430
      %v1432 = vsel %vm296, %v1392, 0.0
      %1433 = vadd.xlane.f32.xlu0 %v1432
      %v1434 = vpop.xlane.xlu0 %1433
      %v1435 = vsel %vm296, %v1394, 0.0
      %1436 = vadd.xlane.f32.xlu0 %v1435
      %v1437 = vpop.xlane.xlu0 %1436
      %v1438 = vsel %vm296, %v1396, 0.0
      %1439 = vadd.xlane.f32.xlu0 %v1438
      %v1440 = vpop.xlane.xlu0 %1439
      %v1441 = vsel %vm296, %v1398, 0.0
      %1442 = vadd.xlane.f32.xlu0 %v1441
      %v1443 = vpop.xlane.xlu0 %1442
      %v1444 = vsel %vm296, %v1400, 0.0
      %1445 = vadd.xlane.f32.xlu0 %v1444
      %v1446 = vpop.xlane.xlu0 %1445
      %v1447 = vsel %vm296, %v1402, 0.0
      %1448 = vadd.xlane.f32.xlu0 %v1447
      %v1449 = vpop.xlane.xlu0 %1448
      %v1450 = vsel %vm296, %v1404, 0.0
      %1451 = vadd.xlane.f32.xlu0 %v1450
      %v1452 = vpop.xlane.xlu0 %1451
      %v1453 = vpack.c.bf16 %v1376, %v1374
      %v1454 = vpack.c.bf16 %v1380, %v1378
      %v1455 = vpack.c.bf16 %v1384, %v1382
      %v1456 = vpack.c.bf16 %v1388, %v1386
      %v1457 = vpack.c.bf16 %v1392, %v1390
      %v1458 = vpack.c.bf16 %v1396, %v1394
      %v1459 = vpack.c.bf16 %v1400, %v1398
      %v1460 = vpack.c.bf16 %v1404, %v1402
      %v1462 = vsel %vm296, %v1453, 0
      %1464 = vmatprep.subr.bf16.mxu0 0
      %1465 = vmatpush1.bf16.msra.mxu0 %v833
      %1466 = vmatprep.subr.bf16.mxu0 0
      %1467 = vmatpush1.bf16.msra.mxu0 0
      %1468 = vmatprep.subr.bf16.mxu0 0
      %1469 = vmatpush1.bf16.msra.mxu0 0
      %1470 = vmatprep.subr.bf16.mxu0 0
      %1471 = vmatpush1.bf16.msra.mxu0 0
      %1472 = vmatprep.subr.bf16.mxu0 0
      %1473 = vmatpush1.bf16.msra.mxu0 0
      %1474 = vmatprep.subr.bf16.mxu0 0
      %1475 = vmatpush1.bf16.msra.mxu0 0
      %1476 = vmatprep.subr.bf16.mxu0 0
      %1477 = vmatpush1.bf16.msra.mxu0 0
      %1478 = vmatprep.subr.bf16.mxu0 0
      %1479 = vmatpush1.bf16.msra.mxu0 0
      %1480 = vmatprep.subr.bf16.mxu0 0
      %1481 = vmatpush1.bf16.msra.mxu0 0
      %1482 = vmatprep.subr.bf16.mxu0 0
      %1483 = vmatpush1.bf16.msra.mxu0 0
      %1484 = vmatprep.subr.bf16.mxu0 0
      %1485 = vmatpush1.bf16.msra.mxu0 0
      %1486 = vmatprep.subr.bf16.mxu0 0
      %1487 = vmatpush1.bf16.msra.mxu0 0
      %1488 = vmatprep.subr.bf16.mxu0 0
      %1489 = vmatpush1.bf16.msra.mxu0 0
      %1490 = vmatprep.subr.bf16.mxu0 0
      %1491 = vmatpush1.bf16.msra.mxu0 0
      %1492 = vmatprep.subr.bf16.mxu0 0
      %1493 = vmatpush1.bf16.msra.mxu0 0
      %1494 = vmatprep.subr.bf16.mxu0 0
      %1495 = vmatpush1.bf16.msra.mxu0 0
      %1496 = vmatprep.mubr.bf16.mxu0 0
      %1497 = vmatmul.mubr.bf16.gmra.mrb[0].mxu0 %v1462
      %v1498 = vpop.f32.mrb[0].mxu0
      %v1499 = vadd.f32 0.0, %v1498
      %v1500 = vpop.f32.mrb[0].mxu0
      %v1501 = vpop.f32.mrb[0].mxu0
      %v1502 = vadd.f32 0.0, %v1501
      %v1503 = vpop.f32.mrb[0].mxu0
      %1504 = vdwg.mxu0
      %v1506 = vsel %vm296, %v1454, 0
      %1508 = vmatprep.subr.bf16.mxu0 0
      %1509 = vmatpush1.bf16.msra.mxu0 %v834
      %1510 = vmatprep.subr.bf16.mxu0 0
      %1511 = vmatpush1.bf16.msra.mxu0 0
      %1512 = vmatprep.subr.bf16.mxu0 0
      %1513 = vmatpush1.bf16.msra.mxu0 0
      %1514 = vmatprep.subr.bf16.mxu0 0
      %1515 = vmatpush1.bf16.msra.mxu0 0
      %1516 = vmatprep.subr.bf16.mxu0 0
      %1517 = vmatpush1.bf16.msra.mxu0 0
      %1518 = vmatprep.subr.bf16.mxu0 0
      %1519 = vmatpush1.bf16.msra.mxu0 0
      %1520 = vmatprep.subr.bf16.mxu0 0
      %1521 = vmatpush1.bf16.msra.mxu0 0
      %1522 = vmatprep.subr.bf16.mxu0 0
      %1523 = vmatpush1.bf16.msra.mxu0 0
      %1524 = vmatprep.subr.bf16.mxu0 0
      %1525 = vmatpush1.bf16.msra.mxu0 0
      %1526 = vmatprep.subr.bf16.mxu0 0
      %1527 = vmatpush1.bf16.msra.mxu0 0
      %1528 = vmatprep.subr.bf16.mxu0 0
      %1529 = vmatpush1.bf16.msra.mxu0 0
      %1530 = vmatprep.subr.bf16.mxu0 0
      %1531 = vmatpush1.bf16.msra.mxu0 0
      %1532 = vmatprep.subr.bf16.mxu0 0
      %1533 = vmatpush1.bf16.msra.mxu0 0
      %1534 = vmatprep.subr.bf16.mxu0 0
      %1535 = vmatpush1.bf16.msra.mxu0 0
      %1536 = vmatprep.subr.bf16.mxu0 0
      %1537 = vmatpush1.bf16.msra.mxu0 0
      %1538 = vmatprep.subr.bf16.mxu0 0
      %1539 = vmatpush1.bf16.msra.mxu0 0
      %1540 = vmatprep.mubr.bf16.mxu0 0
      %1541 = vmatmul.mubr.bf16.gmra.mrb[0].mxu0 %v1506
      %v1542 = vpop.f32.mrb[0].mxu0
      %v1543 = vadd.f32 0.0, %v1542
      %v1544 = vpop.f32.mrb[0].mxu0
      %v1545 = vpop.f32.mrb[0].mxu0
      %v1546 = vadd.f32 0.0, %v1545
      %v1547 = vpop.f32.mrb[0].mxu0
      %1548 = vdwg.mxu0
      %v1550 = vsel %vm296, %v1455, 0
      %1552 = vmatprep.subr.bf16.mxu0 0
      %1553 = vmatpush1.bf16.msra.mxu0 %v835
      %1554 = vmatprep.subr.bf16.mxu0 0
      %1555 = vmatpush1.bf16.msra.mxu0 0
      %1556 = vmatprep.subr.bf16.mxu0 0
      %1557 = vmatpush1.bf16.msra.mxu0 0
      %1558 = vmatprep.subr.bf16.mxu0 0
      %1559 = vmatpush1.bf16.msra.mxu0 0
      %1560 = vmatprep.subr.bf16.mxu0 0
      %1561 = vmatpush1.bf16.msra.mxu0 0
      %1562 = vmatprep.subr.bf16.mxu0 0
      %1563 = vmatpush1.bf16.msra.mxu0 0
      %1564 = vmatprep.subr.bf16.mxu0 0
      %1565 = vmatpush1.bf16.msra.mxu0 0
      %1566 = vmatprep.subr.bf16.mxu0 0
      %1567 = vmatpush1.bf16.msra.mxu0 0
      %1568 = vmatprep.subr.bf16.mxu0 0
      %1569 = vmatpush1.bf16.msra.mxu0 0
      %1570 = vmatprep.subr.bf16.mxu0 0
      %1571 = vmatpush1.bf16.msra.mxu0 0
      %1572 = vmatprep.subr.bf16.mxu0 0
      %1573 = vmatpush1.bf16.msra.mxu0 0
      %1574 = vmatprep.subr.bf16.mxu0 0
      %1575 = vmatpush1.bf16.msra.mxu0 0
      %1576 = vmatprep.subr.bf16.mxu0 0
      %1577 = vmatpush1.bf16.msra.mxu0 0
      %1578 = vmatprep.subr.bf16.mxu0 0
      %1579 = vmatpush1.bf16.msra.mxu0 0
      %1580 = vmatprep.subr.bf16.mxu0 0
      %1581 = vmatpush1.bf16.msra.mxu0 0
      %1582 = vmatprep.subr.bf16.mxu0 0
      %1583 = vmatpush1.bf16.msra.mxu0 0
      %1584 = vmatprep.mubr.bf16.mxu0 0
      %1585 = vmatmul.mubr.bf16.gmra.mrb[0].mxu0 %v1550
      %v1586 = vpop.f32.mrb[0].mxu0
      %v1587 = vadd.f32 0.0, %v1586
      %v1588 = vpop.f32.mrb[0].mxu0
      %v1589 = vpop.f32.mrb[0].mxu0
      %v1590 = vadd.f32 0.0, %v1589
      %v1591 = vpop.f32.mrb[0].mxu0
      %1592 = vdwg.mxu0
      %v1594 = vsel %vm296, %v1456, 0
      %1596 = vmatprep.subr.bf16.mxu0 0
      %1597 = vmatpush1.bf16.msra.mxu0 %v836
      %1598 = vmatprep.subr.bf16.mxu0 0
      %1599 = vmatpush1.bf16.msra.mxu0 0
      %1600 = vmatprep.subr.bf16.mxu0 0
      %1601 = vmatpush1.bf16.msra.mxu0 0
      %1602 = vmatprep.subr.bf16.mxu0 0
      %1603 = vmatpush1.bf16.msra.mxu0 0
      %1604 = vmatprep.subr.bf16.mxu0 0
      %1605 = vmatpush1.bf16.msra.mxu0 0
      %1606 = vmatprep.subr.bf16.mxu0 0
      %1607 = vmatpush1.bf16.msra.mxu0 0
      %1608 = vmatprep.subr.bf16.mxu0 0
      %1609 = vmatpush1.bf16.msra.mxu0 0
      %1610 = vmatprep.subr.bf16.mxu0 0
      %1611 = vmatpush1.bf16.msra.mxu0 0
      %1612 = vmatprep.subr.bf16.mxu0 0
      %1613 = vmatpush1.bf16.msra.mxu0 0
      %1614 = vmatprep.subr.bf16.mxu0 0
      %1615 = vmatpush1.bf16.msra.mxu0 0
      %1616 = vmatprep.subr.bf16.mxu0 0
      %1617 = vmatpush1.bf16.msra.mxu0 0
      %1618 = vmatprep.subr.bf16.mxu0 0
      %1619 = vmatpush1.bf16.msra.mxu0 0
      %1620 = vmatprep.subr.bf16.mxu0 0
      %1621 = vmatpush1.bf16.msra.mxu0 0
      %1622 = vmatprep.subr.bf16.mxu0 0
      %1623 = vmatpush1.bf16.msra.mxu0 0
      %1624 = vmatprep.subr.bf16.mxu0 0
      %1625 = vmatpush1.bf16.msra.mxu0 0
      %1626 = vmatprep.subr.bf16.mxu0 0
      %1627 = vmatpush1.bf16.msra.mxu0 0
      %1628 = vmatprep.mubr.bf16.mxu0 0
      %1629 = vmatmul.mubr.bf16.gmra.mrb[0].mxu0 %v1594
      %v1630 = vpop.f32.mrb[0].mxu0
      %v1631 = vadd.f32 0.0, %v1630
      %v1632 = vpop.f32.mrb[0].mxu0
      %v1633 = vpop.f32.mrb[0].mxu0
      %v1634 = vadd.f32 0.0, %v1633
      %v1635 = vpop.f32.mrb[0].mxu0
      %1636 = vdwg.mxu0
      %v1638 = vsel %vm296, %v1457, 0
      %1640 = vmatprep.subr.bf16.mxu0 0
      %1641 = vmatpush1.bf16.msra.mxu0 %v911
      %1642 = vmatprep.subr.bf16.mxu0 0
      %1643 = vmatpush1.bf16.msra.mxu0 0
      %1644 = vmatprep.subr.bf16.mxu0 0
      %1645 = vmatpush1.bf16.msra.mxu0 0
      %1646 = vmatprep.subr.bf16.mxu0 0
      %1647 = vmatpush1.bf16.msra.mxu0 0
      %1648 = vmatprep.subr.bf16.mxu0 0
      %1649 = vmatpush1.bf16.msra.mxu0 0
      %1650 = vmatprep.subr.bf16.mxu0 0
      %1651 = vmatpush1.bf16.msra.mxu0 0
      %1652 = vmatprep.subr.bf16.mxu0 0
      %1653 = vmatpush1.bf16.msra.mxu0 0
      %1654 = vmatprep.subr.bf16.mxu0 0
      %1655 = vmatpush1.bf16.msra.mxu0 0
      %1656 = vmatprep.subr.bf16.mxu0 0
      %1657 = vmatpush1.bf16.msra.mxu0 0
      %1658 = vmatprep.subr.bf16.mxu0 0
      %1659 = vmatpush1.bf16.msra.mxu0 0
      %1660 = vmatprep.subr.bf16.mxu0 0
      %1661 = vmatpush1.bf16.msra.mxu0 0
      %1662 = vmatprep.subr.bf16.mxu0 0
      %1663 = vmatpush1.bf16.msra.mxu0 0
      %1664 = vmatprep.subr.bf16.mxu0 0
      %1665 = vmatpush1.bf16.msra.mxu0 0
      %1666 = vmatprep.subr.bf16.mxu0 0
      %1667 = vmatpush1.bf16.msra.mxu0 0
      %1668 = vmatprep.subr.bf16.mxu0 0
      %1669 = vmatpush1.bf16.msra.mxu0 0
      %1670 = vmatprep.subr.bf16.mxu0 0
      %1671 = vmatpush1.bf16.msra.mxu0 0
      %1672 = vmatprep.mubr.bf16.mxu0 0
      %1673 = vmatmul.mubr.bf16.gmra.mrb[0].mxu0 %v1638
      %v1674 = vpop.f32.mrb[0].mxu0
      %v1675 = vadd.f32 0.0, %v1674
      %v1676 = vpop.f32.mrb[0].mxu0
      %v1677 = vpop.f32.mrb[0].mxu0
      %v1678 = vadd.f32 0.0, %v1677
      %v1679 = vpop.f32.mrb[0].mxu0
      %1680 = vdwg.mxu0
      %v1682 = vsel %vm296, %v1458, 0
      %1684 = vmatprep.subr.bf16.mxu0 0
      %1685 = vmatpush1.bf16.msra.mxu0 %v912
      %1686 = vmatprep.subr.bf16.mxu0 0
      %1687 = vmatpush1.bf16.msra.mxu0 0
      %1688 = vmatprep.subr.bf16.mxu0 0
      %1689 = vmatpush1.bf16.msra.mxu0 0
      %1690 = vmatprep.subr.bf16.mxu0 0
      %1691 = vmatpush1.bf16.msra.mxu0 0
      %1692 = vmatprep.subr.bf16.mxu0 0
      %1693 = vmatpush1.bf16.msra.mxu0 0
      %1694 = vmatprep.subr.bf16.mxu0 0
      %1695 = vmatpush1.bf16.msra.mxu0 0
      %1696 = vmatprep.subr.bf16.mxu0 0
      %1697 = vmatpush1.bf16.msra.mxu0 0
      %1698 = vmatprep.subr.bf16.mxu0 0
      %1699 = vmatpush1.bf16.msra.mxu0 0
      %1700 = vmatprep.subr.bf16.mxu0 0
      %1701 = vmatpush1.bf16.msra.mxu0 0
      %1702 = vmatprep.subr.bf16.mxu0 0
      %1703 = vmatpush1.bf16.msra.mxu0 0
      %1704 = vmatprep.subr.bf16.mxu0 0
      %1705 = vmatpush1.bf16.msra.mxu0 0
      %1706 = vmatprep.subr.bf16.mxu0 0
      %1707 = vmatpush1.bf16.msra.mxu0 0
      %1708 = vmatprep.subr.bf16.mxu0 0
      %1709 = vmatpush1.bf16.msra.mxu0 0
      %1710 = vmatprep.subr.bf16.mxu0 0
      %1711 = vmatpush1.bf16.msra.mxu0 0
      %1712 = vmatprep.subr.bf16.mxu0 0
      %1713 = vmatpush1.bf16.msra.mxu0 0
      %1714 = vmatprep.subr.bf16.mxu0 0
      %1715 = vmatpush1.bf16.msra.mxu0 0
      %1716 = vmatprep.mubr.bf16.mxu0 0
      %1717 = vmatmul.mubr.bf16.gmra.mrb[0].mxu0 %v1682
      %v1718 = vpop.f32.mrb[0].mxu0
      %v1719 = vadd.f32 0.0, %v1718
      %v1720 = vpop.f32.mrb[0].mxu0
      %v1721 = vpop.f32.mrb[0].mxu0
      %v1722 = vadd.f32 0.0, %v1721
      %v1723 = vpop.f32.mrb[0].mxu0
      %1724 = vdwg.mxu0
      %v1726 = vsel %vm296, %v1459, 0
      %1728 = vmatprep.subr.bf16.mxu0 0
      %1729 = vmatpush1.bf16.msra.mxu0 %v913
      %1730 = vmatprep.subr.bf16.mxu0 0
      %1731 = vmatpush1.bf16.msra.mxu0 0
      %1732 = vmatprep.subr.bf16.mxu0 0
      %1733 = vmatpush1.bf16.msra.mxu0 0
      %1734 = vmatprep.subr.bf16.mxu0 0
      %1735 = vmatpush1.bf16.msra.mxu0 0
      %1736 = vmatprep.subr.bf16.mxu0 0
      %1737 = vmatpush1.bf16.msra.mxu0 0
      %1738 = vmatprep.subr.bf16.mxu0 0
      %1739 = vmatpush1.bf16.msra.mxu0 0
      %1740 = vmatprep.subr.bf16.mxu0 0
      %1741 = vmatpush1.bf16.msra.mxu0 0
      %1742 = vmatprep.subr.bf16.mxu0 0
      %1743 = vmatpush1.bf16.msra.mxu0 0
      %1744 = vmatprep.subr.bf16.mxu0 0
      %1745 = vmatpush1.bf16.msra.mxu0 0
      %1746 = vmatprep.subr.bf16.mxu0 0
      %1747 = vmatpush1.bf16.msra.mxu0 0
      %1748 = vmatprep.subr.bf16.mxu0 0
      %1749 = vmatpush1.bf16.msra.mxu0 0
      %1750 = vmatprep.subr.bf16.mxu0 0
      %1751 = vmatpush1.bf16.msra.mxu0 0
      %1752 = vmatprep.subr.bf16.mxu0 0
      %1753 = vmatpush1.bf16.msra.mxu0 0
      %1754 = vmatprep.subr.bf16.mxu0 0
      %1755 = vmatpush1.bf16.msra.mxu0 0
      %1756 = vmatprep.subr.bf16.mxu0 0
      %1757 = vmatpush1.bf16.msra.mxu0 0
      %1758 = vmatprep.subr.bf16.mxu0 0
      %1759 = vmatpush1.bf16.msra.mxu0 0
      %1760 = vmatprep.mubr.bf16.mxu0 0
      %1761 = vmatmul.mubr.bf16.gmra.mrb[0].mxu0 %v1726
      %v1762 = vpop.f32.mrb[0].mxu0
      %v1763 = vadd.f32 0.0, %v1762
      %v1764 = vpop.f32.mrb[0].mxu0
      %v1765 = vpop.f32.mrb[0].mxu0
      %v1766 = vadd.f32 0.0, %v1765
      %v1767 = vpop.f32.mrb[0].mxu0
      %1768 = vdwg.mxu0
      %v1770 = vsel %vm296, %v1460, 0
      %1772 = vmatprep.subr.bf16.mxu0 0
      %1773 = vmatpush1.bf16.msra.mxu0 %v914
      %1774 = vmatprep.subr.bf16.mxu0 0
      %1775 = vmatpush1.bf16.msra.mxu0 0
      %1776 = vmatprep.subr.bf16.mxu0 0
      %1777 = vmatpush1.bf16.msra.mxu0 0
      %1778 = vmatprep.subr.bf16.mxu0 0
      %1779 = vmatpush1.bf16.msra.mxu0 0
      %1780 = vmatprep.subr.bf16.mxu0 0
      %1781 = vmatpush1.bf16.msra.mxu0 0
      %1782 = vmatprep.subr.bf16.mxu0 0
      %1783 = vmatpush1.bf16.msra.mxu0 0
      %1784 = vmatprep.subr.bf16.mxu0 0
      %1785 = vmatpush1.bf16.msra.mxu0 0
      %1786 = vmatprep.subr.bf16.mxu0 0
      %1787 = vmatpush1.bf16.msra.mxu0 0
      %1788 = vmatprep.subr.bf16.mxu0 0
      %1789 = vmatpush1.bf16.msra.mxu0 0
      %1790 = vmatprep.subr.bf16.mxu0 0
      %1791 = vmatpush1.bf16.msra.mxu0 0
      %1792 = vmatprep.subr.bf16.mxu0 0
      %1793 = vmatpush1.bf16.msra.mxu0 0
      %1794 = vmatprep.subr.bf16.mxu0 0
      %1795 = vmatpush1.bf16.msra.mxu0 0
      %1796 = vmatprep.subr.bf16.mxu0 0
      %1797 = vmatpush1.bf16.msra.mxu0 0
      %1798 = vmatprep.subr.bf16.mxu0 0
      %1799 = vmatpush1.bf16.msra.mxu0 0
      %1800 = vmatprep.subr.bf16.mxu0 0
      %1801 = vmatpush1.bf16.msra.mxu0 0
      %1802 = vmatprep.subr.bf16.mxu0 0
      %1803 = vmatpush1.bf16.msra.mxu0 0
      %1804 = vmatprep.mubr.bf16.mxu0 0
      %1805 = vmatmul.mubr.bf16.gmra.mrb[0].mxu0 %v1770
      %v1806 = vpop.f32.mrb[0].mxu0
      %v1807 = vadd.f32 0.0, %v1806
      %v1808 = vpop.f32.mrb[0].mxu0
      %v1809 = vpop.f32.mrb[0].mxu0
      %v1810 = vadd.f32 0.0, %v1809
      %v1811 = vpop.f32.mrb[0].mxu0
      %1812 = vdwg.mxu0
      %v1813 = vrcp.pop %v1407
      %v1814 = vrcp.pop %v1410
      %v1815 = vrcp.pop %v1413
      %v1816 = vrcp.pop %v1416
      %v1817 = vrcp.pop %v1419
      %v1818 = vrcp.pop %v1422
      %v1819 = vrcp.pop %v1425
      %v1820 = vrcp.pop %v1428
      %v1821 = vrcp.pop %v1431
      %v1822 = vrcp.pop %v1434
      %v1823 = vrcp.pop %v1437
      %v1824 = vrcp.pop %v1440
      %v1825 = vrcp.pop %v1443
      %v1826 = vrcp.pop %v1446
      %v1827 = vrcp.pop %v1449
      %v1828 = vrcp.pop %v1452
      %v1829 = vmul.f32 %v1499, %v1813
      %v1830 = vmul.f32 %v1502, %v1814
      %v1831 = vmul.f32 %v1543, %v1815
      %v1832 = vmul.f32 %v1546, %v1816
      %v1833 = vmul.f32 %v1587, %v1817
      %v1834 = vmul.f32 %v1590, %v1818
      %v1835 = vmul.f32 %v1631, %v1819
      %v1836 = vmul.f32 %v1634, %v1820
      %v1837 = vmul.f32 %v1675, %v1821
      %v1838 = vmul.f32 %v1678, %v1822
      %v1839 = vmul.f32 %v1719, %v1823
      %v1840 = vmul.f32 %v1722, %v1824
      %v1841 = vmul.f32 %v1763, %v1825
      %v1842 = vmul.f32 %v1766, %v1826
      %v1843 = vmul.f32 %v1807, %v1827
      %v1844 = vmul.f32 %v1810, %v1828
      %v1845 = vpack.c.bf16 %v1830, %v1829
      %v1846 = vpack.c.bf16 %v1832, %v1831
      %v1847 = vpack.c.bf16 %v1834, %v1833
      %v1848 = vpack.c.bf16 %v1836, %v1835
      %v1849 = vpack.c.bf16 %v1838, %v1837
      %v1850 = vpack.c.bf16 %v1840, %v1839
      %v1851 = vpack.c.bf16 %v1842, %v1841
      %v1852 = vpack.c.bf16 %v1844, %v1843
      %v1853 = vld [vmem:[%s5] sm:$0xf]
      %v1854 = vld [vmem:[%s5 + $0x4] sm:$0xf]
      %s1855 = scalar_lea.vmem %s5, 8
      %v1856 = vld [vmem:[%s1855] sm:$0xf]
      %v1857 = vld [vmem:[%s1855 + $0x4] sm:$0xf]
      %v1860 = vunpack.c.l.b16 %v1856
      %v1861 = vunpack.c.l.b16 %v1857
      %v1862 = vpack.c.b16 %v1861, %v1860
      %v1865 = vsel %vm296, %v1849, 0
      %v1868 = vsel %vm296, %v1850, 0
      %v1871 = vsel %vm296, %v1851, 0
      %v1874 = vsel %vm296, %v1852, 0
      %1876 = vmatprep.subr.bf16.mxu0 0
      %1877 = vmatpush1.bf16.msra.mxu0 %v1862
      %1878 = vmatprep.subr.bf16.mxu0 0
      %1879 = vmatpush1.bf16.msra.mxu0 0
      %1880 = vmatprep.subr.bf16.mxu0 0
      %1881 = vmatpush1.bf16.msra.mxu0 0
      %1882 = vmatprep.subr.bf16.mxu0 0
      %1883 = vmatpush1.bf16.msra.mxu0 0
      %1884 = vmatprep.subr.bf16.mxu0 0
      %1885 = vmatpush1.bf16.msra.mxu0 0
      %1886 = vmatprep.subr.bf16.mxu0 0
      %1887 = vmatpush1.bf16.msra.mxu0 0
      %1888 = vmatprep.subr.bf16.mxu0 0
      %1889 = vmatpush1.bf16.msra.mxu0 0
      %1890 = vmatprep.subr.bf16.mxu0 0
      %1891 = vmatpush1.bf16.msra.mxu0 0
      %1892 = vmatprep.subr.bf16.mxu0 0
      %1893 = vmatpush1.bf16.msra.mxu0 0
      %1894 = vmatprep.subr.bf16.mxu0 0
      %1895 = vmatpush1.bf16.msra.mxu0 0
      %1896 = vmatprep.subr.bf16.mxu0 0
      %1897 = vmatpush1.bf16.msra.mxu0 0
      %1898 = vmatprep.subr.bf16.mxu0 0
      %1899 = vmatpush1.bf16.msra.mxu0 0
      %1900 = vmatprep.subr.bf16.mxu0 0
      %1901 = vmatpush1.bf16.msra.mxu0 0
      %1902 = vmatprep.subr.bf16.mxu0 0
      %1903 = vmatpush1.bf16.msra.mxu0 0
      %1904 = vmatprep.subr.bf16.mxu0 0
      %1905 = vmatpush1.bf16.msra.mxu0 0
      %1906 = vmatprep.subr.bf16.mxu0 0
      %1907 = vmatpush1.bf16.msra.mxu0 0
      %1908 = vmatprep.mubr.bf16.mxu0 0
      %1909 = vmatmul.mubr.bf16.gmra.mrb[0].mxu0 %v1865
      %v1910 = vpop.f32.mrb[0].mxu0
      %v1911 = vadd.f32 0.0, %v1910
      %v1912 = vpop.f32.mrb[0].mxu0
      %v1913 = vpop.f32.mrb[0].mxu0
      %v1914 = vadd.f32 0.0, %v1913
      %v1915 = vpop.f32.mrb[0].mxu0
      %1916 = vmatprep.mubr.bf16.mxu0 0
      %1917 = vmatmul.mubr.bf16.gmra.mrb[0].mxu0 %v1868
      %v1918 = vpop.f32.mrb[0].mxu0
      %v1919 = vadd.f32 0.0, %v1918
      %v1920 = vpop.f32.mrb[0].mxu0
      %v1921 = vpop.f32.mrb[0].mxu0
      %v1922 = vadd.f32 0.0, %v1921
      %v1923 = vpop.f32.mrb[0].mxu0
      %1924 = vmatprep.mubr.bf16.mxu0 0
      %1925 = vmatmul.mubr.bf16.gmra.mrb[0].mxu0 %v1871
      %v1926 = vpop.f32.mrb[0].mxu0
      %v1927 = vadd.f32 0.0, %v1926
      %v1928 = vpop.f32.mrb[0].mxu0
      %v1929 = vpop.f32.mrb[0].mxu0
      %v1930 = vadd.f32 0.0, %v1929
      %v1931 = vpop.f32.mrb[0].mxu0
      %1932 = vmatprep.mubr.bf16.mxu0 0
      %1933 = vmatmul.mubr.bf16.gmra.mrb[0].mxu0 %v1874
      %v1934 = vpop.f32.mrb[0].mxu0
      %v1935 = vadd.f32 0.0, %v1934
      %v1936 = vpop.f32.mrb[0].mxu0
      %v1937 = vpop.f32.mrb[0].mxu0
      %v1938 = vadd.f32 0.0, %v1937
      %v1939 = vpop.f32.mrb[0].mxu0
      %1940 = vdwg.mxu0
      %v1943 = vunpack.c.l.b16 %v1853
      %v1944 = vunpack.c.l.b16 %v1854
      %v1945 = vpack.c.b16 %v1944, %v1943
      %v1948 = vsel %vm296, %v1845, 0
      %v1951 = vsel %vm296, %v1846, 0
      %v1954 = vsel %vm296, %v1847, 0
      %v1957 = vsel %vm296, %v1848, 0
      %1959 = vmatprep.subr.bf16.mxu0 0
      %1960 = vmatpush1.bf16.msra.mxu0 %v1945
      %1961 = vmatprep.subr.bf16.mxu0 0
      %1962 = vmatpush1.bf16.msra.mxu0 0
      %1963 = vmatprep.subr.bf16.mxu0 0
      %1964 = vmatpush1.bf16.msra.mxu0 0
      %1965 = vmatprep.subr.bf16.mxu0 0
      %1966 = vmatpush1.bf16.msra.mxu0 0
      %1967 = vmatprep.subr.bf16.mxu0 0
      %1968 = vmatpush1.bf16.msra.mxu0 0
      %1969 = vmatprep.subr.bf16.mxu0 0
      %1970 = vmatpush1.bf16.msra.mxu0 0
      %1971 = vmatprep.subr.bf16.mxu0 0
      %1972 = vmatpush1.bf16.msra.mxu0 0
      %1973 = vmatprep.subr.bf16.mxu0 0
      %1974 = vmatpush1.bf16.msra.mxu0 0
      %1975 = vmatprep.subr.bf16.mxu0 0
      %1976 = vmatpush1.bf16.msra.mxu0 0
      %1977 = vmatprep.subr.bf16.mxu0 0
      %1978 = vmatpush1.bf16.msra.mxu0 0
      %1979 = vmatprep.subr.bf16.mxu0 0
      %1980 = vmatpush1.bf16.msra.mxu0 0
      %1981 = vmatprep.subr.bf16.mxu0 0
      %1982 = vmatpush1.bf16.msra.mxu0 0
      %1983 = vmatprep.subr.bf16.mxu0 0
      %1984 = vmatpush1.bf16.msra.mxu0 0
      %1985 = vmatprep.subr.bf16.mxu0 0
      %1986 = vmatpush1.bf16.msra.mxu0 0
      %1987 = vmatprep.subr.bf16.mxu0 0
      %1988 = vmatpush1.bf16.msra.mxu0 0
      %1989 = vmatprep.subr.bf16.mxu0 0
      %1990 = vmatpush1.bf16.msra.mxu0 0
      %1991 = vmatprep.mubr.bf16.mxu0 0
      %1992 = vmatmul.mubr.bf16.gmra.mrb[0].mxu0 %v1948
      %v1993 = vpop.f32.mrb[0].mxu0
      %v1994 = vadd.f32 %v1911, %v1993
      %v1995 = vpop.f32.mrb[0].mxu0
      %v1996 = vpop.f32.mrb[0].mxu0
      %v1997 = vadd.f32 %v1914, %v1996
      %v1998 = vpop.f32.mrb[0].mxu0
      %1999 = vmatprep.mubr.bf16.mxu0 0
      %2000 = vmatmul.mubr.bf16.gmra.mrb[0].mxu0 %v1951
      %v2001 = vpop.f32.mrb[0].mxu0
      %v2002 = vadd.f32 %v1919, %v2001
      %v2003 = vpop.f32.mrb[0].mxu0
      %v2004 = vpop.f32.mrb[0].mxu0
      %v2005 = vadd.f32 %v1922, %v2004
      %v2006 = vpop.f32.mrb[0].mxu0
      %2007 = vmatprep.mubr.bf16.mxu0 0
      %2008 = vmatmul.mubr.bf16.gmra.mrb[0].mxu0 %v1954
      %v2009 = vpop.f32.mrb[0].mxu0
      %v2010 = vadd.f32 %v1927, %v2009
      %v2011 = vpop.f32.mrb[0].mxu0
      %v2012 = vpop.f32.mrb[0].mxu0
      %v2013 = vadd.f32 %v1930, %v2012
      %v2014 = vpop.f32.mrb[0].mxu0
      %2015 = vmatprep.mubr.bf16.mxu0 0
      %2016 = vmatmul.mubr.bf16.gmra.mrb[0].mxu0 %v1957
      %v2017 = vpop.f32.mrb[0].mxu0
      %v2018 = vadd.f32 %v1935, %v2017
      %v2019 = vpop.f32.mrb[0].mxu0
      %v2020 = vpop.f32.mrb[0].mxu0
      %v2021 = vadd.f32 %v1938, %v2020
      %v2022 = vpop.f32.mrb[0].mxu0
      %2023 = vdwg.mxu0
      %v2024 = vld [vmem:[%s6] sm:$0x1]
      %v2026 = vlaneseq
      %v2027 = vshrl.u32 %v2026, 7
      %v2028 = vsub.s32 0, %v2027
      %v2029 = vrot.slane %v2024, %v2028
      %v2031 = vadd.f32 %v1994, %v2029
      %v2032 = vadd.f32 %v1997, %v2029
      %v2033 = vadd.f32 %v2002, %v2029
      %v2034 = vadd.f32 %v2005, %v2029
      %v2035 = vadd.f32 %v2010, %v2029
      %v2036 = vadd.f32 %v2013, %v2029
      %v2037 = vadd.f32 %v2018, %v2029
      %v2038 = vadd.f32 %v2021, %v2029
      %v2039 = vadd.f32 %v2031, %v288
      %v2040 = vadd.f32 %v2032, %v289
      %v2041 = vadd.f32 %v2033, %v290
      %v2042 = vadd.f32 %v2034, %v291
      %v2043 = vadd.f32 %v2035, %v292
      %v2044 = vadd.f32 %v2036, %v293
      %v2045 = vadd.f32 %v2037, %v294
      %v2046 = vadd.f32 %v2038, %v295
      %2047 = vst.msk [vmem:[%s285] sm:$0xff] %vm296, %v2039
      %2048 = vst.msk [vmem:[%s285 + $0x8] sm:$0xff] %vm296, %v2040
      %2049 = vst.msk [vmem:[%s285 + $0x10] sm:$0xff] %vm296, %v2041
      %2050 = vst.msk [vmem:[%s285 + $0x18] sm:$0xff] %vm296, %v2042
      %2051 = vst.msk [vmem:[%s285 + $0x20] sm:$0xff] %vm296, %v2043
      %2052 = vst.msk [vmem:[%s285 + $0x28] sm:$0xff] %vm296, %v2044
      %2053 = vst.msk [vmem:[%s285 + $0x30] sm:$0xff] %vm296, %v2045
      %2054 = vst.msk [vmem:[%s285 + $0x38] sm:$0xff] %vm296, %v2046
      %s2055 = smul.u32 4, %s18
      %p2056 = scmp.lt.s32.totalorder %s2055, 7
      %s2057 = scalar_select %p2056, %s2055, 7
      %s2058 = smul.addr %s2057, 2
      %s2059 = smul.addr %s2058, 8
      %s2060 = scalar_lea.vmem %s7, %s2059
      // Predicated region
      $region49: #{_lambda_.6} parent=47 // pred_check
        %p2061 = pneg %p188
      $region50: #{_lambda_.6} parent=47 // pred_check_branch
        %2063 = sbr.rel (%p2061) target = $region52
      $region51: #{_lambda_.6} parent=47 // pred_region
        %s2064 = smul.u32 4, %s18
      $region52: #{_lambda_.6} parent=47 // pred_fallthru
        _
    $region48: #{_lambda_.6} parent=5 // pred_fallthru
      _
    %p2065 = scmp.le.s32.totalorder 2, %s13
    // Predicated region
    $region53: #{_lambda_.6} parent=5 // pred_check
      %p2066 = pneg %p2065
    $region54: #{_lambda_.6} parent=5 // pred_check_branch
      %2068 = sbr.rel (%p2066) target = $region56
    $region55: #{_lambda_.6} parent=5 // pred_region
      %s2069 = ssub.s32 %s13, 2
      // Predicated region
      $region57: #{_lambda_.6} parent=55 // pred_check
        %p2070 = pneg %p194
      $region58: #{_lambda_.6} parent=55 // pred_check_branch
        %2072 = sbr.rel (%p2070) target = $region60
      $region59: #{_lambda_.6} parent=55 // pred_region
        %s2073 = smul.u32 4, %s19
        %p2074 = scmp.lt.s32.totalorder %s2073, 7
        %s2075 = scalar_select %p2074, %s2073, 7
        %s2076 = smul.addr %s2075, 2
        %s2077 = smul.addr %s2076, 8
        %s2078 = scalar_lea.vmem %s7, %s2077
      $region60: #{_lambda_.6} parent=55 // pred_fallthru
        _
    $region56: #{_lambda_.6} parent=5 // pred_fallthru
      _
  $region6: #{_lambda_.6} parent=0 // loop_footer
    %s17 = sadd.s32 1, %s13
  $region7: #{_lambda_.6} parent=0 // loop_footer_branch
    %12 = sbr.rel target = $region3
  $region8: #{_lambda_.6} parent=0 // loop_exit
    _

// kernel: _lambda_.8
$region0: #{_lambda_.8}
  #allocation0 [shape = 'u32[]', space=smem, size = 0x4, offset = 0x4, fixed_abs, tag = 'smem constant byte address 0x4 - core index']
  #allocation1 [shape = 'u32[144,128]{1,0:T(1,128)}', space=vmem, size = 0x12000, scoped, tag = 'internal scratch']
  %s0 = inlined_call_operand.vmem [shape: f32[8,16,16], index: 0, kind: input, shape index: {}]
  %s1 = inlined_call_operand.vmem [shape: f32[1,16], index: 1, kind: input, shape index: {}]
  %s2 = inlined_call_operand.vmem [shape: f32[1,16], index: 2, kind: input, shape index: {}]
  %s3 = inlined_call_operand.vmem [shape: bf16[6,16,16], index: 3, kind: input, shape index: {}]
  %s4 = inlined_call_operand.vmem [shape: f32[4,16,16], index: 4, kind: input, shape index: {}]
  %s5 = inlined_call_operand.vmem [shape: bf16[2,16,16], index: 5, kind: input, shape index: {}]
  %s6 = inlined_call_operand.vmem [shape: f32[1,16], index: 6, kind: input, shape index: {}]
  %s7 = inlined_call_operand.vmem [shape: f32[8,16,16], index: 7, kind: output, shape index: {}]
  %s8 = sld [smem:[#allocation0]]
  $region61: #{_lambda_.8} parent=0
    _
  %s10 = ssub.s32 1, %s8
  %s11 = scalar_select 0, %s10, %s8
  loop: start=0, step=1, limit=4
  $region2: #{_lambda_.8} parent=0 // loop_pre_header
    _
  $region3: #{_lambda_.8} parent=0 // loop_header
    %s13 = sphi 0, %s17
    %p14 = scmp.ge.s32.totalorder %s13, 4
    %s23 = sphi 0, %s25
    %s26 = sphi 0, %s23
    %s27 = sphi 0, %s26
    %s43 = sphi 0, %s27
    %s47 = sphi 0, %s47
    %s49 = sphi 0, %s47
    %s50 = sphi 0, %s49
    %s64 = sphi 0, %s50
    %s68 = sphi 0, %s68
    %s70 = sphi 0, %s68
    %s71 = sphi 0, %s70
    %s85 = sphi 0, %s71
    %s89 = sphi 0, %s89
    %s91 = sphi 0, %s89
    %s92 = sphi 0, %s91
    %s106 = sphi 0, %s92
    %s110 = sphi 0, %s110
    %s112 = sphi 0, %s110
    %s113 = sphi 0, %s112
    %s127 = sphi 0, %s113
    %s131 = sphi 0, %s131
    %s133 = sphi 0, %s131
    %s134 = sphi 0, %s133
    %s148 = sphi 0, %s134
    %s152 = sphi 0, %s152
    %s154 = sphi 0, %s152
    %s155 = sphi 0, %s154
    %s169 = sphi 0, %s155
    %s175 = sphi 0, %s177
    %s178 = sphi 0, %s175
    %s179 = sphi 0, %s178
    %s195 = sphi 0, %s179
  $region4: #{_lambda_.8} parent=0 // loop_header_branch
    %16 = sbr.rel (%p14) target = $region8
  $region5: #{_lambda_.8} parent=0 // loop_body
    %s18 = ssub.s32 %s13, 1
    %s19 = ssub.s32 %s13, 2
    %s20 = sadd.s32 %s13, 1
    %s21 = ssub.s32 %s13, %s20
    %p22 = scmp.eq.s32.totalorder %s21, 0
    %s24 = sadd.s32 %s23, 1
    %s25 = scalar_select %p22, %s23, %s24
    %p28 = pneg %p22
    %p29 = scmp.eq.s32.totalorder %s13, 1
    %p30 = por %p28, %p29
    %p31 = scmp.ne.s32.totalorder %s23, %s26
    %p32 = scmp.eq.s32.totalorder %s13, 0
    %p33 = por %p31, %p32
    %p34 = scmp.ne.s32.totalorder %s23, %s26
    %p35 = scmp.eq.s32.totalorder %s18, 1
    %p36 = por %p34, %p35
    %p37 = scmp.ne.s32.totalorder %s26, %s27
    %p38 = scmp.eq.s32.totalorder %s18, 0
    %p39 = por %p37, %p38
    %p40 = scmp.ne.s32.totalorder %s26, %s27
    %p41 = scmp.eq.s32.totalorder %s19, 1
    %p42 = por %p40, %p41
    %p44 = scmp.ne.s32.totalorder %s27, %s43
    %p45 = scmp.eq.s32.totalorder %s19, 0
    %p46 = por %p44, %p45
    %s48 = sadd.s32 %s47, 1
    %p51 = scmp.eq.s32.totalorder %s13, 1
    %p52 = scmp.ne.s32.totalorder %s47, %s49
    %p53 = scmp.eq.s32.totalorder %s13, 0
    %p54 = por %p52, %p53
    %p55 = scmp.ne.s32.totalorder %s47, %s49
    %p56 = scmp.eq.s32.totalorder %s18, 1
    %p57 = por %p55, %p56
    %p58 = scmp.ne.s32.totalorder %s49, %s50
    %p59 = scmp.eq.s32.totalorder %s18, 0
    %p60 = por %p58, %p59
    %p61 = scmp.ne.s32.totalorder %s49, %s50
    %p62 = scmp.eq.s32.totalorder %s19, 1
    %p63 = por %p61, %p62
    %p65 = scmp.ne.s32.totalorder %s50, %s64
    %p66 = scmp.eq.s32.totalorder %s19, 0
    %p67 = por %p65, %p66
    %s69 = sadd.s32 %s68, 1
    %p72 = scmp.eq.s32.totalorder %s13, 1
    %p73 = scmp.ne.s32.totalorder %s68, %s70
    %p74 = scmp.eq.s32.totalorder %s13, 0
    %p75 = por %p73, %p74
    %p76 = scmp.ne.s32.totalorder %s68, %s70
    %p77 = scmp.eq.s32.totalorder %s18, 1
    %p78 = por %p76, %p77
    %p79 = scmp.ne.s32.totalorder %s70, %s71
    %p80 = scmp.eq.s32.totalorder %s18, 0
    %p81 = por %p79, %p80
    %p82 = scmp.ne.s32.totalorder %s70, %s71
    %p83 = scmp.eq.s32.totalorder %s19, 1
    %p84 = por %p82, %p83
    %p86 = scmp.ne.s32.totalorder %s71, %s85
    %p87 = scmp.eq.s32.totalorder %s19, 0
    %p88 = por %p86, %p87
    %s90 = sadd.s32 %s89, 1
    %p93 = scmp.eq.s32.totalorder %s13, 1
    %p94 = scmp.ne.s32.totalorder %s89, %s91
    %p95 = scmp.eq.s32.totalorder %s13, 0
    %p96 = por %p94, %p95
    %p97 = scmp.ne.s32.totalorder %s89, %s91
    %p98 = scmp.eq.s32.totalorder %s18, 1
    %p99 = por %p97, %p98
    %p100 = scmp.ne.s32.totalorder %s91, %s92
    %p101 = scmp.eq.s32.totalorder %s18, 0
    %p102 = por %p100, %p101
    %p103 = scmp.ne.s32.totalorder %s91, %s92
    %p104 = scmp.eq.s32.totalorder %s19, 1
    %p105 = por %p103, %p104
    %p107 = scmp.ne.s32.totalorder %s92, %s106
    %p108 = scmp.eq.s32.totalorder %s19, 0
    %p109 = por %p107, %p108
    %s111 = sadd.s32 %s110, 1
    %p114 = scmp.eq.s32.totalorder %s13, 1
    %p115 = scmp.ne.s32.totalorder %s110, %s112
    %p116 = scmp.eq.s32.totalorder %s13, 0
    %p117 = por %p115, %p116
    %p118 = scmp.ne.s32.totalorder %s110, %s112
    %p119 = scmp.eq.s32.totalorder %s18, 1
    %p120 = por %p118, %p119
    %p121 = scmp.ne.s32.totalorder %s112, %s113
    %p122 = scmp.eq.s32.totalorder %s18, 0
    %p123 = por %p121, %p122
    %p124 = scmp.ne.s32.totalorder %s112, %s113
    %p125 = scmp.eq.s32.totalorder %s19, 1
    %p126 = por %p124, %p125
    %p128 = scmp.ne.s32.totalorder %s113, %s127
    %p129 = scmp.eq.s32.totalorder %s19, 0
    %p130 = por %p128, %p129
    %s132 = sadd.s32 %s131, 1
    %p135 = scmp.eq.s32.totalorder %s13, 1
    %p136 = scmp.ne.s32.totalorder %s131, %s133
    %p137 = scmp.eq.s32.totalorder %s13, 0
    %p138 = por %p136, %p137
    %p139 = scmp.ne.s32.totalorder %s131, %s133
    %p140 = scmp.eq.s32.totalorder %s18, 1
    %p141 = por %p139, %p140
    %p142 = scmp.ne.s32.totalorder %s133, %s134
    %p143 = scmp.eq.s32.totalorder %s18, 0
    %p144 = por %p142, %p143
    %p145 = scmp.ne.s32.totalorder %s133, %s134
    %p146 = scmp.eq.s32.totalorder %s19, 1
    %p147 = por %p145, %p146
    %p149 = scmp.ne.s32.totalorder %s134, %s148
    %p150 = scmp.eq.s32.totalorder %s19, 0
    %p151 = por %p149, %p150
    %s153 = sadd.s32 %s152, 1
    %p156 = scmp.eq.s32.totalorder %s13, 1
    %p157 = scmp.ne.s32.totalorder %s152, %s154
    %p158 = scmp.eq.s32.totalorder %s13, 0
    %p159 = por %p157, %p158
    %p160 = scmp.ne.s32.totalorder %s152, %s154
    %p161 = scmp.eq.s32.totalorder %s18, 1
    %p162 = por %p160, %p161
    %p163 = scmp.ne.s32.totalorder %s154, %s155
    %p164 = scmp.eq.s32.totalorder %s18, 0
    %p165 = por %p163, %p164
    %p166 = scmp.ne.s32.totalorder %s154, %s155
    %p167 = scmp.eq.s32.totalorder %s19, 1
    %p168 = por %p166, %p167
    %p170 = scmp.ne.s32.totalorder %s155, %s169
    %p171 = scmp.eq.s32.totalorder %s19, 0
    %p172 = por %p170, %p171
    %s173 = ssub.s32 %s13, %s20
    %p174 = scmp.eq.s32.totalorder %s173, 0
    %s176 = sadd.s32 %s175, 1
    %s177 = scalar_select %p174, %s175, %s176
    %p180 = pneg %p174
    %p181 = scmp.eq.s32.totalorder %s13, 1
    %p182 = por %p180, %p181
    %p183 = scmp.ne.s32.totalorder %s175, %s178
    %p184 = scmp.eq.s32.totalorder %s13, 0
    %p185 = por %p183, %p184
    %p186 = scmp.ne.s32.totalorder %s175, %s178
    %p187 = scmp.eq.s32.totalorder %s18, 1
    %p188 = por %p186, %p187
    %p189 = scmp.ne.s32.totalorder %s178, %s179
    %p190 = scmp.eq.s32.totalorder %s18, 0
    %p191 = por %p189, %p190
    %p192 = scmp.ne.s32.totalorder %s178, %s179
    %p193 = scmp.eq.s32.totalorder %s19, 1
    %p194 = por %p192, %p193
    %p196 = scmp.ne.s32.totalorder %s179, %s195
    %p197 = scmp.eq.s32.totalorder %s19, 0
    %p198 = por %p196, %p197
    %p199 = scmp.le.s32.totalorder 1, %s13
    %p200 = scmp.lt.s32.totalorder %s13, 3
    %p201 = pnand %p199, %p200
    %p202 = pneg %p201
    // Predicated region
    $region9: #{_lambda_.8} parent=5 // pred_check
      _
    $region10: #{_lambda_.8} parent=5 // pred_check_branch
      %204 = sbr.rel (%p201) target = $region12
    $region11: #{_lambda_.8} parent=5 // pred_region
      %s205 = ssub.s32 %s13, 1
      // Predicated region
      $region13: #{_lambda_.8} parent=11 // pred_check
        %p206 = pneg %p60
      $region14: #{_lambda_.8} parent=11 // pred_check_branch
        %208 = sbr.rel (%p206) target = $region16
      $region15: #{_lambda_.8} parent=11 // pred_region
        _
      $region16: #{_lambda_.8} parent=11 // pred_fallthru
        _
      // Predicated region
      $region17: #{_lambda_.8} parent=11 // pred_check
        %p209 = pneg %p81
      $region18: #{_lambda_.8} parent=11 // pred_check_branch
        %211 = sbr.rel (%p209) target = $region20
      $region19: #{_lambda_.8} parent=11 // pred_region
        _
      $region20: #{_lambda_.8} parent=11 // pred_fallthru
        _
      // Predicated region
      $region21: #{_lambda_.8} parent=11 // pred_check
        %p212 = pneg %p102
      $region22: #{_lambda_.8} parent=11 // pred_check_branch
        %214 = sbr.rel (%p212) target = $region24
      $region23: #{_lambda_.8} parent=11 // pred_region
        _
      $region24: #{_lambda_.8} parent=11 // pred_fallthru
        _
      // Predicated region
      $region25: #{_lambda_.8} parent=11 // pred_check
        %p215 = pneg %p123
      $region26: #{_lambda_.8} parent=11 // pred_check_branch
        %217 = sbr.rel (%p215) target = $region28
      $region27: #{_lambda_.8} parent=11 // pred_region
        _
      $region28: #{_lambda_.8} parent=11 // pred_fallthru
        _
      // Predicated region
      $region29: #{_lambda_.8} parent=11 // pred_check
        %p218 = pneg %p144
      $region30: #{_lambda_.8} parent=11 // pred_check_branch
        %220 = sbr.rel (%p218) target = $region32
      $region31: #{_lambda_.8} parent=11 // pred_region
        _
      $region32: #{_lambda_.8} parent=11 // pred_fallthru
        _
      // Predicated region
      $region33: #{_lambda_.8} parent=11 // pred_check
        %p221 = pneg %p165
      $region34: #{_lambda_.8} parent=11 // pred_check_branch
        %223 = sbr.rel (%p221) target = $region36
      $region35: #{_lambda_.8} parent=11 // pred_region
        _
      $region36: #{_lambda_.8} parent=11 // pred_fallthru
        _
    $region12: #{_lambda_.8} parent=5 // pred_fallthru
      _
    %p224 = scmp.lt.s32.totalorder %s13, 2
    // Predicated region
    $region37: #{_lambda_.8} parent=5 // pred_check
      %p225 = pneg %p224
    $region38: #{_lambda_.8} parent=5 // pred_check_branch
      %227 = sbr.rel (%p225) target = $region40
    $region39: #{_lambda_.8} parent=5 // pred_region
      // Predicated region
      $region41: #{_lambda_.8} parent=39 // pred_check
        %p228 = pneg %p33
      $region42: #{_lambda_.8} parent=39 // pred_check_branch
        %230 = sbr.rel (%p228) target = $region44
      $region43: #{_lambda_.8} parent=39 // pred_region
        %s231 = smul.u32 4, %s13
        %p232 = scmp.lt.s32.totalorder %s231, 7
        %s233 = scalar_select %p232, %s231, 7
        %s234 = smul.addr %s233, 2
        %s235 = smul.addr %s234, 8
        %s236 = scalar_lea.vmem %s0, %s235
        %s237 = smul.u32 4, %s13
      $region44: #{_lambda_.8} parent=39 // pred_fallthru
        _
    $region40: #{_lambda_.8} parent=5 // pred_fallthru
      _
    %p238 = scmp.le.s32.totalorder 1, %s13
    %p239 = scmp.lt.s32.totalorder %s13, 3
    %p240 = pnand %p238, %p239
    %p241 = pneg %p240
    // Predicated region
    $region45: #{_lambda_.8} parent=5 // pred_check
      _
    $region46: #{_lambda_.8} parent=5 // pred_check_branch
      %243 = sbr.rel (%p240) target = $region48
    $region47: #{_lambda_.8} parent=5 // pred_region
      %s244 = ssub.s32 %s13, 1
      %s245 = smul.u32 4, %s18
      %p246 = scmp.lt.s32.totalorder %s245, 7
      %s247 = scalar_select %p246, %s245, 7
      %s248 = smul.addr %s247, 2
      %s249 = smul.addr %s248, 8
      %s250 = scalar_lea.vmem %s0, %s249
      %p251 = pneg %p39
      %p252 = pneg %p36
      %p253 = pneg %p60
      %p254 = pneg %p57
      %p255 = pneg %p81
      %p256 = pneg %p78
      %p257 = pneg %p102
      %p258 = pneg %p99
      %p259 = pneg %p123
      %p260 = pneg %p120
      %p261 = pneg %p144
      %p262 = pneg %p141
      %p263 = pneg %p165
      %p264 = pneg %p162
      %p265 = pneg %p191
      %p266 = pneg %p188
      %s267 = smul.u32 4, %s18
      %p268 = scmp.lt.s32.totalorder %s267, 7
      %s269 = scalar_select %p268, %s267, 7
      %s270 = smul.addr %s269, 2
      %s271 = smul.addr %s270, 8
      %s272 = scalar_lea.vmem %s7, %s271
      %s273 = smul.u32 4, %s18
      %p274 = scmp.lt.s32.totalorder %s273, 7
      %s275 = scalar_select %p274, %s273, 7
      %s276 = smul.addr %s275, 2
      %s277 = smul.addr %s276, 8
      %s278 = scalar_lea.vmem %s0, %s277
      %s279 = smul.u32 4, %s18
      %s280 = smul.u32 4, %s18
      %p281 = scmp.lt.s32.totalorder %s280, 7
      %s282 = scalar_select %p281, %s280, 7
      %s283 = smul.addr %s282, 2
      %s284 = smul.addr %s283, 8
      %s285 = scalar_lea.vmem %s7, %s284
      %s286 = smul.u32 4, %s18
      %v288 = vld [vmem:[%s278] sm:$0xff]
      %v289 = vld [vmem:[%s278 + $0x8] sm:$0xff]
      %v290 = vld [vmem:[%s278 + $0x10] sm:$0xff]
      %v291 = vld [vmem:[%s278 + $0x18] sm:$0xff]
      %v292 = vld [vmem:[%s278 + $0x20] sm:$0xff]
      %v293 = vld [vmem:[%s278 + $0x28] sm:$0xff]
      %v294 = vld [vmem:[%s278 + $0x30] sm:$0xff]
      %v295 = vld [vmem:[%s278 + $0x38] sm:$0xff]
      %vm296 = vcmask 130048
      %v297 = vsel %vm296, %v288, 0.0
      %298 = vadd.xlane.f32.xlu0 %v297
      %v299 = vpop.xlane.xlu0 %298
      %v300 = vsel %vm296, %v289, 0.0
      %301 = vadd.xlane.f32.xlu0 %v300
      %v302 = vpop.xlane.xlu0 %301
      %v303 = vsel %vm296, %v290, 0.0
      %304 = vadd.xlane.f32.xlu0 %v303
      %v305 = vpop.xlane.xlu0 %304
      %v306 = vsel %vm296, %v291, 0.0
      %307 = vadd.xlane.f32.xlu0 %v306
      %v308 = vpop.xlane.xlu0 %307
      %v309 = vsel %vm296, %v292, 0.0
      %310 = vadd.xlane.f32.xlu0 %v309
      %v311 = vpop.xlane.xlu0 %310
      %v312 = vsel %vm296, %v293, 0.0
      %313 = vadd.xlane.f32.xlu0 %v312
      %v314 = vpop.xlane.xlu0 %313
      %v315 = vsel %vm296, %v294, 0.0
      %316 = vadd.xlane.f32.xlu0 %v315
      %v317 = vpop.xlane.xlu0 %316
      %v318 = vsel %vm296, %v295, 0.0
      %319 = vadd.xlane.f32.xlu0 %v318
      %v320 = vpop.xlane.xlu0 %319
      %v321 = vrcp.pop 16.0
      %v322 = vmul.f32 %v299, %v321
      %v323 = vmul.f32 %v302, %v321
      %v324 = vmul.f32 %v305, %v321
      %v325 = vmul.f32 %v308, %v321
      %v326 = vmul.f32 %v311, %v321
      %v327 = vmul.f32 %v314, %v321
      %v328 = vmul.f32 %v317, %v321
      %v329 = vmul.f32 %v320, %v321
      %v330 = vsub.f32 %v288, %v322
      %v331 = vsub.f32 %v289, %v323
      %v332 = vsub.f32 %v290, %v324
      %v333 = vsub.f32 %v291, %v325
      %v334 = vsub.f32 %v292, %v326
      %v335 = vsub.f32 %v293, %v327
      %v336 = vsub.f32 %v294, %v328
      %v337 = vsub.f32 %v295, %v329
      %v338 = vmul.f32 %v330, %v330
      %v339 = vmul.f32 %v331, %v331
      %v340 = vmul.f32 %v332, %v332
      %v341 = vmul.f32 %v333, %v333
      %v342 = vmul.f32 %v334, %v334
      %v343 = vmul.f32 %v335, %v335
      %v344 = vmul.f32 %v336, %v336
      %v345 = vmul.f32 %v337, %v337
      %v346 = vsel %vm296, %v338, 0.0
      %347 = vadd.xlane.f32.xlu0 %v346
      %v348 = vpop.xlane.xlu0 %347
      %v349 = vsel %vm296, %v339, 0.0
      %350 = vadd.xlane.f32.xlu0 %v349
      %v351 = vpop.xlane.xlu0 %350
      %v352 = vsel %vm296, %v340, 0.0
      %353 = vadd.xlane.f32.xlu0 %v352
      %v354 = vpop.xlane.xlu0 %353
      %v355 = vsel %vm296, %v341, 0.0
      %356 = vadd.xlane.f32.xlu0 %v355
      %v357 = vpop.xlane.xlu0 %356
      %v358 = vsel %vm296, %v342, 0.0
      %359 = vadd.xlane.f32.xlu0 %v358
      %v360 = vpop.xlane.xlu0 %359
      %v361 = vsel %vm296, %v343, 0.0
      %362 = vadd.xlane.f32.xlu0 %v361
      %v363 = vpop.xlane.xlu0 %362
      %v364 = vsel %vm296, %v344, 0.0
      %365 = vadd.xlane.f32.xlu0 %v364
      %v366 = vpop.xlane.xlu0 %365
      %v367 = vsel %vm296, %v345, 0.0
      %368 = vadd.xlane.f32.xlu0 %v367
      %v369 = vpop.xlane.xlu0 %368
      %v370 = vmul.f32 %v348, %v321
      %v371 = vmul.f32 %v351, %v321
      %v372 = vmul.f32 %v354, %v321
      %v373 = vmul.f32 %v357, %v321
      %v374 = vmul.f32 %v360, %v321
      %v375 = vmul.f32 %v363, %v321
      %v376 = vmul.f32 %v366, %v321
      %v377 = vmul.f32 %v369, %v321
      %v378 = vadd.f32 %v370, 1e-05
      %v379 = vadd.f32 %v371, 1e-05
      %v380 = vadd.f32 %v372, 1e-05
      %v381 = vadd.f32 %v373, 1e-05
      %v382 = vadd.f32 %v374, 1e-05
      %v383 = vadd.f32 %v375, 1e-05
      %v384 = vadd.f32 %v376, 1e-05
      %v385 = vadd.f32 %v377, 1e-05
      %v386 = vrsqrt.pop %v378
      %v387 = vrsqrt.pop %v379
      %v388 = vrsqrt.pop %v380
      %v389 = vrsqrt.pop %v381
      %v390 = vrsqrt.pop %v382
      %v391 = vrsqrt.pop %v383
      %v392 = vrsqrt.pop %v384
      %v393 = vrsqrt.pop %v385
      %v394 = vmul.f32 %v330, %v386
      %v395 = vmul.f32 %v331, %v387
      %v396 = vmul.f32 %v332, %v388
      %v397 = vmul.f32 %v333, %v389
      %v398 = vmul.f32 %v334, %v390
      %v399 = vmul.f32 %v335, %v391
      %v400 = vmul.f32 %v336, %v392
      %v401 = vmul.f32 %v337, %v393
      %v402 = vld [vmem:[%s1] sm:$0x1]
      %v404 = vlaneseq
      %v405 = vshrl.u32 %v404, 7
      %v406 = vsub.s32 0, %v405
      %v407 = vrot.slane %v402, %v406
      %v409 = vmul.f32 %v394, %v407
      %v410 = vmul.f32 %v395, %v407
      %v411 = vmul.f32 %v396, %v407
      %v412 = vmul.f32 %v397, %v407
      %v413 = vmul.f32 %v398, %v407
      %v414 = vmul.f32 %v399, %v407
      %v415 = vmul.f32 %v400, %v407
      %v416 = vmul.f32 %v401, %v407
      %v417 = vld [vmem:[%s2] sm:$0x1]
      %v419 = vlaneseq
      %v420 = vshrl.u32 %v419, 7
      %v421 = vsub.s32 0, %v420
      %v422 = vrot.slane %v417, %v421
      %v424 = vadd.f32 %v409, %v422
      %v425 = vadd.f32 %v410, %v422
      %v426 = vadd.f32 %v411, %v422
      %v427 = vadd.f32 %v412, %v422
      %v428 = vadd.f32 %v413, %v422
      %v429 = vadd.f32 %v414, %v422
      %v430 = vadd.f32 %v415, %v422
      %v431 = vadd.f32 %v416, %v422
      %v432 = vpack.c.bf16 %v425, %v424
      %v433 = vpack.c.bf16 %v427, %v426
      %v434 = vpack.c.bf16 %v429, %v428
      %v435 = vpack.c.bf16 %v431, %v430
      %v436 = vld [vmem:[%s3] sm:$0xf]
      %v437 = vld [vmem:[%s3 + $0x4] sm:$0xf]
      %v440 = vunpack.c.l.b16 %v436
      %v441 = vunpack.c.l.b16 %v437
      %v442 = vpack.c.b16 %v441, %v440
      %v445 = vsel %vm296, %v432, 0
      %v448 = vsel %vm296, %v433, 0
      %v451 = vsel %vm296, %v434, 0
      %v454 = vsel %vm296, %v435, 0
      %456 = vmatprep.subr.bf16.mxu0 0
      %457 = vmatpush1.bf16.msra.mxu0 %v442
      %458 = vmatprep.subr.bf16.mxu0 0
      %459 = vmatpush1.bf16.msra.mxu0 0
      %460 = vmatprep.subr.bf16.mxu0 0
      %461 = vmatpush1.bf16.msra.mxu0 0
      %462 = vmatprep.subr.bf16.mxu0 0
      %463 = vmatpush1.bf16.msra.mxu0 0
      %464 = vmatprep.subr.bf16.mxu0 0
      %465 = vmatpush1.bf16.msra.mxu0 0
      %466 = vmatprep.subr.bf16.mxu0 0
      %467 = vmatpush1.bf16.msra.mxu0 0
      %468 = vmatprep.subr.bf16.mxu0 0
      %469 = vmatpush1.bf16.msra.mxu0 0
      %470 = vmatprep.subr.bf16.mxu0 0
      %471 = vmatpush1.bf16.msra.mxu0 0
      %472 = vmatprep.subr.bf16.mxu0 0
      %473 = vmatpush1.bf16.msra.mxu0 0
      %474 = vmatprep.subr.bf16.mxu0 0
      %475 = vmatpush1.bf16.msra.mxu0 0
      %476 = vmatprep.subr.bf16.mxu0 0
      %477 = vmatpush1.bf16.msra.mxu0 0
      %478 = vmatprep.subr.bf16.mxu0 0
      %479 = vmatpush1.bf16.msra.mxu0 0
      %480 = vmatprep.subr.bf16.mxu0 0
      %481 = vmatpush1.bf16.msra.mxu0 0
      %482 = vmatprep.subr.bf16.mxu0 0
      %483 = vmatpush1.bf16.msra.mxu0 0
      %484 = vmatprep.subr.bf16.mxu0 0
      %485 = vmatpush1.bf16.msra.mxu0 0
      %486 = vmatprep.subr.bf16.mxu0 0
      %487 = vmatpush1.bf16.msra.mxu0 0
      %488 = vmatprep.mubr.bf16.mxu0 0
      %489 = vmatmul.mubr.bf16.gmra.mrb[0].mxu0 %v445
      %v490 = vpop.f32.mrb[0].mxu0
      %v491 = vadd.f32 0.0, %v490
      %v492 = vpop.f32.mrb[0].mxu0
      %v493 = vpop.f32.mrb[0].mxu0
      %v494 = vadd.f32 0.0, %v493
      %v495 = vpop.f32.mrb[0].mxu0
      %496 = vmatprep.mubr.bf16.mxu0 0
      %497 = vmatmul.mubr.bf16.gmra.mrb[0].mxu0 %v448
      %v498 = vpop.f32.mrb[0].mxu0
      %v499 = vadd.f32 0.0, %v498
      %v500 = vpop.f32.mrb[0].mxu0
      %v501 = vpop.f32.mrb[0].mxu0
      %v502 = vadd.f32 0.0, %v501
      %v503 = vpop.f32.mrb[0].mxu0
      %504 = vmatprep.mubr.bf16.mxu0 0
      %505 = vmatmul.mubr.bf16.gmra.mrb[0].mxu0 %v451
      %v506 = vpop.f32.mrb[0].mxu0
      %v507 = vadd.f32 0.0, %v506
      %v508 = vpop.f32.mrb[0].mxu0
      %v509 = vpop.f32.mrb[0].mxu0
      %v510 = vadd.f32 0.0, %v509
      %v511 = vpop.f32.mrb[0].mxu0
      %512 = vmatprep.mubr.bf16.mxu0 0
      %513 = vmatmul.mubr.bf16.gmra.mrb[0].mxu0 %v454
      %v514 = vpop.f32.mrb[0].mxu0
      %v515 = vadd.f32 0.0, %v514
      %v516 = vpop.f32.mrb[0].mxu0
      %v517 = vpop.f32.mrb[0].mxu0
      %v518 = vadd.f32 0.0, %v517
      %v519 = vpop.f32.mrb[0].mxu0
      %520 = vdwg.mxu0
      %v521 = vpack.c.bf16 %v494, %v491
      %v522 = vpack.c.bf16 %v502, %v499
      %v523 = vpack.c.bf16 %v510, %v507
      %v524 = vpack.c.bf16 %v518, %v515
      %s525 = scalar_lea.vmem %s3, 8
      %v526 = vld [vmem:[%s525] sm:$0xf]
      %v527 = vld [vmem:[%s525 + $0x4] sm:$0xf]
      %v530 = vunpack.c.l.b16 %v526
      %v531 = vunpack.c.l.b16 %v527
      %v532 = vpack.c.b16 %v531, %v530
      %534 = vmatprep.subr.bf16.mxu0 0
      %535 = vmatpush1.bf16.msra.mxu0 %v532
      %536 = vmatprep.subr.bf16.mxu0 0
      %537 = vmatpush1.bf16.msra.mxu0 0
      %538 = vmatprep.subr.bf16.mxu0 0
      %539 = vmatpush1.bf16.msra.mxu0 0
      %540 = vmatprep.subr.bf16.mxu0 0
      %541 = vmatpush1.bf16.msra.mxu0 0
      %542 = vmatprep.subr.bf16.mxu0 0
      %543 = vmatpush1.bf16.msra.mxu0 0
      %544 = vmatprep.subr.bf16.mxu0 0
      %545 = vmatpush1.bf16.msra.mxu0 0
      %546 = vmatprep.subr.bf16.mxu0 0
      %547 = vmatpush1.bf16.msra.mxu0 0
      %548 = vmatprep.subr.bf16.mxu0 0
      %549 = vmatpush1.bf16.msra.mxu0 0
      %550 = vmatprep.subr.bf16.mxu0 0
      %551 = vmatpush1.bf16.msra.mxu0 0
      %552 = vmatprep.subr.bf16.mxu0 0
      %553 = vmatpush1.bf16.msra.mxu0 0
      %554 = vmatprep.subr.bf16.mxu0 0
      %555 = vmatpush1.bf16.msra.mxu0 0
      %556 = vmatprep.subr.bf16.mxu0 0
      %557 = vmatpush1.bf16.msra.mxu0 0
      %558 = vmatprep.subr.bf16.mxu0 0
      %559 = vmatpush1.bf16.msra.mxu0 0
      %560 = vmatprep.subr.bf16.mxu0 0
      %561 = vmatpush1.bf16.msra.mxu0 0
      %562 = vmatprep.subr.bf16.mxu0 0
      %563 = vmatpush1.bf16.msra.mxu0 0
      %564 = vmatprep.subr.bf16.mxu0 0
      %565 = vmatpush1.bf16.msra.mxu0 0
      %566 = vmatprep.mubr.bf16.mxu0 0
      %567 = vmatmul.mubr.bf16.gmra.mrb[0].mxu0 %v445
      %v568 = vpop.f32.mrb[0].mxu0
      %v569 = vadd.f32 0.0, %v568
      %v570 = vpop.f32.mrb[0].mxu0
      %v571 = vpop.f32.mrb[0].mxu0
      %v572 = vadd.f32 0.0, %v571
      %v573 = vpop.f32.mrb[0].mxu0
      %574 = vmatprep.mubr.bf16.mxu0 0
      %575 = vmatmul.mubr.bf16.gmra.mrb[0].mxu0 %v448
      %v576 = vpop.f32.mrb[0].mxu0
      %v577 = vadd.f32 0.0, %v576
      %v578 = vpop.f32.mrb[0].mxu0
      %v579 = vpop.f32.mrb[0].mxu0
      %v580 = vadd.f32 0.0, %v579
      %v581 = vpop.f32.mrb[0].mxu0
      %582 = vmatprep.mubr.bf16.mxu0 0
      %583 = vmatmul.mubr.bf16.gmra.mrb[0].mxu0 %v451
      %v584 = vpop.f32.mrb[0].mxu0
      %v585 = vadd.f32 0.0, %v584
      %v586 = vpop.f32.mrb[0].mxu0
      %v587 = vpop.f32.mrb[0].mxu0
      %v588 = vadd.f32 0.0, %v587
      %v589 = vpop.f32.mrb[0].mxu0
      %590 = vmatprep.mubr.bf16.mxu0 0
      %591 = vmatmul.mubr.bf16.gmra.mrb[0].mxu0 %v454
      %v592 = vpop.f32.mrb[0].mxu0
      %v593 = vadd.f32 0.0, %v592
      %v594 = vpop.f32.mrb[0].mxu0
      %v595 = vpop.f32.mrb[0].mxu0
      %v596 = vadd.f32 0.0, %v595
      %v597 = vpop.f32.mrb[0].mxu0
      %598 = vdwg.mxu0
      %v599 = vpack.c.bf16 %v572, %v569
      %v600 = vpack.c.bf16 %v580, %v577
      %v601 = vpack.c.bf16 %v588, %v585
      %v602 = vpack.c.bf16 %v596, %v593
      %s603 = scalar_lea.vmem %s3, 16
      %v604 = vld [vmem:[%s603] sm:$0xf]
      %v605 = vld [vmem:[%s603 + $0x4] sm:$0xf]
      %v608 = vunpack.c.l.b16 %v604
      %v609 = vunpack.c.l.b16 %v605
      %v610 = vpack.c.b16 %v609, %v608
      %612 = vmatprep.subr.bf16.mxu0 0
      %613 = vmatpush1.bf16.msra.mxu0 %v610
      %614 = vmatprep.subr.bf16.mxu0 0
      %615 = vmatpush1.bf16.msra.mxu0 0
      %616 = vmatprep.subr.bf16.mxu0 0
      %617 = vmatpush1.bf16.msra.mxu0 0
      %618 = vmatprep.subr.bf16.mxu0 0
      %619 = vmatpush1.bf16.msra.mxu0 0
      %620 = vmatprep.subr.bf16.mxu0 0
      %621 = vmatpush1.bf16.msra.mxu0 0
      %622 = vmatprep.subr.bf16.mxu0 0
      %623 = vmatpush1.bf16.msra.mxu0 0
      %624 = vmatprep.subr.bf16.mxu0 0
      %625 = vmatpush1.bf16.msra.mxu0 0
      %626 = vmatprep.subr.bf16.mxu0 0
      %627 = vmatpush1.bf16.msra.mxu0 0
      %628 = vmatprep.subr.bf16.mxu0 0
      %629 = vmatpush1.bf16.msra.mxu0 0
      %630 = vmatprep.subr.bf16.mxu0 0
      %631 = vmatpush1.bf16.msra.mxu0 0
      %632 = vmatprep.subr.bf16.mxu0 0
      %633 = vmatpush1.bf16.msra.mxu0 0
      %634 = vmatprep.subr.bf16.mxu0 0
      %635 = vmatpush1.bf16.msra.mxu0 0
      %636 = vmatprep.subr.bf16.mxu0 0
      %637 = vmatpush1.bf16.msra.mxu0 0
      %638 = vmatprep.subr.bf16.mxu0 0
      %639 = vmatpush1.bf16.msra.mxu0 0
      %640 = vmatprep.subr.bf16.mxu0 0
      %641 = vmatpush1.bf16.msra.mxu0 0
      %642 = vmatprep.subr.bf16.mxu0 0
      %643 = vmatpush1.bf16.msra.mxu0 0
      %644 = vmatprep.mubr.bf16.mxu0 0
      %645 = vmatmul.mubr.bf16.gmra.mrb[0].mxu0 %v445
      %v646 = vpop.f32.mrb[0].mxu0
      %v647 = vadd.f32 0.0, %v646
      %v648 = vpop.f32.mrb[0].mxu0
      %v649 = vpop.f32.mrb[0].mxu0
      %v650 = vadd.f32 0.0, %v649
      %v651 = vpop.f32.mrb[0].mxu0
      %652 = vmatprep.mubr.bf16.mxu0 0
      %653 = vmatmul.mubr.bf16.gmra.mrb[0].mxu0 %v448
      %v654 = vpop.f32.mrb[0].mxu0
      %v655 = vadd.f32 0.0, %v654
      %v656 = vpop.f32.mrb[0].mxu0
      %v657 = vpop.f32.mrb[0].mxu0
      %v658 = vadd.f32 0.0, %v657
      %v659 = vpop.f32.mrb[0].mxu0
      %660 = vmatprep.mubr.bf16.mxu0 0
      %661 = vmatmul.mubr.bf16.gmra.mrb[0].mxu0 %v451
      %v662 = vpop.f32.mrb[0].mxu0
      %v663 = vadd.f32 0.0, %v662
      %v664 = vpop.f32.mrb[0].mxu0
      %v665 = vpop.f32.mrb[0].mxu0
      %v666 = vadd.f32 0.0, %v665
      %v667 = vpop.f32.mrb[0].mxu0
      %668 = vmatprep.mubr.bf16.mxu0 0
      %669 = vmatmul.mubr.bf16.gmra.mrb[0].mxu0 %v454
      %v670 = vpop.f32.mrb[0].mxu0
      %v671 = vadd.f32 0.0, %v670
      %v672 = vpop.f32.mrb[0].mxu0
      %v673 = vpop.f32.mrb[0].mxu0
      %v674 = vadd.f32 0.0, %v673
      %v675 = vpop.f32.mrb[0].mxu0
      %676 = vdwg.mxu0
      %v677 = vpack.c.bf16 %v650, %v647
      %v678 = vpack.c.bf16 %v658, %v655
      %v679 = vpack.c.bf16 %v666, %v663
      %v680 = vpack.c.bf16 %v674, %v671
      %s681 = scalar_lea.vmem %s3, 24
      %v682 = vld [vmem:[%s681] sm:$0xf]
      %v683 = vld [vmem:[%s681 + $0x4] sm:$0xf]
      %v686 = vunpack.c.l.b16 %v682
      %v687 = vunpack.c.l.b16 %v683
      %v688 = vpack.c.b16 %v687, %v686
      %690 = vmatprep.subr.bf16.mxu0 0
      %691 = vmatpush1.bf16.msra.mxu0 %v688
      %692 = vmatprep.subr.bf16.mxu0 0
      %693 = vmatpush1.bf16.msra.mxu0 0
      %694 = vmatprep.subr.bf16.mxu0 0
      %695 = vmatpush1.bf16.msra.mxu0 0
      %696 = vmatprep.subr.bf16.mxu0 0
      %697 = vmatpush1.bf16.msra.mxu0 0
      %698 = vmatprep.subr.bf16.mxu0 0
      %699 = vmatpush1.bf16.msra.mxu0 0
      %700 = vmatprep.subr.bf16.mxu0 0
      %701 = vmatpush1.bf16.msra.mxu0 0
      %702 = vmatprep.subr.bf16.mxu0 0
      %703 = vmatpush1.bf16.msra.mxu0 0
      %704 = vmatprep.subr.bf16.mxu0 0
      %705 = vmatpush1.bf16.msra.mxu0 0
      %706 = vmatprep.subr.bf16.mxu0 0
      %707 = vmatpush1.bf16.msra.mxu0 0
      %708 = vmatprep.subr.bf16.mxu0 0
      %709 = vmatpush1.bf16.msra.mxu0 0
      %710 = vmatprep.subr.bf16.mxu0 0
      %711 = vmatpush1.bf16.msra.mxu0 0
      %712 = vmatprep.subr.bf16.mxu0 0
      %713 = vmatpush1.bf16.msra.mxu0 0
      %714 = vmatprep.subr.bf16.mxu0 0
      %715 = vmatpush1.bf16.msra.mxu0 0
      %716 = vmatprep.subr.bf16.mxu0 0
      %717 = vmatpush1.bf16.msra.mxu0 0
      %718 = vmatprep.subr.bf16.mxu0 0
      %719 = vmatpush1.bf16.msra.mxu0 0
      %720 = vmatprep.subr.bf16.mxu0 0
      %721 = vmatpush1.bf16.msra.mxu0 0
      %722 = vmatprep.mubr.bf16.mxu0 0
      %723 = vmatmul.mubr.bf16.gmra.mrb[0].mxu0 %v445
      %v724 = vpop.f32.mrb[0].mxu0
      %v725 = vadd.f32 0.0, %v724
      %v726 = vpop.f32.mrb[0].mxu0
      %v727 = vpop.f32.mrb[0].mxu0
      %v728 = vadd.f32 0.0, %v727
      %v729 = vpop.f32.mrb[0].mxu0
      %730 = vmatprep.mubr.bf16.mxu0 0
      %731 = vmatmul.mubr.bf16.gmra.mrb[0].mxu0 %v448
      %v732 = vpop.f32.mrb[0].mxu0
      %v733 = vadd.f32 0.0, %v732
      %v734 = vpop.f32.mrb[0].mxu0
      %v735 = vpop.f32.mrb[0].mxu0
      %v736 = vadd.f32 0.0, %v735
      %v737 = vpop.f32.mrb[0].mxu0
      %738 = vmatprep.mubr.bf16.mxu0 0
      %739 = vmatmul.mubr.bf16.gmra.mrb[0].mxu0 %v451
      %v740 = vpop.f32.mrb[0].mxu0
      %v741 = vadd.f32 0.0, %v740
      %v742 = vpop.f32.mrb[0].mxu0
      %v743 = vpop.f32.mrb[0].mxu0
      %v744 = vadd.f32 0.0, %v743
      %v745 = vpop.f32.mrb[0].mxu0
      %746 = vmatprep.mubr.bf16.mxu0 0
      %747 = vmatmul.mubr.bf16.gmra.mrb[0].mxu0 %v454
      %v748 = vpop.f32.mrb[0].mxu0
      %v749 = vadd.f32 0.0, %v748
      %v750 = vpop.f32.mrb[0].mxu0
      %v751 = vpop.f32.mrb[0].mxu0
      %v752 = vadd.f32 0.0, %v751
      %v753 = vpop.f32.mrb[0].mxu0
      %754 = vdwg.mxu0
      %v755 = vpack.c.bf16 %v728, %v725
      %v756 = vpack.c.bf16 %v736, %v733
      %v757 = vpack.c.bf16 %v744, %v741
      %v758 = vpack.c.bf16 %v752, %v749
      %s759 = scalar_lea.vmem %s3, 32
      %v760 = vld [vmem:[%s759] sm:$0xf]
      %v761 = vld [vmem:[%s759 + $0x4] sm:$0xf]
      %v764 = vunpack.c.l.b16 %v760
      %v765 = vunpack.c.l.b16 %v761
      %v766 = vpack.c.b16 %v765, %v764
      %768 = vmatprep.subr.bf16.mxu0 0
      %769 = vmatpush1.bf16.msra.mxu0 %v766
      %770 = vmatprep.subr.bf16.mxu0 0
      %771 = vmatpush1.bf16.msra.mxu0 0
      %772 = vmatprep.subr.bf16.mxu0 0
      %773 = vmatpush1.bf16.msra.mxu0 0
      %774 = vmatprep.subr.bf16.mxu0 0
      %775 = vmatpush1.bf16.msra.mxu0 0
      %776 = vmatprep.subr.bf16.mxu0 0
      %777 = vmatpush1.bf16.msra.mxu0 0
      %778 = vmatprep.subr.bf16.mxu0 0
      %779 = vmatpush1.bf16.msra.mxu0 0
      %780 = vmatprep.subr.bf16.mxu0 0
      %781 = vmatpush1.bf16.msra.mxu0 0
      %782 = vmatprep.subr.bf16.mxu0 0
      %783 = vmatpush1.bf16.msra.mxu0 0
      %784 = vmatprep.subr.bf16.mxu0 0
      %785 = vmatpush1.bf16.msra.mxu0 0
      %786 = vmatprep.subr.bf16.mxu0 0
      %787 = vmatpush1.bf16.msra.mxu0 0
      %788 = vmatprep.subr.bf16.mxu0 0
      %789 = vmatpush1.bf16.msra.mxu0 0
      %790 = vmatprep.subr.bf16.mxu0 0
      %791 = vmatpush1.bf16.msra.mxu0 0
      %792 = vmatprep.subr.bf16.mxu0 0
      %793 = vmatpush1.bf16.msra.mxu0 0
      %794 = vmatprep.subr.bf16.mxu0 0
      %795 = vmatpush1.bf16.msra.mxu0 0
      %796 = vmatprep.subr.bf16.mxu0 0
      %797 = vmatpush1.bf16.msra.mxu0 0
      %798 = vmatprep.subr.bf16.mxu0 0
      %799 = vmatpush1.bf16.msra.mxu0 0
      %800 = vmatprep.mubr.bf16.mxu0 0
      %801 = vmatmul.mubr.bf16.gmra.mrb[0].mxu0 %v445
      %v802 = vpop.f32.mrb[0].mxu0
      %v803 = vadd.f32 0.0, %v802
      %v804 = vpop.f32.mrb[0].mxu0
      %v805 = vpop.f32.mrb[0].mxu0
      %v806 = vadd.f32 0.0, %v805
      %v807 = vpop.f32.mrb[0].mxu0
      %808 = vmatprep.mubr.bf16.mxu0 0
      %809 = vmatmul.mubr.bf16.gmra.mrb[0].mxu0 %v448
      %v810 = vpop.f32.mrb[0].mxu0
      %v811 = vadd.f32 0.0, %v810
      %v812 = vpop.f32.mrb[0].mxu0
      %v813 = vpop.f32.mrb[0].mxu0
      %v814 = vadd.f32 0.0, %v813
      %v815 = vpop.f32.mrb[0].mxu0
      %816 = vmatprep.mubr.bf16.mxu0 0
      %817 = vmatmul.mubr.bf16.gmra.mrb[0].mxu0 %v451
      %v818 = vpop.f32.mrb[0].mxu0
      %v819 = vadd.f32 0.0, %v818
      %v820 = vpop.f32.mrb[0].mxu0
      %v821 = vpop.f32.mrb[0].mxu0
      %v822 = vadd.f32 0.0, %v821
      %v823 = vpop.f32.mrb[0].mxu0
      %824 = vmatprep.mubr.bf16.mxu0 0
      %825 = vmatmul.mubr.bf16.gmra.mrb[0].mxu0 %v454
      %v826 = vpop.f32.mrb[0].mxu0
      %v827 = vadd.f32 0.0, %v826
      %v828 = vpop.f32.mrb[0].mxu0
      %v829 = vpop.f32.mrb[0].mxu0
      %v830 = vadd.f32 0.0, %v829
      %v831 = vpop.f32.mrb[0].mxu0
      %832 = vdwg.mxu0
      %v833 = vpack.c.bf16 %v806, %v803
      %v834 = vpack.c.bf16 %v814, %v811
      %v835 = vpack.c.bf16 %v822, %v819
      %v836 = vpack.c.bf16 %v830, %v827
      %s837 = scalar_lea.vmem %s3, 40
      %v838 = vld [vmem:[%s837] sm:$0xf]
      %v839 = vld [vmem:[%s837 + $0x4] sm:$0xf]
      %v842 = vunpack.c.l.b16 %v838
      %v843 = vunpack.c.l.b16 %v839
      %v844 = vpack.c.b16 %v843, %v842
      %846 = vmatprep.subr.bf16.mxu0 0
      %847 = vmatpush1.bf16.msra.mxu0 %v844
      %848 = vmatprep.subr.bf16.mxu0 0
      %849 = vmatpush1.bf16.msra.mxu0 0
      %850 = vmatprep.subr.bf16.mxu0 0
      %851 = vmatpush1.bf16.msra.mxu0 0
      %852 = vmatprep.subr.bf16.mxu0 0
      %853 = vmatpush1.bf16.msra.mxu0 0
      %854 = vmatprep.subr.bf16.mxu0 0
      %855 = vmatpush1.bf16.msra.mxu0 0
      %856 = vmatprep.subr.bf16.mxu0 0
      %857 = vmatpush1.bf16.msra.mxu0 0
      %858 = vmatprep.subr.bf16.mxu0 0
      %859 = vmatpush1.bf16.msra.mxu0 0
      %860 = vmatprep.subr.bf16.mxu0 0
      %861 = vmatpush1.bf16.msra.mxu0 0
      %862 = vmatprep.subr.bf16.mxu0 0
      %863 = vmatpush1.bf16.msra.mxu0 0
      %864 = vmatprep.subr.bf16.mxu0 0
      %865 = vmatpush1.bf16.msra.mxu0 0
      %866 = vmatprep.subr.bf16.mxu0 0
      %867 = vmatpush1.bf16.msra.mxu0 0
      %868 = vmatprep.subr.bf16.mxu0 0
      %869 = vmatpush1.bf16.msra.mxu0 0
      %870 = vmatprep.subr.bf16.mxu0 0
      %871 = vmatpush1.bf16.msra.mxu0 0
      %872 = vmatprep.subr.bf16.mxu0 0
      %873 = vmatpush1.bf16.msra.mxu0 0
      %874 = vmatprep.subr.bf16.mxu0 0
      %875 = vmatpush1.bf16.msra.mxu0 0
      %876 = vmatprep.subr.bf16.mxu0 0
      %877 = vmatpush1.bf16.msra.mxu0 0
      %878 = vmatprep.mubr.bf16.mxu0 0
      %879 = vmatmul.mubr.bf16.gmra.mrb[0].mxu0 %v445
      %v880 = vpop.f32.mrb[0].mxu0
      %v881 = vadd.f32 0.0, %v880
      %v882 = vpop.f32.mrb[0].mxu0
      %v883 = vpop.f32.mrb[0].mxu0
      %v884 = vadd.f32 0.0, %v883
      %v885 = vpop.f32.mrb[0].mxu0
      %886 = vmatprep.mubr.bf16.mxu0 0
      %887 = vmatmul.mubr.bf16.gmra.mrb[0].mxu0 %v448
      %v888 = vpop.f32.mrb[0].mxu0
      %v889 = vadd.f32 0.0, %v888
      %v890 = vpop.f32.mrb[0].mxu0
      %v891 = vpop.f32.mrb[0].mxu0
      %v892 = vadd.f32 0.0, %v891
      %v893 = vpop.f32.mrb[0].mxu0
      %894 = vmatprep.mubr.bf16.mxu0 0
      %895 = vmatmul.mubr.bf16.gmra.mrb[0].mxu0 %v451
      %v896 = vpop.f32.mrb[0].mxu0
      %v897 = vadd.f32 0.0, %v896
      %v898 = vpop.f32.mrb[0].mxu0
      %v899 = vpop.f32.mrb[0].mxu0
      %v900 = vadd.f32 0.0, %v899
      %v901 = vpop.f32.mrb[0].mxu0
      %902 = vmatprep.mubr.bf16.mxu0 0
      %903 = vmatmul.mubr.bf16.gmra.mrb[0].mxu0 %v454
      %v904 = vpop.f32.mrb[0].mxu0
      %v905 = vadd.f32 0.0, %v904
      %v906 = vpop.f32.mrb[0].mxu0
      %v907 = vpop.f32.mrb[0].mxu0
      %v908 = vadd.f32 0.0, %v907
      %v909 = vpop.f32.mrb[0].mxu0
      %910 = vdwg.mxu0
      %v911 = vpack.c.bf16 %v884, %v881
      %v912 = vpack.c.bf16 %v892, %v889
      %v913 = vpack.c.bf16 %v900, %v897
      %v914 = vpack.c.bf16 %v908, %v905
      %v916 = vsel %vm296, %v521, 0
      %v919 = vsel %vm296, %v677, 0
      %921 = vmatprep.subr.bf16.mxu0 0
      %922 = vmatpush1.bf16.xpose.msra.mxu0 %v919
      %923 = vmatprep.subr.bf16.mxu0 0
      %924 = vmatpush1.bf16.xpose.msra.mxu0 0
      %925 = vmatprep.subr.bf16.mxu0 0
      %926 = vmatpush1.bf16.xpose.msra.mxu0 0
      %927 = vmatprep.subr.bf16.mxu0 0
      %928 = vmatpush1.bf16.xpose.msra.mxu0 0
      %929 = vmatprep.subr.bf16.mxu0 0
      %930 = vmatpush1.bf16.xpose.msra.mxu0 0
      %931 = vmatprep.subr.bf16.mxu0 0
      %932 = vmatpush1.bf16.xpose.msra.mxu0 0
      %933 = vmatprep.subr.bf16.mxu0 0
      %934 = vmatpush1.bf16.xpose.msra.mxu0 0
      %935 = vmatprep.subr.bf16.mxu0 0
      %936 = vmatpush1.bf16.xpose.msra.mxu0 0
      %937 = vmatprep.subr.bf16.mxu0 0
      %938 = vmatpush1.bf16.xpose.msra.mxu0 0
      %939 = vmatprep.subr.bf16.mxu0 0
      %940 = vmatpush1.bf16.xpose.msra.mxu0 0
      %941 = vmatprep.subr.bf16.mxu0 0
      %942 = vmatpush1.bf16.xpose.msra.mxu0 0
      %943 = vmatprep.subr.bf16.mxu0 0
      %944 = vmatpush1.bf16.xpose.msra.mxu0 0
      %945 = vmatprep.subr.bf16.mxu0 0
      %946 = vmatpush1.bf16.xpose.msra.mxu0 0
      %947 = vmatprep.subr.bf16.mxu0 0
      %948 = vmatpush1.bf16.xpose.msra.mxu0 0
      %949 = vmatprep.subr.bf16.mxu0 0
      %950 = vmatpush1.bf16.xpose.msra.mxu0 0
      %951 = vmatprep.subr.bf16.mxu0 0
      %952 = vmatpush1.bf16.xpose.msra.mxu0 0
      %953 = vmatprep.mubr.bf16.mxu0 0
      %954 = vmatmul.mubr.bf16.gmra.mrb[0].mxu0 %v916
      %v955 = vpop.f32.mrb[0].mxu0
      %v956 = vadd.f32 0.0, %v955
      %v957 = vpop.f32.mrb[0].mxu0
      %v958 = vpop.f32.mrb[0].mxu0
      %v959 = vadd.f32 0.0, %v958
      %v960 = vpop.f32.mrb[0].mxu0
      %961 = vdwg.mxu0
      %v963 = vsel %vm296, %v522, 0
      %v966 = vsel %vm296, %v678, 0
      %968 = vmatprep.subr.bf16.mxu0 0
      %969 = vmatpush1.bf16.xpose.msra.mxu0 %v966
      %970 = vmatprep.subr.bf16.mxu0 0
      %971 = vmatpush1.bf16.xpose.msra.mxu0 0
      %972 = vmatprep.subr.bf16.mxu0 0
      %973 = vmatpush1.bf16.xpose.msra.mxu0 0
      %974 = vmatprep.subr.bf16.mxu0 0
      %975 = vmatpush1.bf16.xpose.msra.mxu0 0
      %976 = vmatprep.subr.bf16.mxu0 0
      %977 = vmatpush1.bf16.xpose.msra.mxu0 0
      %978 = vmatprep.subr.bf16.mxu0 0
      %979 = vmatpush1.bf16.xpose.msra.mxu0 0
      %980 = vmatprep.subr.bf16.mxu0 0
      %981 = vmatpush1.bf16.xpose.msra.mxu0 0
      %982 = vmatprep.subr.bf16.mxu0 0
      %983 = vmatpush1.bf16.xpose.msra.mxu0 0
      %984 = vmatprep.subr.bf16.mxu0 0
      %985 = vmatpush1.bf16.xpose.msra.mxu0 0
      %986 = vmatprep.subr.bf16.mxu0 0
      %987 = vmatpush1.bf16.xpose.msra.mxu0 0
      %988 = vmatprep.subr.bf16.mxu0 0
      %989 = vmatpush1.bf16.xpose.msra.mxu0 0
      %990 = vmatprep.subr.bf16.mxu0 0
      %991 = vmatpush1.bf16.xpose.msra.mxu0 0
      %992 = vmatprep.subr.bf16.mxu0 0
      %993 = vmatpush1.bf16.xpose.msra.mxu0 0
      %994 = vmatprep.subr.bf16.mxu0 0
      %995 = vmatpush1.bf16.xpose.msra.mxu0 0
      %996 = vmatprep.subr.bf16.mxu0 0
      %997 = vmatpush1.bf16.xpose.msra.mxu0 0
      %998 = vmatprep.subr.bf16.mxu0 0
      %999 = vmatpush1.bf16.xpose.msra.mxu0 0
      %1000 = vmatprep.mubr.bf16.mxu0 0
      %1001 = vmatmul.mubr.bf16.gmra.mrb[0].mxu0 %v963
      %v1002 = vpop.f32.mrb[0].mxu0
      %v1003 = vadd.f32 0.0, %v1002
      %v1004 = vpop.f32.mrb[0].mxu0
      %v1005 = vpop.f32.mrb[0].mxu0
      %v1006 = vadd.f32 0.0, %v1005
      %v1007 = vpop.f32.mrb[0].mxu0
      %1008 = vdwg.mxu0
      %v1010 = vsel %vm296, %v523, 0
      %v1013 = vsel %vm296, %v679, 0
      %1015 = vmatprep.subr.bf16.mxu0 0
      %1016 = vmatpush1.bf16.xpose.msra.mxu0 %v1013
      %1017 = vmatprep.subr.bf16.mxu0 0
      %1018 = vmatpush1.bf16.xpose.msra.mxu0 0
      %1019 = vmatprep.subr.bf16.mxu0 0
      %1020 = vmatpush1.bf16.xpose.msra.mxu0 0
      %1021 = vmatprep.subr.bf16.mxu0 0
      %1022 = vmatpush1.bf16.xpose.msra.mxu0 0
      %1023 = vmatprep.subr.bf16.mxu0 0
      %1024 = vmatpush1.bf16.xpose.msra.mxu0 0
      %1025 = vmatprep.subr.bf16.mxu0 0
      %1026 = vmatpush1.bf16.xpose.msra.mxu0 0
      %1027 = vmatprep.subr.bf16.mxu0 0
      %1028 = vmatpush1.bf16.xpose.msra.mxu0 0
      %1029 = vmatprep.subr.bf16.mxu0 0
      %1030 = vmatpush1.bf16.xpose.msra.mxu0 0
      %1031 = vmatprep.subr.bf16.mxu0 0
      %1032 = vmatpush1.bf16.xpose.msra.mxu0 0
      %1033 = vmatprep.subr.bf16.mxu0 0
      %1034 = vmatpush1.bf16.xpose.msra.mxu0 0
      %1035 = vmatprep.subr.bf16.mxu0 0
      %1036 = vmatpush1.bf16.xpose.msra.mxu0 0
      %1037 = vmatprep.subr.bf16.mxu0 0
      %1038 = vmatpush1.bf16.xpose.msra.mxu0 0
      %1039 = vmatprep.subr.bf16.mxu0 0
      %1040 = vmatpush1.bf16.xpose.msra.mxu0 0
      %1041 = vmatprep.subr.bf16.mxu0 0
      %1042 = vmatpush1.bf16.xpose.msra.mxu0 0
      %1043 = vmatprep.subr.bf16.mxu0 0
      %1044 = vmatpush1.bf16.xpose.msra.mxu0 0
      %1045 = vmatprep.subr.bf16.mxu0 0
      %1046 = vmatpush1.bf16.xpose.msra.mxu0 0
      %1047 = vmatprep.mubr.bf16.mxu0 0
      %1048 = vmatmul.mubr.bf16.gmra.mrb[0].mxu0 %v1010
      %v1049 = vpop.f32.mrb[0].mxu0
      %v1050 = vadd.f32 0.0, %v1049
      %v1051 = vpop.f32.mrb[0].mxu0
      %v1052 = vpop.f32.mrb[0].mxu0
      %v1053 = vadd.f32 0.0, %v1052
      %v1054 = vpop.f32.mrb[0].mxu0
      %1055 = vdwg.mxu0
      %v1057 = vsel %vm296, %v524, 0
      %v1060 = vsel %vm296, %v680, 0
      %1062 = vmatprep.subr.bf16.mxu0 0
      %1063 = vmatpush1.bf16.xpose.msra.mxu0 %v1060
      %1064 = vmatprep.subr.bf16.mxu0 0
      %1065 = vmatpush1.bf16.xpose.msra.mxu0 0
      %1066 = vmatprep.subr.bf16.mxu0 0
      %1067 = vmatpush1.bf16.xpose.msra.mxu0 0
      %1068 = vmatprep.subr.bf16.mxu0 0
      %1069 = vmatpush1.bf16.xpose.msra.mxu0 0
      %1070 = vmatprep.subr.bf16.mxu0 0
      %1071 = vmatpush1.bf16.xpose.msra.mxu0 0
      %1072 = vmatprep.subr.bf16.mxu0 0
      %1073 = vmatpush1.bf16.xpose.msra.mxu0 0
      %1074 = vmatprep.subr.bf16.mxu0 0
      %1075 = vmatpush1.bf16.xpose.msra.mxu0 0
      %1076 = vmatprep.subr.bf16.mxu0 0
      %1077 = vmatpush1.bf16.xpose.msra.mxu0 0
      %1078 = vmatprep.subr.bf16.mxu0 0
      %1079 = vmatpush1.bf16.xpose.msra.mxu0 0
      %1080 = vmatprep.subr.bf16.mxu0 0
      %1081 = vmatpush1.bf16.xpose.msra.mxu0 0
      %1082 = vmatprep.subr.bf16.mxu0 0
      %1083 = vmatpush1.bf16.xpose.msra.mxu0 0
      %1084 = vmatprep.subr.bf16.mxu0 0
      %1085 = vmatpush1.bf16.xpose.msra.mxu0 0
      %1086 = vmatprep.subr.bf16.mxu0 0
      %1087 = vmatpush1.bf16.xpose.msra.mxu0 0
      %1088 = vmatprep.subr.bf16.mxu0 0
      %1089 = vmatpush1.bf16.xpose.msra.mxu0 0
      %1090 = vmatprep.subr.bf16.mxu0 0
      %1091 = vmatpush1.bf16.xpose.msra.mxu0 0
      %1092 = vmatprep.subr.bf16.mxu0 0
      %1093 = vmatpush1.bf16.xpose.msra.mxu0 0
      %1094 = vmatprep.mubr.bf16.mxu0 0
      %1095 = vmatmul.mubr.bf16.gmra.mrb[0].mxu0 %v1057
      %v1096 = vpop.f32.mrb[0].mxu0
      %v1097 = vadd.f32 0.0, %v1096
      %v1098 = vpop.f32.mrb[0].mxu0
      %v1099 = vpop.f32.mrb[0].mxu0
      %v1100 = vadd.f32 0.0, %v1099
      %v1101 = vpop.f32.mrb[0].mxu0
      %1102 = vdwg.mxu0
      %v1104 = vsel %vm296, %v599, 0
      %v1107 = vsel %vm296, %v755, 0
      %1109 = vmatprep.subr.bf16.mxu0 0
      %1110 = vmatpush1.bf16.xpose.msra.mxu0 %v1107
      %1111 = vmatprep.subr.bf16.mxu0 0
      %1112 = vmatpush1.bf16.xpose.msra.mxu0 0
      %1113 = vmatprep.subr.bf16.mxu0 0
      %1114 = vmatpush1.bf16.xpose.msra.mxu0 0
      %1115 = vmatprep.subr.bf16.mxu0 0
      %1116 = vmatpush1.bf16.xpose.msra.mxu0 0
      %1117 = vmatprep.subr.bf16.mxu0 0
      %1118 = vmatpush1.bf16.xpose.msra.mxu0 0
      %1119 = vmatprep.subr.bf16.mxu0 0
      %1120 = vmatpush1.bf16.xpose.msra.mxu0 0
      %1121 = vmatprep.subr.bf16.mxu0 0
      %1122 = vmatpush1.bf16.xpose.msra.mxu0 0
      %1123 = vmatprep.subr.bf16.mxu0 0
      %1124 = vmatpush1.bf16.xpose.msra.mxu0 0
      %1125 = vmatprep.subr.bf16.mxu0 0
      %1126 = vmatpush1.bf16.xpose.msra.mxu0 0
      %1127 = vmatprep.subr.bf16.mxu0 0
      %1128 = vmatpush1.bf16.xpose.msra.mxu0 0
      %1129 = vmatprep.subr.bf16.mxu0 0
      %1130 = vmatpush1.bf16.xpose.msra.mxu0 0
      %1131 = vmatprep.subr.bf16.mxu0 0
      %1132 = vmatpush1.bf16.xpose.msra.mxu0 0
      %1133 = vmatprep.subr.bf16.mxu0 0
      %1134 = vmatpush1.bf16.xpose.msra.mxu0 0
      %1135 = vmatprep.subr.bf16.mxu0 0
      %1136 = vmatpush1.bf16.xpose.msra.mxu0 0
      %1137 = vmatprep.subr.bf16.mxu0 0
      %1138 = vmatpush1.bf16.xpose.msra.mxu0 0
      %1139 = vmatprep.subr.bf16.mxu0 0
      %1140 = vmatpush1.bf16.xpose.msra.mxu0 0
      %1141 = vmatprep.mubr.bf16.mxu0 0
      %1142 = vmatmul.mubr.bf16.gmra.mrb[0].mxu0 %v1104
      %v1143 = vpop.f32.mrb[0].mxu0
      %v1144 = vadd.f32 0.0, %v1143
      %v1145 = vpop.f32.mrb[0].mxu0
      %v1146 = vpop.f32.mrb[0].mxu0
      %v1147 = vadd.f32 0.0, %v1146
      %v1148 = vpop.f32.mrb[0].mxu0
      %1149 = vdwg.mxu0
      %v1151 = vsel %vm296, %v600, 0
      %v1154 = vsel %vm296, %v756, 0
      %1156 = vmatprep.subr.bf16.mxu0 0
      %1157 = vmatpush1.bf16.xpose.msra.mxu0 %v1154
      %1158 = vmatprep.subr.bf16.mxu0 0
      %1159 = vmatpush1.bf16.xpose.msra.mxu0 0
      %1160 = vmatprep.subr.bf16.mxu0 0
      %1161 = vmatpush1.bf16.xpose.msra.mxu0 0
      %1162 = vmatprep.subr.bf16.mxu0 0
      %1163 = vmatpush1.bf16.xpose.msra.mxu0 0
      %1164 = vmatprep.subr.bf16.mxu0 0
      %1165 = vmatpush1.bf16.xpose.msra.mxu0 0
      %1166 = vmatprep.subr.bf16.mxu0 0
      %1167 = vmatpush1.bf16.xpose.msra.mxu0 0
      %1168 = vmatprep.subr.bf16.mxu0 0
      %1169 = vmatpush1.bf16.xpose.msra.mxu0 0
      %1170 = vmatprep.subr.bf16.mxu0 0
      %1171 = vmatpush1.bf16.xpose.msra.mxu0 0
      %1172 = vmatprep.subr.bf16.mxu0 0
      %1173 = vmatpush1.bf16.xpose.msra.mxu0 0
      %1174 = vmatprep.subr.bf16.mxu0 0
      %1175 = vmatpush1.bf16.xpose.msra.mxu0 0
      %1176 = vmatprep.subr.bf16.mxu0 0
      %1177 = vmatpush1.bf16.xpose.msra.mxu0 0
      %1178 = vmatprep.subr.bf16.mxu0 0
      %1179 = vmatpush1.bf16.xpose.msra.mxu0 0
      %1180 = vmatprep.subr.bf16.mxu0 0
      %1181 = vmatpush1.bf16.xpose.msra.mxu0 0
      %1182 = vmatprep.subr.bf16.mxu0 0
      %1183 = vmatpush1.bf16.xpose.msra.mxu0 0
      %1184 = vmatprep.subr.bf16.mxu0 0
      %1185 = vmatpush1.bf16.xpose.msra.mxu0 0
      %1186 = vmatprep.subr.bf16.mxu0 0
      %1187 = vmatpush1.bf16.xpose.msra.mxu0 0
      %1188 = vmatprep.mubr.bf16.mxu0 0
      %1189 = vmatmul.mubr.bf16.gmra.mrb[0].mxu0 %v1151
      %v1190 = vpop.f32.mrb[0].mxu0
      %v1191 = vadd.f32 0.0, %v1190
      %v1192 = vpop.f32.mrb[0].mxu0
      %v1193 = vpop.f32.mrb[0].mxu0
      %v1194 = vadd.f32 0.0, %v1193
      %v1195 = vpop.f32.mrb[0].mxu0
      %1196 = vdwg.mxu0
      %v1198 = vsel %vm296, %v601, 0
      %v1201 = vsel %vm296, %v757, 0
      %1203 = vmatprep.subr.bf16.mxu0 0
      %1204 = vmatpush1.bf16.xpose.msra.mxu0 %v1201
      %1205 = vmatprep.subr.bf16.mxu0 0
      %1206 = vmatpush1.bf16.xpose.msra.mxu0 0
      %1207 = vmatprep.subr.bf16.mxu0 0
      %1208 = vmatpush1.bf16.xpose.msra.mxu0 0
      %1209 = vmatprep.subr.bf16.mxu0 0
      %1210 = vmatpush1.bf16.xpose.msra.mxu0 0
      %1211 = vmatprep.subr.bf16.mxu0 0
      %1212 = vmatpush1.bf16.xpose.msra.mxu0 0
      %1213 = vmatprep.subr.bf16.mxu0 0
      %1214 = vmatpush1.bf16.xpose.msra.mxu0 0
      %1215 = vmatprep.subr.bf16.mxu0 0
      %1216 = vmatpush1.bf16.xpose.msra.mxu0 0
      %1217 = vmatprep.subr.bf16.mxu0 0
      %1218 = vmatpush1.bf16.xpose.msra.mxu0 0
      %1219 = vmatprep.subr.bf16.mxu0 0
      %1220 = vmatpush1.bf16.xpose.msra.mxu0 0
      %1221 = vmatprep.subr.bf16.mxu0 0
      %1222 = vmatpush1.bf16.xpose.msra.mxu0 0
      %1223 = vmatprep.subr.bf16.mxu0 0
      %1224 = vmatpush1.bf16.xpose.msra.mxu0 0
      %1225 = vmatprep.subr.bf16.mxu0 0
      %1226 = vmatpush1.bf16.xpose.msra.mxu0 0
      %1227 = vmatprep.subr.bf16.mxu0 0
      %1228 = vmatpush1.bf16.xpose.msra.mxu0 0
      %1229 = vmatprep.subr.bf16.mxu0 0
      %1230 = vmatpush1.bf16.xpose.msra.mxu0 0
      %1231 = vmatprep.subr.bf16.mxu0 0
      %1232 = vmatpush1.bf16.xpose.msra.mxu0 0
      %1233 = vmatprep.subr.bf16.mxu0 0
      %1234 = vmatpush1.bf16.xpose.msra.mxu0 0
      %1235 = vmatprep.mubr.bf16.mxu0 0
      %1236 = vmatmul.mubr.bf16.gmra.mrb[0].mxu0 %v1198
      %v1237 = vpop.f32.mrb[0].mxu0
      %v1238 = vadd.f32 0.0, %v1237
      %v1239 = vpop.f32.mrb[0].mxu0
      %v1240 = vpop.f32.mrb[0].mxu0
      %v1241 = vadd.f32 0.0, %v1240
      %v1242 = vpop.f32.mrb[0].mxu0
      %1243 = vdwg.mxu0
      %v1245 = vsel %vm296, %v602, 0
      %v1248 = vsel %vm296, %v758, 0
      %1250 = vmatprep.subr.bf16.mxu0 0
      %1251 = vmatpush1.bf16.xpose.msra.mxu0 %v1248
      %1252 = vmatprep.subr.bf16.mxu0 0
      %1253 = vmatpush1.bf16.xpose.msra.mxu0 0
      %1254 = vmatprep.subr.bf16.mxu0 0
      %1255 = vmatpush1.bf16.xpose.msra.mxu0 0
      %1256 = vmatprep.subr.bf16.mxu0 0
      %1257 = vmatpush1.bf16.xpose.msra.mxu0 0
      %1258 = vmatprep.subr.bf16.mxu0 0
      %1259 = vmatpush1.bf16.xpose.msra.mxu0 0
      %1260 = vmatprep.subr.bf16.mxu0 0
      %1261 = vmatpush1.bf16.xpose.msra.mxu0 0
      %1262 = vmatprep.subr.bf16.mxu0 0
      %1263 = vmatpush1.bf16.xpose.msra.mxu0 0
      %1264 = vmatprep.subr.bf16.mxu0 0
      %1265 = vmatpush1.bf16.xpose.msra.mxu0 0
      %1266 = vmatprep.subr.bf16.mxu0 0
      %1267 = vmatpush1.bf16.xpose.msra.mxu0 0
      %1268 = vmatprep.subr.bf16.mxu0 0
      %1269 = vmatpush1.bf16.xpose.msra.mxu0 0
      %1270 = vmatprep.subr.bf16.mxu0 0
      %1271 = vmatpush1.bf16.xpose.msra.mxu0 0
      %1272 = vmatprep.subr.bf16.mxu0 0
      %1273 = vmatpush1.bf16.xpose.msra.mxu0 0
      %1274 = vmatprep.subr.bf16.mxu0 0
      %1275 = vmatpush1.bf16.xpose.msra.mxu0 0
      %1276 = vmatprep.subr.bf16.mxu0 0
      %1277 = vmatpush1.bf16.xpose.msra.mxu0 0
      %1278 = vmatprep.subr.bf16.mxu0 0
      %1279 = vmatpush1.bf16.xpose.msra.mxu0 0
      %1280 = vmatprep.subr.bf16.mxu0 0
      %1281 = vmatpush1.bf16.xpose.msra.mxu0 0
      %1282 = vmatprep.mubr.bf16.mxu0 0
      %1283 = vmatmul.mubr.bf16.gmra.mrb[0].mxu0 %v1245
      %v1284 = vpop.f32.mrb[0].mxu0
      %v1285 = vadd.f32 0.0, %v1284
      %v1286 = vpop.f32.mrb[0].mxu0
      %v1287 = vpop.f32.mrb[0].mxu0
      %v1288 = vadd.f32 0.0, %v1287
      %v1289 = vpop.f32.mrb[0].mxu0
      %1290 = vdwg.mxu0
      %v1291 = vld [vmem:[%s4] sm:$0xff]
      %v1292 = vld [vmem:[%s4 + $0x8] sm:$0xff]
      %v1293 = vld [vmem:[%s4 + $0x10] sm:$0xff]
      %v1294 = vld [vmem:[%s4 + $0x18] sm:$0xff]
      %v1295 = vld [vmem:[%s4 + $0x20] sm:$0xff]
      %v1296 = vld [vmem:[%s4 + $0x28] sm:$0xff]
      %v1297 = vld [vmem:[%s4 + $0x30] sm:$0xff]
      %v1298 = vld [vmem:[%s4 + $0x38] sm:$0xff]
      %v1299 = vadd.f32 %v956, %v1291
      %v1300 = vadd.f32 %v959, %v1292
      %v1301 = vadd.f32 %v1003, %v1293
      %v1302 = vadd.f32 %v1006, %v1294
      %v1303 = vadd.f32 %v1050, %v1295
      %v1304 = vadd.f32 %v1053, %v1296
      %v1305 = vadd.f32 %v1097, %v1297
      %v1306 = vadd.f32 %v1100, %v1298
      %v1307 = vadd.f32 %v1144, %v1291
      %v1308 = vadd.f32 %v1147, %v1292
      %v1309 = vadd.f32 %v1191, %v1293
      %v1310 = vadd.f32 %v1194, %v1294
      %v1311 = vadd.f32 %v1238, %v1295
      %v1312 = vadd.f32 %v1241, %v1296
      %v1313 = vadd.f32 %v1285, %v1297
      %v1314 = vadd.f32 %v1288, %v1298
      %v1315 = vsel %vm296, %v1299, -inf
      %1316 = vmax.xlane.f32.xlu0 %v1315
      %v1317 = vpop.xlane.xlu0 %1316
      %v1318 = vsel %vm296, %v1300, -inf
      %1319 = vmax.xlane.f32.xlu0 %v1318
      %v1320 = vpop.xlane.xlu0 %1319
      %v1321 = vsel %vm296, %v1301, -inf
      %1322 = vmax.xlane.f32.xlu0 %v1321
      %v1323 = vpop.xlane.xlu0 %1322
      %v1324 = vsel %vm296, %v1302, -inf
      %1325 = vmax.xlane.f32.xlu0 %v1324
      %v1326 = vpop.xlane.xlu0 %1325
      %v1327 = vsel %vm296, %v1303, -inf
      %1328 = vmax.xlane.f32.xlu0 %v1327
      %v1329 = vpop.xlane.xlu0 %1328
      %v1330 = vsel %vm296, %v1304, -inf
      %1331 = vmax.xlane.f32.xlu0 %v1330
      %v1332 = vpop.xlane.xlu0 %1331
      %v1333 = vsel %vm296, %v1305, -inf
      %1334 = vmax.xlane.f32.xlu0 %v1333
      %v1335 = vpop.xlane.xlu0 %1334
      %v1336 = vsel %vm296, %v1306, -inf
      %1337 = vmax.xlane.f32.xlu0 %v1336
      %v1338 = vpop.xlane.xlu0 %1337
      %v1339 = vsel %vm296, %v1307, -inf
      %1340 = vmax.xlane.f32.xlu0 %v1339
      %v1341 = vpop.xlane.xlu0 %1340
      %v1342 = vsel %vm296, %v1308, -inf
      %1343 = vmax.xlane.f32.xlu0 %v1342
      %v1344 = vpop.xlane.xlu0 %1343
      %v1345 = vsel %vm296, %v1309, -inf
      %1346 = vmax.xlane.f32.xlu0 %v1345
      %v1347 = vpop.xlane.xlu0 %1346
      %v1348 = vsel %vm296, %v1310, -inf
      %1349 = vmax.xlane.f32.xlu0 %v1348
      %v1350 = vpop.xlane.xlu0 %1349
      %v1351 = vsel %vm296, %v1311, -inf
      %1352 = vmax.xlane.f32.xlu0 %v1351
      %v1353 = vpop.xlane.xlu0 %1352
      %v1354 = vsel %vm296, %v1312, -inf
      %1355 = vmax.xlane.f32.xlu0 %v1354
      %v1356 = vpop.xlane.xlu0 %1355
      %v1357 = vsel %vm296, %v1313, -inf
      %1358 = vmax.xlane.f32.xlu0 %v1357
      %v1359 = vpop.xlane.xlu0 %1358
      %v1360 = vsel %vm296, %v1314, -inf
      %1361 = vmax.xlane.f32.xlu0 %v1360
      %v1362 = vpop.xlane.xlu0 %1361
      %v1363 = vsub.f32 %v1299, %v1317
      %v1364 = vsub.f32 %v1300, %v1320
      %v1365 = vsub.f32 %v1301, %v1323
      %v1366 = vsub.f32 %v1302, %v1326
      %v1367 = vsub.f32 %v1303, %v1329
      %v1368 = vsub.f32 %v1304, %v1332
      %v1369 = vsub.f32 %v1305, %v1335
      %v1370 = vsub.f32 %v1306, %v1338
      %v1371 = vsub.f32 %v1307, %v1341
      %v1372 = vsub.f32 %v1308, %v1344
      %v1373 = vsub.f32 %v1309, %v1347
      %v1374 = vsub.f32 %v1310, %v1350
      %v1375 = vsub.f32 %v1311, %v1353
      %v1376 = vsub.f32 %v1312, %v1356
      %v1377 = vsub.f32 %v1313, %v1359
      %v1378 = vsub.f32 %v1314, %v1362
      %v1379 = vmul.f32 %v1363, 1.442695
      %v1380 = vpow.pop %v1379
      %v1381 = vmul.f32 %v1364, 1.442695
      %v1382 = vpow.pop %v1381
      %v1383 = vmul.f32 %v1365, 1.442695
      %v1384 = vpow.pop %v1383
      %v1385 = vmul.f32 %v1366, 1.442695
      %v1386 = vpow.pop %v1385
      %v1387 = vmul.f32 %v1367, 1.442695
      %v1388 = vpow.pop %v1387
      %v1389 = vmul.f32 %v1368, 1.442695
      %v1390 = vpow.pop %v1389
      %v1391 = vmul.f32 %v1369, 1.442695
      %v1392 = vpow.pop %v1391
      %v1393 = vmul.f32 %v1370, 1.442695
      %v1394 = vpow.pop %v1393
      %v1395 = vmul.f32 %v1371, 1.442695
      %v1396 = vpow.pop %v1395
      %v1397 = vmul.f32 %v1372, 1.442695
      %v1398 = vpow.pop %v1397
      %v1399 = vmul.f32 %v1373, 1.442695
      %v1400 = vpow.pop %v1399
      %v1401 = vmul.f32 %v1374, 1.442695
      %v1402 = vpow.pop %v1401
      %v1403 = vmul.f32 %v1375, 1.442695
      %v1404 = vpow.pop %v1403
      %v1405 = vmul.f32 %v1376, 1.442695
      %v1406 = vpow.pop %v1405
      %v1407 = vmul.f32 %v1377, 1.442695
      %v1408 = vpow.pop %v1407
      %v1409 = vmul.f32 %v1378, 1.442695
      %v1410 = vpow.pop %v1409
      %v1411 = vsel %vm296, %v1380, 0.0
      %1412 = vadd.xlane.f32.xlu0 %v1411
      %v1413 = vpop.xlane.xlu0 %1412
      %v1414 = vsel %vm296, %v1382, 0.0
      %1415 = vadd.xlane.f32.xlu0 %v1414
      %v1416 = vpop.xlane.xlu0 %1415
      %v1417 = vsel %vm296, %v1384, 0.0
      %1418 = vadd.xlane.f32.xlu0 %v1417
      %v1419 = vpop.xlane.xlu0 %1418
      %v1420 = vsel %vm296, %v1386, 0.0
      %1421 = vadd.xlane.f32.xlu0 %v1420
      %v1422 = vpop.xlane.xlu0 %1421
      %v1423 = vsel %vm296, %v1388, 0.0
      %1424 = vadd.xlane.f32.xlu0 %v1423
      %v1425 = vpop.xlane.xlu0 %1424
      %v1426 = vsel %vm296, %v1390, 0.0
      %1427 = vadd.xlane.f32.xlu0 %v1426
      %v1428 = vpop.xlane.xlu0 %1427
      %v1429 = vsel %vm296, %v1392, 0.0
      %1430 = vadd.xlane.f32.xlu0 %v1429
      %v1431 = vpop.xlane.xlu0 %1430
      %v1432 = vsel %vm296, %v1394, 0.0
      %1433 = vadd.xlane.f32.xlu0 %v1432
      %v1434 = vpop.xlane.xlu0 %1433
      %v1435 = vsel %vm296, %v1396, 0.0
      %1436 = vadd.xlane.f32.xlu0 %v1435
      %v1437 = vpop.xlane.xlu0 %1436
      %v1438 = vsel %vm296, %v1398, 0.0
      %1439 = vadd.xlane.f32.xlu0 %v1438
      %v1440 = vpop.xlane.xlu0 %1439
      %v1441 = vsel %vm296, %v1400, 0.0
      %1442 = vadd.xlane.f32.xlu0 %v1441
      %v1443 = vpop.xlane.xlu0 %1442
      %v1444 = vsel %vm296, %v1402, 0.0
      %1445 = vadd.xlane.f32.xlu0 %v1444
      %v1446 = vpop.xlane.xlu0 %1445
      %v1447 = vsel %vm296, %v1404, 0.0
      %1448 = vadd.xlane.f32.xlu0 %v1447
      %v1449 = vpop.xlane.xlu0 %1448
      %v1450 = vsel %vm296, %v1406, 0.0
      %1451 = vadd.xlane.f32.xlu0 %v1450
      %v1452 = vpop.xlane.xlu0 %1451
      %v1453 = vsel %vm296, %v1408, 0.0
      %1454 = vadd.xlane.f32.xlu0 %v1453
      %v1455 = vpop.xlane.xlu0 %1454
      %v1456 = vsel %vm296, %v1410, 0.0
      %1457 = vadd.xlane.f32.xlu0 %v1456
      %v1458 = vpop.xlane.xlu0 %1457
      %v1459 = vpack.c.bf16 %v1382, %v1380
      %v1460 = vpack.c.bf16 %v1386, %v1384
      %v1461 = vpack.c.bf16 %v1390, %v1388
      %v1462 = vpack.c.bf16 %v1394, %v1392
      %v1463 = vpack.c.bf16 %v1398, %v1396
      %v1464 = vpack.c.bf16 %v1402, %v1400
      %v1465 = vpack.c.bf16 %v1406, %v1404
      %v1466 = vpack.c.bf16 %v1410, %v1408
      %v1468 = vsel %vm296, %v1459, 0
      %1470 = vmatprep.subr.bf16.mxu0 0
      %1471 = vmatpush1.bf16.msra.mxu0 %v833
      %1472 = vmatprep.subr.bf16.mxu0 0
      %1473 = vmatpush1.bf16.msra.mxu0 0
      %1474 = vmatprep.subr.bf16.mxu0 0
      %1475 = vmatpush1.bf16.msra.mxu0 0
      %1476 = vmatprep.subr.bf16.mxu0 0
      %1477 = vmatpush1.bf16.msra.mxu0 0
      %1478 = vmatprep.subr.bf16.mxu0 0
      %1479 = vmatpush1.bf16.msra.mxu0 0
      %1480 = vmatprep.subr.bf16.mxu0 0
      %1481 = vmatpush1.bf16.msra.mxu0 0
      %1482 = vmatprep.subr.bf16.mxu0 0
      %1483 = vmatpush1.bf16.msra.mxu0 0
      %1484 = vmatprep.subr.bf16.mxu0 0
      %1485 = vmatpush1.bf16.msra.mxu0 0
      %1486 = vmatprep.subr.bf16.mxu0 0
      %1487 = vmatpush1.bf16.msra.mxu0 0
      %1488 = vmatprep.subr.bf16.mxu0 0
      %1489 = vmatpush1.bf16.msra.mxu0 0
      %1490 = vmatprep.subr.bf16.mxu0 0
      %1491 = vmatpush1.bf16.msra.mxu0 0
      %1492 = vmatprep.subr.bf16.mxu0 0
      %1493 = vmatpush1.bf16.msra.mxu0 0
      %1494 = vmatprep.subr.bf16.mxu0 0
      %1495 = vmatpush1.bf16.msra.mxu0 0
      %1496 = vmatprep.subr.bf16.mxu0 0
      %1497 = vmatpush1.bf16.msra.mxu0 0
      %1498 = vmatprep.subr.bf16.mxu0 0
      %1499 = vmatpush1.bf16.msra.mxu0 0
      %1500 = vmatprep.subr.bf16.mxu0 0
      %1501 = vmatpush1.bf16.msra.mxu0 0
      %1502 = vmatprep.mubr.bf16.mxu0 0
      %1503 = vmatmul.mubr.bf16.gmra.mrb[0].mxu0 %v1468
      %v1504 = vpop.f32.mrb[0].mxu0
      %v1505 = vadd.f32 0.0, %v1504
      %v1506 = vpop.f32.mrb[0].mxu0
      %v1507 = vpop.f32.mrb[0].mxu0
      %v1508 = vadd.f32 0.0, %v1507
      %v1509 = vpop.f32.mrb[0].mxu0
      %1510 = vdwg.mxu0
      %v1512 = vsel %vm296, %v1460, 0
      %1514 = vmatprep.subr.bf16.mxu0 0
      %1515 = vmatpush1.bf16.msra.mxu0 %v834
      %1516 = vmatprep.subr.bf16.mxu0 0
      %1517 = vmatpush1.bf16.msra.mxu0 0
      %1518 = vmatprep.subr.bf16.mxu0 0
      %1519 = vmatpush1.bf16.msra.mxu0 0
      %1520 = vmatprep.subr.bf16.mxu0 0
      %1521 = vmatpush1.bf16.msra.mxu0 0
      %1522 = vmatprep.subr.bf16.mxu0 0
      %1523 = vmatpush1.bf16.msra.mxu0 0
      %1524 = vmatprep.subr.bf16.mxu0 0
      %1525 = vmatpush1.bf16.msra.mxu0 0
      %1526 = vmatprep.subr.bf16.mxu0 0
      %1527 = vmatpush1.bf16.msra.mxu0 0
      %1528 = vmatprep.subr.bf16.mxu0 0
      %1529 = vmatpush1.bf16.msra.mxu0 0
      %1530 = vmatprep.subr.bf16.mxu0 0
      %1531 = vmatpush1.bf16.msra.mxu0 0
      %1532 = vmatprep.subr.bf16.mxu0 0
      %1533 = vmatpush1.bf16.msra.mxu0 0
      %1534 = vmatprep.subr.bf16.mxu0 0
      %1535 = vmatpush1.bf16.msra.mxu0 0
      %1536 = vmatprep.subr.bf16.mxu0 0
      %1537 = vmatpush1.bf16.msra.mxu0 0
      %1538 = vmatprep.subr.bf16.mxu0 0
      %1539 = vmatpush1.bf16.msra.mxu0 0
      %1540 = vmatprep.subr.bf16.mxu0 0
      %1541 = vmatpush1.bf16.msra.mxu0 0
      %1542 = vmatprep.subr.bf16.mxu0 0
      %1543 = vmatpush1.bf16.msra.mxu0 0
      %1544 = vmatprep.subr.bf16.mxu0 0
      %1545 = vmatpush1.bf16.msra.mxu0 0
      %1546 = vmatprep.mubr.bf16.mxu0 0
      %1547 = vmatmul.mubr.bf16.gmra.mrb[0].mxu0 %v1512
      %v1548 = vpop.f32.mrb[0].mxu0
      %v1549 = vadd.f32 0.0, %v1548
      %v1550 = vpop.f32.mrb[0].mxu0
      %v1551 = vpop.f32.mrb[0].mxu0
      %v1552 = vadd.f32 0.0, %v1551
      %v1553 = vpop.f32.mrb[0].mxu0
      %1554 = vdwg.mxu0
      %v1556 = vsel %vm296, %v1461, 0
      %1558 = vmatprep.subr.bf16.mxu0 0
      %1559 = vmatpush1.bf16.msra.mxu0 %v835
      %1560 = vmatprep.subr.bf16.mxu0 0
      %1561 = vmatpush1.bf16.msra.mxu0 0
      %1562 = vmatprep.subr.bf16.mxu0 0
      %1563 = vmatpush1.bf16.msra.mxu0 0
      %1564 = vmatprep.subr.bf16.mxu0 0
      %1565 = vmatpush1.bf16.msra.mxu0 0
      %1566 = vmatprep.subr.bf16.mxu0 0
      %1567 = vmatpush1.bf16.msra.mxu0 0
      %1568 = vmatprep.subr.bf16.mxu0 0
      %1569 = vmatpush1.bf16.msra.mxu0 0
      %1570 = vmatprep.subr.bf16.mxu0 0
      %1571 = vmatpush1.bf16.msra.mxu0 0
      %1572 = vmatprep.subr.bf16.mxu0 0
      %1573 = vmatpush1.bf16.msra.mxu0 0
      %1574 = vmatprep.subr.bf16.mxu0 0
      %1575 = vmatpush1.bf16.msra.mxu0 0
      %1576 = vmatprep.subr.bf16.mxu0 0
      %1577 = vmatpush1.bf16.msra.mxu0 0
      %1578 = vmatprep.subr.bf16.mxu0 0
      %1579 = vmatpush1.bf16.msra.mxu0 0
      %1580 = vmatprep.subr.bf16.mxu0 0
      %1581 = vmatpush1.bf16.msra.mxu0 0
      %1582 = vmatprep.subr.bf16.mxu0 0
      %1583 = vmatpush1.bf16.msra.mxu0 0
      %1584 = vmatprep.subr.bf16.mxu0 0
      %1585 = vmatpush1.bf16.msra.mxu0 0
      %1586 = vmatprep.subr.bf16.mxu0 0
      %1587 = vmatpush1.bf16.msra.mxu0 0
      %1588 = vmatprep.subr.bf16.mxu0 0
      %1589 = vmatpush1.bf16.msra.mxu0 0
      %1590 = vmatprep.mubr.bf16.mxu0 0
      %1591 = vmatmul.mubr.bf16.gmra.mrb[0].mxu0 %v1556
      %v1592 = vpop.f32.mrb[0].mxu0
      %v1593 = vadd.f32 0.0, %v1592
      %v1594 = vpop.f32.mrb[0].mxu0
      %v1595 = vpop.f32.mrb[0].mxu0
      %v1596 = vadd.f32 0.0, %v1595
      %v1597 = vpop.f32.mrb[0].mxu0
      %1598 = vdwg.mxu0
      %v1600 = vsel %vm296, %v1462, 0
      %1602 = vmatprep.subr.bf16.mxu0 0
      %1603 = vmatpush1.bf16.msra.mxu0 %v836
      %1604 = vmatprep.subr.bf16.mxu0 0
      %1605 = vmatpush1.bf16.msra.mxu0 0
      %1606 = vmatprep.subr.bf16.mxu0 0
      %1607 = vmatpush1.bf16.msra.mxu0 0
      %1608 = vmatprep.subr.bf16.mxu0 0
      %1609 = vmatpush1.bf16.msra.mxu0 0
      %1610 = vmatprep.subr.bf16.mxu0 0
      %1611 = vmatpush1.bf16.msra.mxu0 0
      %1612 = vmatprep.subr.bf16.mxu0 0
      %1613 = vmatpush1.bf16.msra.mxu0 0
      %1614 = vmatprep.subr.bf16.mxu0 0
      %1615 = vmatpush1.bf16.msra.mxu0 0
      %1616 = vmatprep.subr.bf16.mxu0 0
      %1617 = vmatpush1.bf16.msra.mxu0 0
      %1618 = vmatprep.subr.bf16.mxu0 0
      %1619 = vmatpush1.bf16.msra.mxu0 0
      %1620 = vmatprep.subr.bf16.mxu0 0
      %1621 = vmatpush1.bf16.msra.mxu0 0
      %1622 = vmatprep.subr.bf16.mxu0 0
      %1623 = vmatpush1.bf16.msra.mxu0 0
      %1624 = vmatprep.subr.bf16.mxu0 0
      %1625 = vmatpush1.bf16.msra.mxu0 0
      %1626 = vmatprep.subr.bf16.mxu0 0
      %1627 = vmatpush1.bf16.msra.mxu0 0
      %1628 = vmatprep.subr.bf16.mxu0 0
      %1629 = vmatpush1.bf16.msra.mxu0 0
      %1630 = vmatprep.subr.bf16.mxu0 0
      %1631 = vmatpush1.bf16.msra.mxu0 0
      %1632 = vmatprep.subr.bf16.mxu0 0
      %1633 = vmatpush1.bf16.msra.mxu0 0
      %1634 = vmatprep.mubr.bf16.mxu0 0
      %1635 = vmatmul.mubr.bf16.gmra.mrb[0].mxu0 %v1600
      %v1636 = vpop.f32.mrb[0].mxu0
      %v1637 = vadd.f32 0.0, %v1636
      %v1638 = vpop.f32.mrb[0].mxu0
      %v1639 = vpop.f32.mrb[0].mxu0
      %v1640 = vadd.f32 0.0, %v1639
      %v1641 = vpop.f32.mrb[0].mxu0
      %1642 = vdwg.mxu0
      %v1644 = vsel %vm296, %v1463, 0
      %1646 = vmatprep.subr.bf16.mxu0 0
      %1647 = vmatpush1.bf16.msra.mxu0 %v911
      %1648 = vmatprep.subr.bf16.mxu0 0
      %1649 = vmatpush1.bf16.msra.mxu0 0
      %1650 = vmatprep.subr.bf16.mxu0 0
      %1651 = vmatpush1.bf16.msra.mxu0 0
      %1652 = vmatprep.subr.bf16.mxu0 0
      %1653 = vmatpush1.bf16.msra.mxu0 0
      %1654 = vmatprep.subr.bf16.mxu0 0
      %1655 = vmatpush1.bf16.msra.mxu0 0
      %1656 = vmatprep.subr.bf16.mxu0 0
      %1657 = vmatpush1.bf16.msra.mxu0 0
      %1658 = vmatprep.subr.bf16.mxu0 0
      %1659 = vmatpush1.bf16.msra.mxu0 0
      %1660 = vmatprep.subr.bf16.mxu0 0
      %1661 = vmatpush1.bf16.msra.mxu0 0
      %1662 = vmatprep.subr.bf16.mxu0 0
      %1663 = vmatpush1.bf16.msra.mxu0 0
      %1664 = vmatprep.subr.bf16.mxu0 0
      %1665 = vmatpush1.bf16.msra.mxu0 0
      %1666 = vmatprep.subr.bf16.mxu0 0
      %1667 = vmatpush1.bf16.msra.mxu0 0
      %1668 = vmatprep.subr.bf16.mxu0 0
      %1669 = vmatpush1.bf16.msra.mxu0 0
      %1670 = vmatprep.subr.bf16.mxu0 0
      %1671 = vmatpush1.bf16.msra.mxu0 0
      %1672 = vmatprep.subr.bf16.mxu0 0
      %1673 = vmatpush1.bf16.msra.mxu0 0
      %1674 = vmatprep.subr.bf16.mxu0 0
      %1675 = vmatpush1.bf16.msra.mxu0 0
      %1676 = vmatprep.subr.bf16.mxu0 0
      %1677 = vmatpush1.bf16.msra.mxu0 0
      %1678 = vmatprep.mubr.bf16.mxu0 0
      %1679 = vmatmul.mubr.bf16.gmra.mrb[0].mxu0 %v1644
      %v1680 = vpop.f32.mrb[0].mxu0
      %v1681 = vadd.f32 0.0, %v1680
      %v1682 = vpop.f32.mrb[0].mxu0
      %v1683 = vpop.f32.mrb[0].mxu0
      %v1684 = vadd.f32 0.0, %v1683
      %v1685 = vpop.f32.mrb[0].mxu0
      %1686 = vdwg.mxu0
      %v1688 = vsel %vm296, %v1464, 0
      %1690 = vmatprep.subr.bf16.mxu0 0
      %1691 = vmatpush1.bf16.msra.mxu0 %v912
      %1692 = vmatprep.subr.bf16.mxu0 0
      %1693 = vmatpush1.bf16.msra.mxu0 0
      %1694 = vmatprep.subr.bf16.mxu0 0
      %1695 = vmatpush1.bf16.msra.mxu0 0
      %1696 = vmatprep.subr.bf16.mxu0 0
      %1697 = vmatpush1.bf16.msra.mxu0 0
      %1698 = vmatprep.subr.bf16.mxu0 0
      %1699 = vmatpush1.bf16.msra.mxu0 0
      %1700 = vmatprep.subr.bf16.mxu0 0
      %1701 = vmatpush1.bf16.msra.mxu0 0
      %1702 = vmatprep.subr.bf16.mxu0 0
      %1703 = vmatpush1.bf16.msra.mxu0 0
      %1704 = vmatprep.subr.bf16.mxu0 0
      %1705 = vmatpush1.bf16.msra.mxu0 0
      %1706 = vmatprep.subr.bf16.mxu0 0
      %1707 = vmatpush1.bf16.msra.mxu0 0
      %1708 = vmatprep.subr.bf16.mxu0 0
      %1709 = vmatpush1.bf16.msra.mxu0 0
      %1710 = vmatprep.subr.bf16.mxu0 0
      %1711 = vmatpush1.bf16.msra.mxu0 0
      %1712 = vmatprep.subr.bf16.mxu0 0
      %1713 = vmatpush1.bf16.msra.mxu0 0
      %1714 = vmatprep.subr.bf16.mxu0 0
      %1715 = vmatpush1.bf16.msra.mxu0 0
      %1716 = vmatprep.subr.bf16.mxu0 0
      %1717 = vmatpush1.bf16.msra.mxu0 0
      %1718 = vmatprep.subr.bf16.mxu0 0
      %1719 = vmatpush1.bf16.msra.mxu0 0
      %1720 = vmatprep.subr.bf16.mxu0 0
      %1721 = vmatpush1.bf16.msra.mxu0 0
      %1722 = vmatprep.mubr.bf16.mxu0 0
      %1723 = vmatmul.mubr.bf16.gmra.mrb[0].mxu0 %v1688
      %v1724 = vpop.f32.mrb[0].mxu0
      %v1725 = vadd.f32 0.0, %v1724
      %v1726 = vpop.f32.mrb[0].mxu0
      %v1727 = vpop.f32.mrb[0].mxu0
      %v1728 = vadd.f32 0.0, %v1727
      %v1729 = vpop.f32.mrb[0].mxu0
      %1730 = vdwg.mxu0
      %v1732 = vsel %vm296, %v1465, 0
      %1734 = vmatprep.subr.bf16.mxu0 0
      %1735 = vmatpush1.bf16.msra.mxu0 %v913
      %1736 = vmatprep.subr.bf16.mxu0 0
      %1737 = vmatpush1.bf16.msra.mxu0 0
      %1738 = vmatprep.subr.bf16.mxu0 0
      %1739 = vmatpush1.bf16.msra.mxu0 0
      %1740 = vmatprep.subr.bf16.mxu0 0
      %1741 = vmatpush1.bf16.msra.mxu0 0
      %1742 = vmatprep.subr.bf16.mxu0 0
      %1743 = vmatpush1.bf16.msra.mxu0 0
      %1744 = vmatprep.subr.bf16.mxu0 0
      %1745 = vmatpush1.bf16.msra.mxu0 0
      %1746 = vmatprep.subr.bf16.mxu0 0
      %1747 = vmatpush1.bf16.msra.mxu0 0
      %1748 = vmatprep.subr.bf16.mxu0 0
      %1749 = vmatpush1.bf16.msra.mxu0 0
      %1750 = vmatprep.subr.bf16.mxu0 0
      %1751 = vmatpush1.bf16.msra.mxu0 0
      %1752 = vmatprep.subr.bf16.mxu0 0
      %1753 = vmatpush1.bf16.msra.mxu0 0
      %1754 = vmatprep.subr.bf16.mxu0 0
      %1755 = vmatpush1.bf16.msra.mxu0 0
      %1756 = vmatprep.subr.bf16.mxu0 0
      %1757 = vmatpush1.bf16.msra.mxu0 0
      %1758 = vmatprep.subr.bf16.mxu0 0
      %1759 = vmatpush1.bf16.msra.mxu0 0
      %1760 = vmatprep.subr.bf16.mxu0 0
      %1761 = vmatpush1.bf16.msra.mxu0 0
      %1762 = vmatprep.subr.bf16.mxu0 0
      %1763 = vmatpush1.bf16.msra.mxu0 0
      %1764 = vmatprep.subr.bf16.mxu0 0
      %1765 = vmatpush1.bf16.msra.mxu0 0
      %1766 = vmatprep.mubr.bf16.mxu0 0
      %1767 = vmatmul.mubr.bf16.gmra.mrb[0].mxu0 %v1732
      %v1768 = vpop.f32.mrb[0].mxu0
      %v1769 = vadd.f32 0.0, %v1768
      %v1770 = vpop.f32.mrb[0].mxu0
      %v1771 = vpop.f32.mrb[0].mxu0
      %v1772 = vadd.f32 0.0, %v1771
      %v1773 = vpop.f32.mrb[0].mxu0
      %1774 = vdwg.mxu0
      %v1776 = vsel %vm296, %v1466, 0
      %1778 = vmatprep.subr.bf16.mxu0 0
      %1779 = vmatpush1.bf16.msra.mxu0 %v914
      %1780 = vmatprep.subr.bf16.mxu0 0
      %1781 = vmatpush1.bf16.msra.mxu0 0
      %1782 = vmatprep.subr.bf16.mxu0 0
      %1783 = vmatpush1.bf16.msra.mxu0 0
      %1784 = vmatprep.subr.bf16.mxu0 0
      %1785 = vmatpush1.bf16.msra.mxu0 0
      %1786 = vmatprep.subr.bf16.mxu0 0
      %1787 = vmatpush1.bf16.msra.mxu0 0
      %1788 = vmatprep.subr.bf16.mxu0 0
      %1789 = vmatpush1.bf16.msra.mxu0 0
      %1790 = vmatprep.subr.bf16.mxu0 0
      %1791 = vmatpush1.bf16.msra.mxu0 0
      %1792 = vmatprep.subr.bf16.mxu0 0
      %1793 = vmatpush1.bf16.msra.mxu0 0
      %1794 = vmatprep.subr.bf16.mxu0 0
      %1795 = vmatpush1.bf16.msra.mxu0 0
      %1796 = vmatprep.subr.bf16.mxu0 0
      %1797 = vmatpush1.bf16.msra.mxu0 0
      %1798 = vmatprep.subr.bf16.mxu0 0
      %1799 = vmatpush1.bf16.msra.mxu0 0
      %1800 = vmatprep.subr.bf16.mxu0 0
      %1801 = vmatpush1.bf16.msra.mxu0 0
      %1802 = vmatprep.subr.bf16.mxu0 0
      %1803 = vmatpush1.bf16.msra.mxu0 0
      %1804 = vmatprep.subr.bf16.mxu0 0
      %1805 = vmatpush1.bf16.msra.mxu0 0
      %1806 = vmatprep.subr.bf16.mxu0 0
      %1807 = vmatpush1.bf16.msra.mxu0 0
      %1808 = vmatprep.subr.bf16.mxu0 0
      %1809 = vmatpush1.bf16.msra.mxu0 0
      %1810 = vmatprep.mubr.bf16.mxu0 0
      %1811 = vmatmul.mubr.bf16.gmra.mrb[0].mxu0 %v1776
      %v1812 = vpop.f32.mrb[0].mxu0
      %v1813 = vadd.f32 0.0, %v1812
      %v1814 = vpop.f32.mrb[0].mxu0
      %v1815 = vpop.f32.mrb[0].mxu0
      %v1816 = vadd.f32 0.0, %v1815
      %v1817 = vpop.f32.mrb[0].mxu0
      %1818 = vdwg.mxu0
      %v1819 = vrcp.pop %v1413
      %v1820 = vrcp.pop %v1416
      %v1821 = vrcp.pop %v1419
      %v1822 = vrcp.pop %v1422
      %v1823 = vrcp.pop %v1425
      %v1824 = vrcp.pop %v1428
      %v1825 = vrcp.pop %v1431
      %v1826 = vrcp.pop %v1434
      %v1827 = vrcp.pop %v1437
      %v1828 = vrcp.pop %v1440
      %v1829 = vrcp.pop %v1443
      %v1830 = vrcp.pop %v1446
      %v1831 = vrcp.pop %v1449
      %v1832 = vrcp.pop %v1452
      %v1833 = vrcp.pop %v1455
      %v1834 = vrcp.pop %v1458
      %v1835 = vmul.f32 %v1505, %v1819
      %v1836 = vmul.f32 %v1508, %v1820
      %v1837 = vmul.f32 %v1549, %v1821
      %v1838 = vmul.f32 %v1552, %v1822
      %v1839 = vmul.f32 %v1593, %v1823
      %v1840 = vmul.f32 %v1596, %v1824
      %v1841 = vmul.f32 %v1637, %v1825
      %v1842 = vmul.f32 %v1640, %v1826
      %v1843 = vmul.f32 %v1681, %v1827
      %v1844 = vmul.f32 %v1684, %v1828
      %v1845 = vmul.f32 %v1725, %v1829
      %v1846 = vmul.f32 %v1728, %v1830
      %v1847 = vmul.f32 %v1769, %v1831
      %v1848 = vmul.f32 %v1772, %v1832
      %v1849 = vmul.f32 %v1813, %v1833
      %v1850 = vmul.f32 %v1816, %v1834
      %v1851 = vpack.c.bf16 %v1836, %v1835
      %v1852 = vpack.c.bf16 %v1838, %v1837
      %v1853 = vpack.c.bf16 %v1840, %v1839
      %v1854 = vpack.c.bf16 %v1842, %v1841
      %v1855 = vpack.c.bf16 %v1844, %v1843
      %v1856 = vpack.c.bf16 %v1846, %v1845
      %v1857 = vpack.c.bf16 %v1848, %v1847
      %v1858 = vpack.c.bf16 %v1850, %v1849
      %v1859 = vld [vmem:[%s5] sm:$0xf]
      %v1860 = vld [vmem:[%s5 + $0x4] sm:$0xf]
      %s1861 = scalar_lea.vmem %s5, 8
      %v1862 = vld [vmem:[%s1861] sm:$0xf]
      %v1863 = vld [vmem:[%s1861 + $0x4] sm:$0xf]
      %v1866 = vunpack.c.l.b16 %v1862
      %v1867 = vunpack.c.l.b16 %v1863
      %v1868 = vpack.c.b16 %v1867, %v1866
      %v1871 = vsel %vm296, %v1855, 0
      %v1874 = vsel %vm296, %v1856, 0
      %v1877 = vsel %vm296, %v1857, 0
      %v1880 = vsel %vm296, %v1858, 0
      %1882 = vmatprep.subr.bf16.mxu0 0
      %1883 = vmatpush1.bf16.msra.mxu0 %v1868
      %1884 = vmatprep.subr.bf16.mxu0 0
      %1885 = vmatpush1.bf16.msra.mxu0 0
      %1886 = vmatprep.subr.bf16.mxu0 0
      %1887 = vmatpush1.bf16.msra.mxu0 0
      %1888 = vmatprep.subr.bf16.mxu0 0
      %1889 = vmatpush1.bf16.msra.mxu0 0
      %1890 = vmatprep.subr.bf16.mxu0 0
      %1891 = vmatpush1.bf16.msra.mxu0 0
      %1892 = vmatprep.subr.bf16.mxu0 0
      %1893 = vmatpush1.bf16.msra.mxu0 0
      %1894 = vmatprep.subr.bf16.mxu0 0
      %1895 = vmatpush1.bf16.msra.mxu0 0
      %1896 = vmatprep.subr.bf16.mxu0 0
      %1897 = vmatpush1.bf16.msra.mxu0 0
      %1898 = vmatprep.subr.bf16.mxu0 0
      %1899 = vmatpush1.bf16.msra.mxu0 0
      %1900 = vmatprep.subr.bf16.mxu0 0
      %1901 = vmatpush1.bf16.msra.mxu0 0
      %1902 = vmatprep.subr.bf16.mxu0 0
      %1903 = vmatpush1.bf16.msra.mxu0 0
      %1904 = vmatprep.subr.bf16.mxu0 0
      %1905 = vmatpush1.bf16.msra.mxu0 0
      %1906 = vmatprep.subr.bf16.mxu0 0
      %1907 = vmatpush1.bf16.msra.mxu0 0
      %1908 = vmatprep.subr.bf16.mxu0 0
      %1909 = vmatpush1.bf16.msra.mxu0 0
      %1910 = vmatprep.subr.bf16.mxu0 0
      %1911 = vmatpush1.bf16.msra.mxu0 0
      %1912 = vmatprep.subr.bf16.mxu0 0
      %1913 = vmatpush1.bf16.msra.mxu0 0
      %1914 = vmatprep.mubr.bf16.mxu0 0
      %1915 = vmatmul.mubr.bf16.gmra.mrb[0].mxu0 %v1871
      %v1916 = vpop.f32.mrb[0].mxu0
      %v1917 = vadd.f32 0.0, %v1916
      %v1918 = vpop.f32.mrb[0].mxu0
      %v1919 = vpop.f32.mrb[0].mxu0
      %v1920 = vadd.f32 0.0, %v1919
      %v1921 = vpop.f32.mrb[0].mxu0
      %1922 = vmatprep.mubr.bf16.mxu0 0
      %1923 = vmatmul.mubr.bf16.gmra.mrb[0].mxu0 %v1874
      %v1924 = vpop.f32.mrb[0].mxu0
      %v1925 = vadd.f32 0.0, %v1924
      %v1926 = vpop.f32.mrb[0].mxu0
      %v1927 = vpop.f32.mrb[0].mxu0
      %v1928 = vadd.f32 0.0, %v1927
      %v1929 = vpop.f32.mrb[0].mxu0
      %1930 = vmatprep.mubr.bf16.mxu0 0
      %1931 = vmatmul.mubr.bf16.gmra.mrb[0].mxu0 %v1877
      %v1932 = vpop.f32.mrb[0].mxu0
      %v1933 = vadd.f32 0.0, %v1932
      %v1934 = vpop.f32.mrb[0].mxu0
      %v1935 = vpop.f32.mrb[0].mxu0
      %v1936 = vadd.f32 0.0, %v1935
      %v1937 = vpop.f32.mrb[0].mxu0
      %1938 = vmatprep.mubr.bf16.mxu0 0
      %1939 = vmatmul.mubr.bf16.gmra.mrb[0].mxu0 %v1880
      %v1940 = vpop.f32.mrb[0].mxu0
      %v1941 = vadd.f32 0.0, %v1940
      %v1942 = vpop.f32.mrb[0].mxu0
      %v1943 = vpop.f32.mrb[0].mxu0
      %v1944 = vadd.f32 0.0, %v1943
      %v1945 = vpop.f32.mrb[0].mxu0
      %1946 = vdwg.mxu0
      %v1949 = vunpack.c.l.b16 %v1859
      %v1950 = vunpack.c.l.b16 %v1860
      %v1951 = vpack.c.b16 %v1950, %v1949
      %v1954 = vsel %vm296, %v1851, 0
      %v1957 = vsel %vm296, %v1852, 0
      %v1960 = vsel %vm296, %v1853, 0
      %v1963 = vsel %vm296, %v1854, 0
      %1965 = vmatprep.subr.bf16.mxu0 0
      %1966 = vmatpush1.bf16.msra.mxu0 %v1951
      %1967 = vmatprep.subr.bf16.mxu0 0
      %1968 = vmatpush1.bf16.msra.mxu0 0
      %1969 = vmatprep.subr.bf16.mxu0 0
      %1970 = vmatpush1.bf16.msra.mxu0 0
      %1971 = vmatprep.subr.bf16.mxu0 0
      %1972 = vmatpush1.bf16.msra.mxu0 0
      %1973 = vmatprep.subr.bf16.mxu0 0
      %1974 = vmatpush1.bf16.msra.mxu0 0
      %1975 = vmatprep.subr.bf16.mxu0 0
      %1976 = vmatpush1.bf16.msra.mxu0 0
      %1977 = vmatprep.subr.bf16.mxu0 0
      %1978 = vmatpush1.bf16.msra.mxu0 0
      %1979 = vmatprep.subr.bf16.mxu0 0
      %1980 = vmatpush1.bf16.msra.mxu0 0
      %1981 = vmatprep.subr.bf16.mxu0 0
      %1982 = vmatpush1.bf16.msra.mxu0 0
      %1983 = vmatprep.subr.bf16.mxu0 0
      %1984 = vmatpush1.bf16.msra.mxu0 0
      %1985 = vmatprep.subr.bf16.mxu0 0
      %1986 = vmatpush1.bf16.msra.mxu0 0
      %1987 = vmatprep.subr.bf16.mxu0 0
      %1988 = vmatpush1.bf16.msra.mxu0 0
      %1989 = vmatprep.subr.bf16.mxu0 0
      %1990 = vmatpush1.bf16.msra.mxu0 0
      %1991 = vmatprep.subr.bf16.mxu0 0
      %1992 = vmatpush1.bf16.msra.mxu0 0
      %1993 = vmatprep.subr.bf16.mxu0 0
      %1994 = vmatpush1.bf16.msra.mxu0 0
      %1995 = vmatprep.subr.bf16.mxu0 0
      %1996 = vmatpush1.bf16.msra.mxu0 0
      %1997 = vmatprep.mubr.bf16.mxu0 0
      %1998 = vmatmul.mubr.bf16.gmra.mrb[0].mxu0 %v1954
      %v1999 = vpop.f32.mrb[0].mxu0
      %v2000 = vadd.f32 %v1917, %v1999
      %v2001 = vpop.f32.mrb[0].mxu0
      %v2002 = vpop.f32.mrb[0].mxu0
      %v2003 = vadd.f32 %v1920, %v2002
      %v2004 = vpop.f32.mrb[0].mxu0
      %2005 = vmatprep.mubr.bf16.mxu0 0
      %2006 = vmatmul.mubr.bf16.gmra.mrb[0].mxu0 %v1957
      %v2007 = vpop.f32.mrb[0].mxu0
      %v2008 = vadd.f32 %v1925, %v2007
      %v2009 = vpop.f32.mrb[0].mxu0
      %v2010 = vpop.f32.mrb[0].mxu0
      %v2011 = vadd.f32 %v1928, %v2010
      %v2012 = vpop.f32.mrb[0].mxu0
      %2013 = vmatprep.mubr.bf16.mxu0 0
      %2014 = vmatmul.mubr.bf16.gmra.mrb[0].mxu0 %v1960
      %v2015 = vpop.f32.mrb[0].mxu0
      %v2016 = vadd.f32 %v1933, %v2015
      %v2017 = vpop.f32.mrb[0].mxu0
      %v2018 = vpop.f32.mrb[0].mxu0
      %v2019 = vadd.f32 %v1936, %v2018
      %v2020 = vpop.f32.mrb[0].mxu0
      %2021 = vmatprep.mubr.bf16.mxu0 0
      %2022 = vmatmul.mubr.bf16.gmra.mrb[0].mxu0 %v1963
      %v2023 = vpop.f32.mrb[0].mxu0
      %v2024 = vadd.f32 %v1941, %v2023
      %v2025 = vpop.f32.mrb[0].mxu0
      %v2026 = vpop.f32.mrb[0].mxu0
      %v2027 = vadd.f32 %v1944, %v2026
      %v2028 = vpop.f32.mrb[0].mxu0
      %2029 = vdwg.mxu0
      %v2030 = vld [vmem:[%s6] sm:$0x1]
      %v2032 = vlaneseq
      %v2033 = vshrl.u32 %v2032, 7
      %v2034 = vsub.s32 0, %v2033
      %v2035 = vrot.slane %v2030, %v2034
      %v2037 = vadd.f32 %v2000, %v2035
      %v2038 = vadd.f32 %v2003, %v2035
      %v2039 = vadd.f32 %v2008, %v2035
      %v2040 = vadd.f32 %v2011, %v2035
      %v2041 = vadd.f32 %v2016, %v2035
      %v2042 = vadd.f32 %v2019, %v2035
      %v2043 = vadd.f32 %v2024, %v2035
      %v2044 = vadd.f32 %v2027, %v2035
      %v2045 = vadd.f32 %v2037, %v288
      %v2046 = vadd.f32 %v2038, %v289
      %v2047 = vadd.f32 %v2039, %v290
      %v2048 = vadd.f32 %v2040, %v291
      %v2049 = vadd.f32 %v2041, %v292
      %v2050 = vadd.f32 %v2042, %v293
      %v2051 = vadd.f32 %v2043, %v294
      %v2052 = vadd.f32 %v2044, %v295
      %2053 = vst.msk [vmem:[%s285] sm:$0xff] %vm296, %v2045
      %2054 = vst.msk [vmem:[%s285 + $0x8] sm:$0xff] %vm296, %v2046
      %2055 = vst.msk [vmem:[%s285 + $0x10] sm:$0xff] %vm296, %v2047
      %2056 = vst.msk [vmem:[%s285 + $0x18] sm:$0xff] %vm296, %v2048
      %2057 = vst.msk [vmem:[%s285 + $0x20] sm:$0xff] %vm296, %v2049
      %2058 = vst.msk [vmem:[%s285 + $0x28] sm:$0xff] %vm296, %v2050
      %2059 = vst.msk [vmem:[%s285 + $0x30] sm:$0xff] %vm296, %v2051
      %2060 = vst.msk [vmem:[%s285 + $0x38] sm:$0xff] %vm296, %v2052
      %s2061 = smul.u32 4, %s18
      %p2062 = scmp.lt.s32.totalorder %s2061, 7
      %s2063 = scalar_select %p2062, %s2061, 7
      %s2064 = smul.addr %s2063, 2
      %s2065 = smul.addr %s2064, 8
      %s2066 = scalar_lea.vmem %s7, %s2065
      // Predicated region
      $region49: #{_lambda_.8} parent=47 // pred_check
        %p2067 = pneg %p188
      $region50: #{_lambda_.8} parent=47 // pred_check_branch
        %2069 = sbr.rel (%p2067) target = $region52
      $region51: #{_lambda_.8} parent=47 // pred_region
        %s2070 = smul.u32 4, %s18
      $region52: #{_lambda_.8} parent=47 // pred_fallthru
        _
    $region48: #{_lambda_.8} parent=5 // pred_fallthru
      _
    %p2071 = scmp.le.s32.totalorder 2, %s13
    // Predicated region
    $region53: #{_lambda_.8} parent=5 // pred_check
      %p2072 = pneg %p2071
    $region54: #{_lambda_.8} parent=5 // pred_check_branch
      %2074 = sbr.rel (%p2072) target = $region56
    $region55: #{_lambda_.8} parent=5 // pred_region
      %s2075 = ssub.s32 %s13, 2
      // Predicated region
      $region57: #{_lambda_.8} parent=55 // pred_check
        %p2076 = pneg %p194
      $region58: #{_lambda_.8} parent=55 // pred_check_branch
        %2078 = sbr.rel (%p2076) target = $region60
      $region59: #{_lambda_.8} parent=55 // pred_region
        %s2079 = smul.u32 4, %s19
        %p2080 = scmp.lt.s32.totalorder %s2079, 7
        %s2081 = scalar_select %p2080, %s2079, 7
        %s2082 = smul.addr %s2081, 2
        %s2083 = smul.addr %s2082, 8
        %s2084 = scalar_lea.vmem %s7, %s2083
      $region60: #{_lambda_.8} parent=55 // pred_fallthru
        _
    $region56: #{_lambda_.8} parent=5 // pred_fallthru
      _
  $region6: #{_lambda_.8} parent=0 // loop_footer
    %s17 = sadd.s32 1, %s13
  $region7: #{_lambda_.8} parent=0 // loop_footer_branch
    %12 = sbr.rel target = $region3
  $region8: #{_lambda_.8} parent=0 // loop_exit
    _

</llo_original>
